<compile_context>
chip_gen: v5e
topology: v5e:2x2
jax: 0.10.0
libtpu: 0.0.40
codegen_flags: <defaults>
</compile_context>

<pallas_src>
import jax
import jax.numpy as jnp
from jax.experimental import pallas as pl
from jax.experimental.pallas import tpu as pltpu


# ----------------------------------------------------------------------------
# Fixed (small) architecture constants: 32x32 input, 3 channels, init_ch=8,
# n_blocks=(1,1,1,1), 'basic' blocks, 10 classes.
# ----------------------------------------------------------------------------
IMG = 32
IN_CH = 3
INIT_CH = 8
N_CLASSES = 10
H0 = IMG // 2               # 16 : conv0 (7x7 s2 p3) output spatial
H1 = H0 // 2                # 8  : after 3x3 s2 p1 max-pool  (stage1 spatial)
K0 = 7 * 7 * IN_CH          # 147: conv0 im2col K


# ----------------------------------------------------------------------------
# In-kernel building blocks (all static shapes / slices; trace-time Python)
# ----------------------------------------------------------------------------
def _conv3x3_slab(pad_ref, Wp, H, W, w_ref, b_ref):
    """3x3 stride-1 pad-1 conv via the contiguous-slab im2col trick.

    pad_ref : flattened zero-padded activation ((H+2)*Wp, Cin), Wp = W + 2,
              data stored at padded coords (1..H, 1..W).
    Returns the f32 (L, Cout) slab (L = (H-1)*Wp + W); valid rows for output
    image row i are slab rows [i*Wp, i*Wp + W).
    """
    s0 = Wp + 1
    L = (H - 1) * Wp + W
    cols = []
    for ki in range(3):
        for kj in range(3):
            off = (ki - 1) * Wp + (kj - 1)
            cols.append(pad_ref[s0 + off: s0 + off + L, :])
    a = jnp.concatenate(cols, axis=-1).astype(jnp.bfloat16)        # (L, 9*Cin)
    return jnp.dot(a, w_ref[...], preferred_element_type=jnp.float32) + b_ref[...]


def _maxpool3x3s2_into_padded(src_ref, Hs, dst_ref, Wp_dst):
    """F.max_pool2d(k=3, s=2, p=1) of an Hs x Hs activation (values >= 0).

    src_ref : flattened ((Hs+1)*(Hs+1), C) grid with a top/left zero pad of 1
              (data at padded coords (1..Hs, 1..Hs)).  Since the data is
              post-ReLU (>= 0), zero padding is equivalent to -inf padding.
    Result (Ho x Ho, Ho = Hs//2) is written into dst_ref's interior
    (pad offset 1, row stride Wp_dst).
    """
    Ws = Hs + 1
    Ho = Hs // 2
    Lm = (Hs - 2) * Ws + (Hs - 2) + 1
    m = None
    for di in range(3):
        for dj in range(3):
            off = di * Ws + dj
            v = src_ref[off: off + Lm, :]
            m = v if m is None else jnp.maximum(m, v)
    for i in range(Ho):
        for j in range(Ho):
            dst = (i + 1) * Wp_dst + (j + 1)
            t = 2 * i * Ws + 2 * j
            dst_ref[dst: dst + 1, :] = m[t: t + 1, :]


def _minpool2x2_to(src_ref, H, dst_ref):
    """2x2 stride-2 min pool of an H x H activation stored dense as (H*H, C)."""
    Ho = H // 2
    Ln = (H - 2) * (H + 1) + 1
    m = None
    for di in range(2):
        for dj in range(2):
            off = di * H + dj
            v = src_ref[off: off + Ln, :]
            m = v if m is None else jnp.minimum(m, v)
    for i in range(Ho):
        for j in range(Ho):
            t = 2 * i * H + 2 * j
            dst_ref[i * Ho + j: i * Ho + j + 1, :] = m[t: t + 1, :]


def _run_stride2_stage(x_ref, H, pool_ref, pad_ref, dst_ref,
                       wd, bd, w1, b1, w2, b2):
    """BasicBlock with stride 2 (stages 2-4):
         identity = BN(1x1(minpool(x)))           (LSMP_AlterChan downsample)
         y        = relu(BN(1x1(minpool(x))))     (LSMP_AlterChan conv1)
         y        = relu(BN(conv3x3(y)) + identity)
    x_ref: dense (H*H, Cin); dst_ref: dense (Ho*Ho, Cout), Ho = H//2.
    """
    Ho = H // 2
    Wp = Ho + 2
    _minpool2x2_to(x_ref, H, pool_ref)
    pooled = pool_ref[...].astype(jnp.bfloat16)                    # (Ho*Ho, Cin)
    identity = jnp.dot(pooled, wd[...], preferred_element_type=jnp.float32) + bd[...]
    y1 = jnp.dot(pooled, w1[...], preferred_element_type=jnp.float32) + b1[...]
    y1 = jnp.maximum(y1, 0.0)
    pad_ref[...] = jnp.zeros_like(pad_ref)
    for i in range(Ho):
        r = (i + 1) * Wp + 1
        pad_ref[r: r + Ho, :] = y1[i * Ho: (i + 1) * Ho, :]
    y2 = _conv3x3_slab(pad_ref, Wp, Ho, Ho, w2, b2)
    for i in range(Ho):
        blk = y2[i * Wp: i * Wp + Ho, :] + identity[i * Ho: (i + 1) * Ho, :]
        dst_ref[i * Ho: (i + 1) * Ho, :] = jnp.maximum(blk, 0.0)


# ----------------------------------------------------------------------------
# The single whole-network kernel (one grid step == one image)
# ----------------------------------------------------------------------------
def network_kernel(
        a0_ref,                                    # (256, 147) bf16 conv0 patches
        w0, b0,                                    # conv0 + bn0 (folded)
        w11, b11, w12, b12,                        # stage1 conv1/conv2
        w2d, b2d, w21, b21, w22, b22,              # stage2 down / conv1 / conv2
        w3d, b3d, w31, b31, w32, b32,              # stage3
        w4d, b4d, w41, b41, w42, b42,              # stage4
        fcw, fcb,                                  # fc
        out_ref,                                   # (8, 10) output block (row 0 valid)
        mp_buf, p1a, p1b, s1_out,                  # scratch (VMEM)
        pool2, p2, s2_out,
        pool3, p3, s3_out,
        pool4, p4, s4_out):
    f32 = jnp.float32

    # ---- conv0 (7x7 s2 p3) + BN + ReLU : (256,147) @ (147,8) ----------------
    y0 = jnp.dot(a0_ref[...], w0[...], preferred_element_type=f32) + b0[...]
    y0 = jnp.maximum(y0, 0.0)                                       # 16x16x8

    # ---- max_pool2d(3, 2, 1): 16x16 -> 8x8, written into p1a's interior -----
    mp_buf[...] = jnp.zeros_like(mp_buf)                            # 17x17 grid
    for h in range(H0):
        r = (h + 1) * (H0 + 1) + 1
        mp_buf[r: r + H0, :] = y0[h * H0: (h + 1) * H0, :]
    p1a[...] = jnp.zeros_like(p1a)                                  # 10x10 grid
    _maxpool3x3s2_into_padded(mp_buf, H0, p1a, H1 + 2)

    # ---- stage1: BasicBlock(8 -> 8, stride 1), identity = input -------------
    Wp1 = H1 + 2                                                    # 10
    y1 = _conv3x3_slab(p1a, Wp1, H1, H1, w11, b11)
    p1b[...] = jnp.zeros_like(p1b)
    for i in range(H1):
        r = (i + 1) * Wp1 + 1
        p1b[r: r + H1, :] = jnp.maximum(y1[i * Wp1: i * Wp1 + H1, :], 0.0)
    y2 = _conv3x3_slab(p1b, Wp1, H1, H1, w12, b12)
    for i in range(H1):
        idt = p1a[(i + 1) * Wp1 + 1: (i + 1) * Wp1 + 1 + H1, :]
        s1_out[i * H1: (i + 1) * H1, :] = jnp.maximum(
            y2[i * Wp1: i * Wp1 + H1, :] + idt, 0.0)

    # ---- stages 2-4: stride-2 BasicBlocks (LSMP stand-in + downsample) ------
    _run_stride2_stage(s1_out, 8, pool2, p2, s2_out, w2d, b2d, w21, b21, w22, b22)
    _run_stride2_stage(s2_out, 4, pool3, p3, s3_out, w3d, b3d, w31, b31, w32, b32)
    _run_stride2_stage(s3_out, 2, pool4, p4, s4_out, w4d, b4d, w41, b41, w42, b42)

    # ---- adaptive_avg_pool2d(1) is the identity at 1x1 spatial; FC ----------
    feat = s4_out[...].astype(jnp.bfloat16)                         # (1, 64)
    logits = jnp.dot(feat, fcw[...], preferred_element_type=f32) + fcb[...]
    out_ref[...] = jnp.zeros_like(out_ref)
    out_ref[0:1, :] = logits


# ----------------------------------------------------------------------------
# Wrapper: NCHW input -> conv0 im2col patches (XLA, tiny, once) -> fused kernel
# ----------------------------------------------------------------------------
def _conv0_patches(x_nhwc):
    N, H, W, C = x_nhwc.shape
    Ho = (H + 6 - 7) // 2 + 1
    xp = jnp.pad(x_nhwc, ((0, 0), (3, 3), (3, 3), (0, 0)))
    cols = []
    for ki in range(7):
        for kj in range(7):
            cols.append(xp[:, ki: ki + 2 * Ho: 2, kj: kj + 2 * Ho: 2, :])
    patches = jnp.concatenate(cols, axis=-1)                        # (N,Ho,Ho,49*C)
    return patches.reshape(N * Ho * Ho, 7 * 7 * C).astype(jnp.bfloat16)


def forward(weights, x_nchw):
    """weights: flat list from prepare_weights(); x_nchw: (N, 3, 32, 32) f32."""
    assert x_nchw.shape[1:] == (IN_CH, IMG, IMG)
    N = x_nchw.shape[0]
    x = jnp.transpose(x_nchw, (0, 2, 3, 1)).astype(jnp.float32)     # NHWC
    a0 = _conv0_patches(x)                                          # (N*256, 147) bf16

    in_specs = [pl.BlockSpec((H0 * H0, K0), lambda n: (n, 0))]
    for w in weights:
        in_specs.append(pl.BlockSpec(w.shape, lambda n: (0, 0)))    # resident weights

    out = pl.pallas_call(
        network_kernel,
        out_shape=jax.ShapeDtypeStruct((N * 8, N_CLASSES), jnp.float32),
        grid_spec=pltpu.PrefetchScalarGridSpec(
            num_scalar_prefetch=0,
            grid=(N,),
            in_specs=in_specs,
            out_specs=pl.BlockSpec((8, N_CLASSES), lambda n: (n, 0)),
            scratch_shapes=[
                pltpu.VMEM((17 * 17, 8), jnp.float32),   # mp_buf : padded conv0 out
                pltpu.VMEM((10 * 10, 8), jnp.float32),   # p1a    : padded stage1 in
                pltpu.VMEM((10 * 10, 8), jnp.float32),   # p1b    : padded conv1 out
                pltpu.VMEM((64, 8), jnp.float32),        # s1_out
                pltpu.VMEM((16, 8), jnp.float32),        # pool2
                pltpu.VMEM((6 * 6, 16), jnp.float32),    # p2
                pltpu.VMEM((16, 16), jnp.float32),       # s2_out
                pltpu.VMEM((4, 16), jnp.float32),        # pool3
                pltpu.VMEM((4 * 4, 32), jnp.float32),    # p3
                pltpu.VMEM((4, 32), jnp.float32),        # s3_out
                pltpu.VMEM((1, 32), jnp.float32),        # pool4
                pltpu.VMEM((3 * 3, 64), jnp.float32),    # p4
                pltpu.VMEM((1, 64), jnp.float32),        # s4_out
            ]),
        compiler_params=pltpu.CompilerParams(
            dimension_semantics=("parallel",)),
    )(a0, *weights)

    return out.reshape(N, 8, N_CLASSES)[:, 0, :]                    # (N, n_classes)


# ----------------------------------------------------------------------------
# Deterministic parameter construction + inference prep (BN folding, bf16)
# ----------------------------------------------------------------------------
class KeyGen:
    def __init__(self, key):
        self.key = key

    def __call__(self):
        self.key, sub = jax.random.split(self.key)
        return sub


def _conv_init(kg, shape):
    return 0.1 * jax.random.normal(kg(), shape, dtype=jnp.float32)


def _bn_init(kg, c, eps=1e-5):
    gamma = jax.random.uniform(kg(), (c,), minval=0.5, maxval=1.5)
    beta = 0.1 * jax.random.normal(kg(), (c,))
    mean = 0.1 * jax.random.normal(kg(), (c,))
    var = jax.random.uniform(kg(), (c,), minval=0.5, maxval=1.5)
    scale = gamma / jnp.sqrt(var + eps)
    bias = beta - mean * scale
    return {'scale': scale.astype(jnp.float32), 'bias': bias.astype(jnp.float32)}


def make_params(key):
    kg = KeyGen(key)
    p = {'conv0_w': _conv_init(kg, (INIT_CH, IN_CH, 7, 7)), 'bn0': _bn_init(kg, INIT_CH)}
    stages = []
    in_channel = INIT_CH
    for si in range(4):
        channel = INIT_CH * (2 ** si)
        s = 1 if si == 0 else 2
        bp = {'stride': s}
        if s != 1 or in_channel != channel:
            bp['down_w'] = _conv_init(kg, (channel, in_channel, 1, 1))   # LSMP 1x1
            bp['down_bn'] = _bn_init(kg, channel)
        if s == 2:
            bp['conv1_w'] = _conv_init(kg, (channel, in_channel, 1, 1))  # LSMP 1x1
        else:
            bp['conv1_w'] = _conv_init(kg, (channel, in_channel, 3, 3))
        bp['bn1'] = _bn_init(kg, channel)
        bp['conv2_w'] = _conv_init(kg, (channel, channel, 3, 3))
        bp['bn2'] = _bn_init(kg, channel)
        stages.append(bp)
        in_channel = channel
    p['stages'] = stages
    p['fc_w'] = 0.1 * jax.random.normal(kg(), (N_CLASSES, in_channel), dtype=jnp.float32)
    p['fc_b'] = jnp.zeros((N_CLASSES,), jnp.float32)
    return p


def _fold(w, bn):
    """conv (O,I,kh,kw) + eval-mode BN -> bf16 GEMM matrix (kh*kw*I, O), f32 bias row."""
    O, I, kh, kw = w.shape
    B = jnp.transpose(w, (2, 3, 1, 0)).reshape(kh * kw * I, O)
    B = (B * bn['scale'][None, :]).astype(jnp.bfloat16)
    bias = bn['bias'].reshape(1, O).astype(jnp.float32)
    return B, bias


def prepare_weights(p):
    """Flat, kernel-ordered list of BN-folded bf16 weights and f32 biases."""
    ws = list(_fold(p['conv0_w'], p['bn0']))
    for si, bp in enumerate(p['stages']):
        if si == 0:
            assert 'down_w' not in bp and bp['stride'] == 1
        else:
            assert 'down_w' in bp and bp['stride'] == 2
            ws += list(_fold(bp['down_w'], bp['down_bn']))
        ws += list(_fold(bp['conv1_w'], bp['bn1']))
        ws += list(_fold(bp['conv2_w'], bp['bn2']))
    ws.append(p['fc_w'].T.astype(jnp.bfloat16))                     # (64, 10)
    ws.append(p['fc_b'].reshape(1, N_CLASSES).astype(jnp.float32))
    assert len(ws) == 26
    return ws


if __name__ == "__main__":
    key = jax.random.PRNGKey(0)
    pkey, xkey = jax.random.split(key)

    params = make_params(pkey)
    weights = prepare_weights(params)
    x = jax.random.normal(xkey, (2, IN_CH, IMG, IMG), dtype=jnp.float32)

    fwd = jax.jit(forward)
    out = fwd(weights, x)
    jax.block_until_ready(out)

    assert out.shape == (2, N_CLASSES) and out.dtype == jnp.float32
    assert bool(jnp.all(jnp.isfinite(out)))
    print("KERNEL_OK")
</pallas_src>

<mosaic_0001>
module attributes {stable_mosaic.version = 11 : i64} {
  func.func @network_kernel(%arg0: i32, %arg1: memref<256x147xbf16, #tpu.memory_space<vmem>>, %arg2: memref<147x8xbf16, #tpu.memory_space<vmem>>, %arg3: memref<1x8xf32, #tpu.memory_space<vmem>>, %arg4: memref<72x8xbf16, #tpu.memory_space<vmem>>, %arg5: memref<1x8xf32, #tpu.memory_space<vmem>>, %arg6: memref<72x8xbf16, #tpu.memory_space<vmem>>, %arg7: memref<1x8xf32, #tpu.memory_space<vmem>>, %arg8: memref<8x16xbf16, #tpu.memory_space<vmem>>, %arg9: memref<1x16xf32, #tpu.memory_space<vmem>>, %arg10: memref<8x16xbf16, #tpu.memory_space<vmem>>, %arg11: memref<1x16xf32, #tpu.memory_space<vmem>>, %arg12: memref<144x16xbf16, #tpu.memory_space<vmem>>, %arg13: memref<1x16xf32, #tpu.memory_space<vmem>>, %arg14: memref<16x32xbf16, #tpu.memory_space<vmem>>, %arg15: memref<1x32xf32, #tpu.memory_space<vmem>>, %arg16: memref<16x32xbf16, #tpu.memory_space<vmem>>, %arg17: memref<1x32xf32, #tpu.memory_space<vmem>>, %arg18: memref<288x32xbf16, #tpu.memory_space<vmem>>, %arg19: memref<1x32xf32, #tpu.memory_space<vmem>>, %arg20: memref<32x64xbf16, #tpu.memory_space<vmem>>, %arg21: memref<1x64xf32, #tpu.memory_space<vmem>>, %arg22: memref<32x64xbf16, #tpu.memory_space<vmem>>, %arg23: memref<1x64xf32, #tpu.memory_space<vmem>>, %arg24: memref<576x64xbf16, #tpu.memory_space<vmem>>, %arg25: memref<1x64xf32, #tpu.memory_space<vmem>>, %arg26: memref<64x10xbf16, #tpu.memory_space<vmem>>, %arg27: memref<1x10xf32, #tpu.memory_space<vmem>>, %arg28: memref<8x10xf32, #tpu.memory_space<vmem>>, %arg29: memref<289x8xf32, #tpu.memory_space<vmem>>, %arg30: memref<100x8xf32, #tpu.memory_space<vmem>>, %arg31: memref<100x8xf32, #tpu.memory_space<vmem>>, %arg32: memref<64x8xf32, #tpu.memory_space<vmem>>, %arg33: memref<16x8xf32, #tpu.memory_space<vmem>>, %arg34: memref<36x16xf32, #tpu.memory_space<vmem>>, %arg35: memref<16x16xf32, #tpu.memory_space<vmem>>, %arg36: memref<4x16xf32, #tpu.memory_space<vmem>>, %arg37: memref<16x32xf32, #tpu.memory_space<vmem>>, %arg38: memref<4x32xf32, #tpu.memory_space<vmem>>, %arg39: memref<1x32xf32, #tpu.memory_space<vmem>>, %arg40: memref<9x64xf32, #tpu.memory_space<vmem>>, %arg41: memref<1x64xf32, #tpu.memory_space<vmem>>) attributes {dimension_semantics = [#tpu.dimension_semantics<parallel>], iteration_bounds = array<i64: 2>, scalar_prefetch = 0 : i64, scratch_operands = 13 : i64, tpu.core_type = #tpu.core_type<tc>, window_params = [{transform_indices = @transform_0, window_bounds = array<i64: 256, 147>}, {pipeline_mode = #tpu.pipeline_mode<synchronous>, transform_indices = @transform_1, window_bounds = array<i64: 147, 8>}, {pipeline_mode = #tpu.pipeline_mode<synchronous>, transform_indices = @transform_2, window_bounds = array<i64: 1, 8>}, {pipeline_mode = #tpu.pipeline_mode<synchronous>, transform_indices = @transform_3, window_bounds = array<i64: 72, 8>}, {pipeline_mode = #tpu.pipeline_mode<synchronous>, transform_indices = @transform_4, window_bounds = array<i64: 1, 8>}, {pipeline_mode = #tpu.pipeline_mode<synchronous>, transform_indices = @transform_5, window_bounds = array<i64: 72, 8>}, {pipeline_mode = #tpu.pipeline_mode<synchronous>, transform_indices = @transform_6, window_bounds = array<i64: 1, 8>}, {pipeline_mode = #tpu.pipeline_mode<synchronous>, transform_indices = @transform_7, window_bounds = array<i64: 8, 16>}, {pipeline_mode = #tpu.pipeline_mode<synchronous>, transform_indices = @transform_8, window_bounds = array<i64: 1, 16>}, {pipeline_mode = #tpu.pipeline_mode<synchronous>, transform_indices = @transform_9, window_bounds = array<i64: 8, 16>}, {pipeline_mode = #tpu.pipeline_mode<synchronous>, transform_indices = @transform_10, window_bounds = array<i64: 1, 16>}, {pipeline_mode = #tpu.pipeline_mode<synchronous>, transform_indices = @transform_11, window_bounds = array<i64: 144, 16>}, {pipeline_mode = #tpu.pipeline_mode<synchronous>, transform_indices = @transform_12, window_bounds = array<i64: 1, 16>}, {pipeline_mode = #tpu.pipeline_mode<synchronous>, transform_indices = @transform_13, window_bounds = array<i64: 16, 32>}, {pipeline_mode = #tpu.pipeline_mode<synchronous>, transform_indices = @transform_14, window_bounds = array<i64: 1, 32>}, {pipeline_mode = #tpu.pipeline_mode<synchronous>, transform_indices = @transform_15, window_bounds = array<i64: 16, 32>}, {pipeline_mode = #tpu.pipeline_mode<synchronous>, transform_indices = @transform_16, window_bounds = array<i64: 1, 32>}, {pipeline_mode = #tpu.pipeline_mode<synchronous>, transform_indices = @transform_17, window_bounds = array<i64: 288, 32>}, {pipeline_mode = #tpu.pipeline_mode<synchronous>, transform_indices = @transform_18, window_bounds = array<i64: 1, 32>}, {pipeline_mode = #tpu.pipeline_mode<synchronous>, transform_indices = @transform_19, window_bounds = array<i64: 32, 64>}, {pipeline_mode = #tpu.pipeline_mode<synchronous>, transform_indices = @transform_20, window_bounds = array<i64: 1, 64>}, {pipeline_mode = #tpu.pipeline_mode<synchronous>, transform_indices = @transform_21, window_bounds = array<i64: 32, 64>}, {pipeline_mode = #tpu.pipeline_mode<synchronous>, transform_indices = @transform_22, window_bounds = array<i64: 1, 64>}, {pipeline_mode = #tpu.pipeline_mode<synchronous>, transform_indices = @transform_23, window_bounds = array<i64: 576, 64>}, {pipeline_mode = #tpu.pipeline_mode<synchronous>, transform_indices = @transform_24, window_bounds = array<i64: 1, 64>}, {pipeline_mode = #tpu.pipeline_mode<synchronous>, transform_indices = @transform_25, window_bounds = array<i64: 64, 10>}, {pipeline_mode = #tpu.pipeline_mode<synchronous>, transform_indices = @transform_26, window_bounds = array<i64: 1, 10>}, {transform_indices = @transform_27, window_bounds = array<i64: 8, 10>}]} {
    %c0 = arith.constant 0 : index
    %c0_0 = arith.constant 0 : index
    %0 = vector.load %arg1[%c0, %c0_0] : memref<256x147xbf16, #tpu.memory_space<vmem>>, vector<256x147xbf16>
    %c0_1 = arith.constant 0 : index
    %c0_2 = arith.constant 0 : index
    %1 = vector.load %arg2[%c0_1, %c0_2] : memref<147x8xbf16, #tpu.memory_space<vmem>>, vector<147x8xbf16>
    %cst = arith.constant dense<0.000000e+00> : vector<256x8xf32>
    %2 = tpu.matmul %0, %1, %cst {dimension_numbers = #tpu.dot_dimension_numbers<[1], [0], [0], [1], [0, 0, 1, 1], [], []>} : vector<256x147xbf16>, vector<147x8xbf16>, vector<256x8xf32> -> vector<256x8xf32>
    %c0_3 = arith.constant 0 : index
    %c0_4 = arith.constant 0 : index
    %3 = vector.load %arg3[%c0_3, %c0_4] : memref<1x8xf32, #tpu.memory_space<vmem>>, vector<1x8xf32>
    %4 = vector.broadcast %3 : vector<1x8xf32> to vector<256x8xf32>
    %5 = arith.addf %2, %4 : vector<256x8xf32>
    %cst_5 = arith.constant 0.000000e+00 : f32
    %6 = vector.broadcast %cst_5 : f32 to vector<256x8xf32>
    %7 = arith.maximumf %5, %6 : vector<256x8xf32>
    %cst_6 = arith.constant 0.000000e+00 : f32
    %8 = vector.broadcast %cst_6 : f32 to vector<289x8xf32>
    %c0_7 = arith.constant 0 : index
    %c0_8 = arith.constant 0 : index
    %9 = vector.load %arg29[%c0_7, %c0_8] : memref<289x8xf32, #tpu.memory_space<vmem>>, vector<289x8xf32>
    tpu.vector_store %arg29[%c0_7, %c0_8], %8 {strides = array<i32>} : memref<289x8xf32, #tpu.memory_space<vmem>>, vector<289x8xf32>,
    %10 = vector.extract_strided_slice %7 {offsets = [0, 0], sizes = [16, 8], strides = [1, 1]} : vector<256x8xf32> to vector<16x8xf32>
    %c18 = arith.constant 18 : index
    %c0_9 = arith.constant 0 : index
    %11 = vector.load %arg29[%c18, %c0_9] : memref<289x8xf32, #tpu.memory_space<vmem>>, vector<16x8xf32>
    tpu.vector_store %arg29[%c18, %c0_9], %10 {strides = array<i32>} : memref<289x8xf32, #tpu.memory_space<vmem>>, vector<16x8xf32>,
    %12 = vector.extract_strided_slice %7 {offsets = [16, 0], sizes = [16, 8], strides = [1, 1]} : vector<256x8xf32> to vector<16x8xf32>
    %c35 = arith.constant 35 : index
    %c0_10 = arith.constant 0 : index
    %13 = vector.load %arg29[%c35, %c0_10] : memref<289x8xf32, #tpu.memory_space<vmem>>, vector<16x8xf32>
    tpu.vector_store %arg29[%c35, %c0_10], %12 {strides = array<i32>} : memref<289x8xf32, #tpu.memory_space<vmem>>, vector<16x8xf32>,
    %14 = vector.extract_strided_slice %7 {offsets = [32, 0], sizes = [16, 8], strides = [1, 1]} : vector<256x8xf32> to vector<16x8xf32>
    %c52 = arith.constant 52 : index
    %c0_11 = arith.constant 0 : index
    %15 = vector.load %arg29[%c52, %c0_11] : memref<289x8xf32, #tpu.memory_space<vmem>>, vector<16x8xf32>
    tpu.vector_store %arg29[%c52, %c0_11], %14 {strides = array<i32>} : memref<289x8xf32, #tpu.memory_space<vmem>>, vector<16x8xf32>,
    %16 = vector.extract_strided_slice %7 {offsets = [48, 0], sizes = [16, 8], strides = [1, 1]} : vector<256x8xf32> to vector<16x8xf32>
    %c69 = arith.constant 69 : index
    %c0_12 = arith.constant 0 : index
    %17 = vector.load %arg29[%c69, %c0_12] : memref<289x8xf32, #tpu.memory_space<vmem>>, vector<16x8xf32>
    tpu.vector_store %arg29[%c69, %c0_12], %16 {strides = array<i32>} : memref<289x8xf32, #tpu.memory_space<vmem>>, vector<16x8xf32>,
    %18 = vector.extract_strided_slice %7 {offsets = [64, 0], sizes = [16, 8], strides = [1, 1]} : vector<256x8xf32> to vector<16x8xf32>
    %c86 = arith.constant 86 : index
    %c0_13 = arith.constant 0 : index
    %19 = vector.load %arg29[%c86, %c0_13] : memref<289x8xf32, #tpu.memory_space<vmem>>, vector<16x8xf32>
    tpu.vector_store %arg29[%c86, %c0_13], %18 {strides = array<i32>} : memref<289x8xf32, #tpu.memory_space<vmem>>, vector<16x8xf32>,
    %20 = vector.extract_strided_slice %7 {offsets = [80, 0], sizes = [16, 8], strides = [1, 1]} : vector<256x8xf32> to vector<16x8xf32>
    %c103 = arith.constant 103 : index
    %c0_14 = arith.constant 0 : index
    %21 = vector.load %arg29[%c103, %c0_14] : memref<289x8xf32, #tpu.memory_space<vmem>>, vector<16x8xf32>
    tpu.vector_store %arg29[%c103, %c0_14], %20 {strides = array<i32>} : memref<289x8xf32, #tpu.memory_space<vmem>>, vector<16x8xf32>,
    %22 = vector.extract_strided_slice %7 {offsets = [96, 0], sizes = [16, 8], strides = [1, 1]} : vector<256x8xf32> to vector<16x8xf32>
    %c120 = arith.constant 120 : index
    %c0_15 = arith.constant 0 : index
    %23 = vector.load %arg29[%c120, %c0_15] : memref<289x8xf32, #tpu.memory_space<vmem>>, vector<16x8xf32>
    tpu.vector_store %arg29[%c120, %c0_15], %22 {strides = array<i32>} : memref<289x8xf32, #tpu.memory_space<vmem>>, vector<16x8xf32>,
    %24 = vector.extract_strided_slice %7 {offsets = [112, 0], sizes = [16, 8], strides = [1, 1]} : vector<256x8xf32> to vector<16x8xf32>
    %c137 = arith.constant 137 : index
    %c0_16 = arith.constant 0 : index
    %25 = vector.load %arg29[%c137, %c0_16] : memref<289x8xf32, #tpu.memory_space<vmem>>, vector<16x8xf32>
    tpu.vector_store %arg29[%c137, %c0_16], %24 {strides = array<i32>} : memref<289x8xf32, #tpu.memory_space<vmem>>, vector<16x8xf32>,
    %26 = vector.extract_strided_slice %7 {offsets = [128, 0], sizes = [16, 8], strides = [1, 1]} : vector<256x8xf32> to vector<16x8xf32>
    %c154 = arith.constant 154 : index
    %c0_17 = arith.constant 0 : index
    %27 = vector.load %arg29[%c154, %c0_17] : memref<289x8xf32, #tpu.memory_space<vmem>>, vector<16x8xf32>
    tpu.vector_store %arg29[%c154, %c0_17], %26 {strides = array<i32>} : memref<289x8xf32, #tpu.memory_space<vmem>>, vector<16x8xf32>,
    %28 = vector.extract_strided_slice %7 {offsets = [144, 0], sizes = [16, 8], strides = [1, 1]} : vector<256x8xf32> to vector<16x8xf32>
    %c171 = arith.constant 171 : index
    %c0_18 = arith.constant 0 : index
    %29 = vector.load %arg29[%c171, %c0_18] : memref<289x8xf32, #tpu.memory_space<vmem>>, vector<16x8xf32>
    tpu.vector_store %arg29[%c171, %c0_18], %28 {strides = array<i32>} : memref<289x8xf32, #tpu.memory_space<vmem>>, vector<16x8xf32>,
    %30 = vector.extract_strided_slice %7 {offsets = [160, 0], sizes = [16, 8], strides = [1, 1]} : vector<256x8xf32> to vector<16x8xf32>
    %c188 = arith.constant 188 : index
    %c0_19 = arith.constant 0 : index
    %31 = vector.load %arg29[%c188, %c0_19] : memref<289x8xf32, #tpu.memory_space<vmem>>, vector<16x8xf32>
    tpu.vector_store %arg29[%c188, %c0_19], %30 {strides = array<i32>} : memref<289x8xf32, #tpu.memory_space<vmem>>, vector<16x8xf32>,
    %32 = vector.extract_strided_slice %7 {offsets = [176, 0], sizes = [16, 8], strides = [1, 1]} : vector<256x8xf32> to vector<16x8xf32>
    %c205 = arith.constant 205 : index
    %c0_20 = arith.constant 0 : index
    %33 = vector.load %arg29[%c205, %c0_20] : memref<289x8xf32, #tpu.memory_space<vmem>>, vector<16x8xf32>
    tpu.vector_store %arg29[%c205, %c0_20], %32 {strides = array<i32>} : memref<289x8xf32, #tpu.memory_space<vmem>>, vector<16x8xf32>,
    %34 = vector.extract_strided_slice %7 {offsets = [192, 0], sizes = [16, 8], strides = [1, 1]} : vector<256x8xf32> to vector<16x8xf32>
    %c222 = arith.constant 222 : index
    %c0_21 = arith.constant 0 : index
    %35 = vector.load %arg29[%c222, %c0_21] : memref<289x8xf32, #tpu.memory_space<vmem>>, vector<16x8xf32>
    tpu.vector_store %arg29[%c222, %c0_21], %34 {strides = array<i32>} : memref<289x8xf32, #tpu.memory_space<vmem>>, vector<16x8xf32>,
    %36 = vector.extract_strided_slice %7 {offsets = [208, 0], sizes = [16, 8], strides = [1, 1]} : vector<256x8xf32> to vector<16x8xf32>
    %c239 = arith.constant 239 : index
    %c0_22 = arith.constant 0 : index
    %37 = vector.load %arg29[%c239, %c0_22] : memref<289x8xf32, #tpu.memory_space<vmem>>, vector<16x8xf32>
    tpu.vector_store %arg29[%c239, %c0_22], %36 {strides = array<i32>} : memref<289x8xf32, #tpu.memory_space<vmem>>, vector<16x8xf32>,
    %38 = vector.extract_strided_slice %7 {offsets = [224, 0], sizes = [16, 8], strides = [1, 1]} : vector<256x8xf32> to vector<16x8xf32>
    %c256 = arith.constant 256 : index
    %c0_23 = arith.constant 0 : index
    %39 = vector.load %arg29[%c256, %c0_23] : memref<289x8xf32, #tpu.memory_space<vmem>>, vector<16x8xf32>
    tpu.vector_store %arg29[%c256, %c0_23], %38 {strides = array<i32>} : memref<289x8xf32, #tpu.memory_space<vmem>>, vector<16x8xf32>,
    %40 = vector.extract_strided_slice %7 {offsets = [240, 0], sizes = [16, 8], strides = [1, 1]} : vector<256x8xf32> to vector<16x8xf32>
    %c273 = arith.constant 273 : index
    %c0_24 = arith.constant 0 : index
    %41 = vector.load %arg29[%c273, %c0_24] : memref<289x8xf32, #tpu.memory_space<vmem>>, vector<16x8xf32>
    tpu.vector_store %arg29[%c273, %c0_24], %40 {strides = array<i32>} : memref<289x8xf32, #tpu.memory_space<vmem>>, vector<16x8xf32>,
    %cst_25 = arith.constant 0.000000e+00 : f32
    %42 = vector.broadcast %cst_25 : f32 to vector<100x8xf32>
    %c0_26 = arith.constant 0 : index
    %c0_27 = arith.constant 0 : index
    %43 = vector.load %arg30[%c0_26, %c0_27] : memref<100x8xf32, #tpu.memory_space<vmem>>, vector<100x8xf32>
    tpu.vector_store %arg30[%c0_26, %c0_27], %42 {strides = array<i32>} : memref<100x8xf32, #tpu.memory_space<vmem>>, vector<100x8xf32>,
    %c0_28 = arith.constant 0 : index
    %c0_29 = arith.constant 0 : index
    %44 = vector.load %arg29[%c0_28, %c0_29] : memref<289x8xf32, #tpu.memory_space<vmem>>, vector<253x8xf32>
    %c1 = arith.constant 1 : index
    %c0_30 = arith.constant 0 : index
    %45 = vector.load %arg29[%c1, %c0_30] : memref<289x8xf32, #tpu.memory_space<vmem>>, vector<253x8xf32>
    %46 = arith.maximumf %44, %45 : vector<253x8xf32>
    %c2 = arith.constant 2 : index
    %c0_31 = arith.constant 0 : index
    %47 = vector.load %arg29[%c2, %c0_31] : memref<289x8xf32, #tpu.memory_space<vmem>>, vector<253x8xf32>
    %48 = arith.maximumf %46, %47 : vector<253x8xf32>
    %c17 = arith.constant 17 : index
    %c0_32 = arith.constant 0 : index
    %49 = vector.load %arg29[%c17, %c0_32] : memref<289x8xf32, #tpu.memory_space<vmem>>, vector<253x8xf32>
    %50 = arith.maximumf %48, %49 : vector<253x8xf32>
    %c18_33 = arith.constant 18 : index
    %c0_34 = arith.constant 0 : index
    %51 = vector.load %arg29[%c18_33, %c0_34] : memref<289x8xf32, #tpu.memory_space<vmem>>, vector<253x8xf32>
    %52 = arith.maximumf %50, %51 : vector<253x8xf32>
    %c19 = arith.constant 19 : index
    %c0_35 = arith.constant 0 : index
    %53 = vector.load %arg29[%c19, %c0_35] : memref<289x8xf32, #tpu.memory_space<vmem>>, vector<253x8xf32>
    %54 = arith.maximumf %52, %53 : vector<253x8xf32>
    %c34 = arith.constant 34 : index
    %c0_36 = arith.constant 0 : index
    %55 = vector.load %arg29[%c34, %c0_36] : memref<289x8xf32, #tpu.memory_space<vmem>>, vector<253x8xf32>
    %56 = arith.maximumf %54, %55 : vector<253x8xf32>
    %c35_37 = arith.constant 35 : index
    %c0_38 = arith.constant 0 : index
    %57 = vector.load %arg29[%c35_37, %c0_38] : memref<289x8xf32, #tpu.memory_space<vmem>>, vector<253x8xf32>
    %58 = arith.maximumf %56, %57 : vector<253x8xf32>
    %c36 = arith.constant 36 : index
    %c0_39 = arith.constant 0 : index
    %59 = vector.load %arg29[%c36, %c0_39] : memref<289x8xf32, #tpu.memory_space<vmem>>, vector<253x8xf32>
    %60 = arith.maximumf %58, %59 : vector<253x8xf32>
    %61 = vector.extract_strided_slice %60 {offsets = [0, 0], sizes = [1, 8], strides = [1, 1]} : vector<253x8xf32> to vector<1x8xf32>
    %c11 = arith.constant 11 : index
    %c0_40 = arith.constant 0 : index
    %62 = vector.load %arg30[%c11, %c0_40] : memref<100x8xf32, #tpu.memory_space<vmem>>, vector<1x8xf32>
    tpu.vector_store %arg30[%c11, %c0_40], %61 {strides = array<i32>} : memref<100x8xf32, #tpu.memory_space<vmem>>, vector<1x8xf32>,
    %63 = vector.extract_strided_slice %60 {offsets = [2, 0], sizes = [1, 8], strides = [1, 1]} : vector<253x8xf32> to vector<1x8xf32>
    %c12 = arith.constant 12 : index
    %c0_41 = arith.constant 0 : index
    %64 = vector.load %arg30[%c12, %c0_41] : memref<100x8xf32, #tpu.memory_space<vmem>>, vector<1x8xf32>
    tpu.vector_store %arg30[%c12, %c0_41], %63 {strides = array<i32>} : memref<100x8xf32, #tpu.memory_space<vmem>>, vector<1x8xf32>,
    %65 = vector.extract_strided_slice %60 {offsets = [4, 0], sizes = [1, 8], strides = [1, 1]} : vector<253x8xf32> to vector<1x8xf32>
    %c13 = arith.constant 13 : index
    %c0_42 = arith.constant 0 : index
    %66 = vector.load %arg30[%c13, %c0_42] : memref<100x8xf32, #tpu.memory_space<vmem>>, vector<1x8xf32>
    tpu.vector_store %arg30[%c13, %c0_42], %65 {strides = array<i32>} : memref<100x8xf32, #tpu.memory_space<vmem>>, vector<1x8xf32>,
    %67 = vector.extract_strided_slice %60 {offsets = [6, 0], sizes = [1, 8], strides = [1, 1]} : vector<253x8xf32> to vector<1x8xf32>
    %c14 = arith.constant 14 : index
    %c0_43 = arith.constant 0 : index
    %68 = vector.load %arg30[%c14, %c0_43] : memref<100x8xf32, #tpu.memory_space<vmem>>, vector<1x8xf32>
    tpu.vector_store %arg30[%c14, %c0_43], %67 {strides = array<i32>} : memref<100x8xf32, #tpu.memory_space<vmem>>, vector<1x8xf32>,
    %69 = vector.extract_strided_slice %60 {offsets = [8, 0], sizes = [1, 8], strides = [1, 1]} : vector<253x8xf32> to vector<1x8xf32>
    %c15 = arith.constant 15 : index
    %c0_44 = arith.constant 0 : index
    %70 = vector.load %arg30[%c15, %c0_44] : memref<100x8xf32, #tpu.memory_space<vmem>>, vector<1x8xf32>
    tpu.vector_store %arg30[%c15, %c0_44], %69 {strides = array<i32>} : memref<100x8xf32, #tpu.memory_space<vmem>>, vector<1x8xf32>,
    %71 = vector.extract_strided_slice %60 {offsets = [10, 0], sizes = [1, 8], strides = [1, 1]} : vector<253x8xf32> to vector<1x8xf32>
    %c16 = arith.constant 16 : index
    %c0_45 = arith.constant 0 : index
    %72 = vector.load %arg30[%c16, %c0_45] : memref<100x8xf32, #tpu.memory_space<vmem>>, vector<1x8xf32>
    tpu.vector_store %arg30[%c16, %c0_45], %71 {strides = array<i32>} : memref<100x8xf32, #tpu.memory_space<vmem>>, vector<1x8xf32>,
    %73 = vector.extract_strided_slice %60 {offsets = [12, 0], sizes = [1, 8], strides = [1, 1]} : vector<253x8xf32> to vector<1x8xf32>
    %c17_46 = arith.constant 17 : index
    %c0_47 = arith.constant 0 : index
    %74 = vector.load %arg30[%c17_46, %c0_47] : memref<100x8xf32, #tpu.memory_space<vmem>>, vector<1x8xf32>
    tpu.vector_store %arg30[%c17_46, %c0_47], %73 {strides = array<i32>} : memref<100x8xf32, #tpu.memory_space<vmem>>, vector<1x8xf32>,
    %75 = vector.extract_strided_slice %60 {offsets = [14, 0], sizes = [1, 8], strides = [1, 1]} : vector<253x8xf32> to vector<1x8xf32>
    %c18_48 = arith.constant 18 : index
    %c0_49 = arith.constant 0 : index
    %76 = vector.load %arg30[%c18_48, %c0_49] : memref<100x8xf32, #tpu.memory_space<vmem>>, vector<1x8xf32>
    tpu.vector_store %arg30[%c18_48, %c0_49], %75 {strides = array<i32>} : memref<100x8xf32, #tpu.memory_space<vmem>>, vector<1x8xf32>,
    %77 = vector.extract_strided_slice %60 {offsets = [34, 0], sizes = [1, 8], strides = [1, 1]} : vector<253x8xf32> to vector<1x8xf32>
    %c21 = arith.constant 21 : index
    %c0_50 = arith.constant 0 : index
    %78 = vector.load %arg30[%c21, %c0_50] : memref<100x8xf32, #tpu.memory_space<vmem>>, vector<1x8xf32>
    tpu.vector_store %arg30[%c21, %c0_50], %77 {strides = array<i32>} : memref<100x8xf32, #tpu.memory_space<vmem>>, vector<1x8xf32>,
    %79 = vector.extract_strided_slice %60 {offsets = [36, 0], sizes = [1, 8], strides = [1, 1]} : vector<253x8xf32> to vector<1x8xf32>
    %c22 = arith.constant 22 : index
    %c0_51 = arith.constant 0 : index
    %80 = vector.load %arg30[%c22, %c0_51] : memref<100x8xf32, #tpu.memory_space<vmem>>, vector<1x8xf32>
    tpu.vector_store %arg30[%c22, %c0_51], %79 {strides = array<i32>} : memref<100x8xf32, #tpu.memory_space<vmem>>, vector<1x8xf32>,
    %81 = vector.extract_strided_slice %60 {offsets = [38, 0], sizes = [1, 8], strides = [1, 1]} : vector<253x8xf32> to vector<1x8xf32>
    %c23 = arith.constant 23 : index
    %c0_52 = arith.constant 0 : index
    %82 = vector.load %arg30[%c23, %c0_52] : memref<100x8xf32, #tpu.memory_space<vmem>>, vector<1x8xf32>
    tpu.vector_store %arg30[%c23, %c0_52], %81 {strides = array<i32>} : memref<100x8xf32, #tpu.memory_space<vmem>>, vector<1x8xf32>,
    %83 = vector.extract_strided_slice %60 {offsets = [40, 0], sizes = [1, 8], strides = [1, 1]} : vector<253x8xf32> to vector<1x8xf32>
    %c24 = arith.constant 24 : index
    %c0_53 = arith.constant 0 : index
    %84 = vector.load %arg30[%c24, %c0_53] : memref<100x8xf32, #tpu.memory_space<vmem>>, vector<1x8xf32>
    tpu.vector_store %arg30[%c24, %c0_53], %83 {strides = array<i32>} : memref<100x8xf32, #tpu.memory_space<vmem>>, vector<1x8xf32>,
    %85 = vector.extract_strided_slice %60 {offsets = [42, 0], sizes = [1, 8], strides = [1, 1]} : vector<253x8xf32> to vector<1x8xf32>
    %c25 = arith.constant 25 : index
    %c0_54 = arith.constant 0 : index
    %86 = vector.load %arg30[%c25, %c0_54] : memref<100x8xf32, #tpu.memory_space<vmem>>, vector<1x8xf32>
    tpu.vector_store %arg30[%c25, %c0_54], %85 {strides = array<i32>} : memref<100x8xf32, #tpu.memory_space<vmem>>, vector<1x8xf32>,
    %87 = vector.extract_strided_slice %60 {offsets = [44, 0], sizes = [1, 8], strides = [1, 1]} : vector<253x8xf32> to vector<1x8xf32>
    %c26 = arith.constant 26 : index
    %c0_55 = arith.constant 0 : index
    %88 = vector.load %arg30[%c26, %c0_55] : memref<100x8xf32, #tpu.memory_space<vmem>>, vector<1x8xf32>
    tpu.vector_store %arg30[%c26, %c0_55], %87 {strides = array<i32>} : memref<100x8xf32, #tpu.memory_space<vmem>>, vector<1x8xf32>,
    %89 = vector.extract_strided_slice %60 {offsets = [46, 0], sizes = [1, 8], strides = [1, 1]} : vector<253x8xf32> to vector<1x8xf32>
    %c27 = arith.constant 27 : index
    %c0_56 = arith.constant 0 : index
    %90 = vector.load %arg30[%c27, %c0_56] : memref<100x8xf32, #tpu.memory_space<vmem>>, vector<1x8xf32>
    tpu.vector_store %arg30[%c27, %c0_56], %89 {strides = array<i32>} : memref<100x8xf32, #tpu.memory_space<vmem>>, vector<1x8xf32>,
    %91 = vector.extract_strided_slice %60 {offsets = [48, 0], sizes = [1, 8], strides = [1, 1]} : vector<253x8xf32> to vector<1x8xf32>
    %c28 = arith.constant 28 : index
    %c0_57 = arith.constant 0 : index
    %92 = vector.load %arg30[%c28, %c0_57] : memref<100x8xf32, #tpu.memory_space<vmem>>, vector<1x8xf32>
    tpu.vector_store %arg30[%c28, %c0_57], %91 {strides = array<i32>} : memref<100x8xf32, #tpu.memory_space<vmem>>, vector<1x8xf32>,
    %93 = vector.extract_strided_slice %60 {offsets = [68, 0], sizes = [1, 8], strides = [1, 1]} : vector<253x8xf32> to vector<1x8xf32>
    %c31 = arith.constant 31 : index
    %c0_58 = arith.constant 0 : index
    %94 = vector.load %arg30[%c31, %c0_58] : memref<100x8xf32, #tpu.memory_space<vmem>>, vector<1x8xf32>
    tpu.vector_store %arg30[%c31, %c0_58], %93 {strides = array<i32>} : memref<100x8xf32, #tpu.memory_space<vmem>>, vector<1x8xf32>,
    %95 = vector.extract_strided_slice %60 {offsets = [70, 0], sizes = [1, 8], strides = [1, 1]} : vector<253x8xf32> to vector<1x8xf32>
    %c32 = arith.constant 32 : index
    %c0_59 = arith.constant 0 : index
    %96 = vector.load %arg30[%c32, %c0_59] : memref<100x8xf32, #tpu.memory_space<vmem>>, vector<1x8xf32>
    tpu.vector_store %arg30[%c32, %c0_59], %95 {strides = array<i32>} : memref<100x8xf32, #tpu.memory_space<vmem>>, vector<1x8xf32>,
    %97 = vector.extract_strided_slice %60 {offsets = [72, 0], sizes = [1, 8], strides = [1, 1]} : vector<253x8xf32> to vector<1x8xf32>
    %c33 = arith.constant 33 : index
    %c0_60 = arith.constant 0 : index
    %98 = vector.load %arg30[%c33, %c0_60] : memref<100x8xf32, #tpu.memory_space<vmem>>, vector<1x8xf32>
    tpu.vector_store %arg30[%c33, %c0_60], %97 {strides = array<i32>} : memref<100x8xf32, #tpu.memory_space<vmem>>, vector<1x8xf32>,
    %99 = vector.extract_strided_slice %60 {offsets = [74, 0], sizes = [1, 8], strides = [1, 1]} : vector<253x8xf32> to vector<1x8xf32>
    %c34_61 = arith.constant 34 : index
    %c0_62 = arith.constant 0 : index
    %100 = vector.load %arg30[%c34_61, %c0_62] : memref<100x8xf32, #tpu.memory_space<vmem>>, vector<1x8xf32>
    tpu.vector_store %arg30[%c34_61, %c0_62], %99 {strides = array<i32>} : memref<100x8xf32, #tpu.memory_space<vmem>>, vector<1x8xf32>,
    %101 = vector.extract_strided_slice %60 {offsets = [76, 0], sizes = [1, 8], strides = [1, 1]} : vector<253x8xf32> to vector<1x8xf32>
    %c35_63 = arith.constant 35 : index
    %c0_64 = arith.constant 0 : index
    %102 = vector.load %arg30[%c35_63, %c0_64] : memref<100x8xf32, #tpu.memory_space<vmem>>, vector<1x8xf32>
    tpu.vector_store %arg30[%c35_63, %c0_64], %101 {strides = array<i32>} : memref<100x8xf32, #tpu.memory_space<vmem>>, vector<1x8xf32>,
    %103 = vector.extract_strided_slice %60 {offsets = [78, 0], sizes = [1, 8], strides = [1, 1]} : vector<253x8xf32> to vector<1x8xf32>
    %c36_65 = arith.constant 36 : index
    %c0_66 = arith.constant 0 : index
    %104 = vector.load %arg30[%c36_65, %c0_66] : memref<100x8xf32, #tpu.memory_space<vmem>>, vector<1x8xf32>
    tpu.vector_store %arg30[%c36_65, %c0_66], %103 {strides = array<i32>} : memref<100x8xf32, #tpu.memory_space<vmem>>, vector<1x8xf32>,
    %105 = vector.extract_strided_slice %60 {offsets = [80, 0], sizes = [1, 8], strides = [1, 1]} : vector<253x8xf32> to vector<1x8xf32>
    %c37 = arith.constant 37 : index
    %c0_67 = arith.constant 0 : index
    %106 = vector.load %arg30[%c37, %c0_67] : memref<100x8xf32, #tpu.memory_space<vmem>>, vector<1x8xf32>
    tpu.vector_store %arg30[%c37, %c0_67], %105 {strides = array<i32>} : memref<100x8xf32, #tpu.memory_space<vmem>>, vector<1x8xf32>,
    %107 = vector.extract_strided_slice %60 {offsets = [82, 0], sizes = [1, 8], strides = [1, 1]} : vector<253x8xf32> to vector<1x8xf32>
    %c38 = arith.constant 38 : index
    %c0_68 = arith.constant 0 : index
    %108 = vector.load %arg30[%c38, %c0_68] : memref<100x8xf32, #tpu.memory_space<vmem>>, vector<1x8xf32>
    tpu.vector_store %arg30[%c38, %c0_68], %107 {strides = array<i32>} : memref<100x8xf32, #tpu.memory_space<vmem>>, vector<1x8xf32>,
    %109 = vector.extract_strided_slice %60 {offsets = [102, 0], sizes = [1, 8], strides = [1, 1]} : vector<253x8xf32> to vector<1x8xf32>
    %c41 = arith.constant 41 : index
    %c0_69 = arith.constant 0 : index
    %110 = vector.load %arg30[%c41, %c0_69] : memref<100x8xf32, #tpu.memory_space<vmem>>, vector<1x8xf32>
    tpu.vector_store %arg30[%c41, %c0_69], %109 {strides = array<i32>} : memref<100x8xf32, #tpu.memory_space<vmem>>, vector<1x8xf32>,
    %111 = vector.extract_strided_slice %60 {offsets = [104, 0], sizes = [1, 8], strides = [1, 1]} : vector<253x8xf32> to vector<1x8xf32>
    %c42 = arith.constant 42 : index
    %c0_70 = arith.constant 0 : index
    %112 = vector.load %arg30[%c42, %c0_70] : memref<100x8xf32, #tpu.memory_space<vmem>>, vector<1x8xf32>
    tpu.vector_store %arg30[%c42, %c0_70], %111 {strides = array<i32>} : memref<100x8xf32, #tpu.memory_space<vmem>>, vector<1x8xf32>,
    %113 = vector.extract_strided_slice %60 {offsets = [106, 0], sizes = [1, 8], strides = [1, 1]} : vector<253x8xf32> to vector<1x8xf32>
    %c43 = arith.constant 43 : index
    %c0_71 = arith.constant 0 : index
    %114 = vector.load %arg30[%c43, %c0_71] : memref<100x8xf32, #tpu.memory_space<vmem>>, vector<1x8xf32>
    tpu.vector_store %arg30[%c43, %c0_71], %113 {strides = array<i32>} : memref<100x8xf32, #tpu.memory_space<vmem>>, vector<1x8xf32>,
    %115 = vector.extract_strided_slice %60 {offsets = [108, 0], sizes = [1, 8], strides = [1, 1]} : vector<253x8xf32> to vector<1x8xf32>
    %c44 = arith.constant 44 : index
    %c0_72 = arith.constant 0 : index
    %116 = vector.load %arg30[%c44, %c0_72] : memref<100x8xf32, #tpu.memory_space<vmem>>, vector<1x8xf32>
    tpu.vector_store %arg30[%c44, %c0_72], %115 {strides = array<i32>} : memref<100x8xf32, #tpu.memory_space<vmem>>, vector<1x8xf32>,
    %117 = vector.extract_strided_slice %60 {offsets = [110, 0], sizes = [1, 8], strides = [1, 1]} : vector<253x8xf32> to vector<1x8xf32>
    %c45 = arith.constant 45 : index
    %c0_73 = arith.constant 0 : index
    %118 = vector.load %arg30[%c45, %c0_73] : memref<100x8xf32, #tpu.memory_space<vmem>>, vector<1x8xf32>
    tpu.vector_store %arg30[%c45, %c0_73], %117 {strides = array<i32>} : memref<100x8xf32, #tpu.memory_space<vmem>>, vector<1x8xf32>,
    %119 = vector.extract_strided_slice %60 {offsets = [112, 0], sizes = [1, 8], strides = [1, 1]} : vector<253x8xf32> to vector<1x8xf32>
    %c46 = arith.constant 46 : index
    %c0_74 = arith.constant 0 : index
    %120 = vector.load %arg30[%c46, %c0_74] : memref<100x8xf32, #tpu.memory_space<vmem>>, vector<1x8xf32>
    tpu.vector_store %arg30[%c46, %c0_74], %119 {strides = array<i32>} : memref<100x8xf32, #tpu.memory_space<vmem>>, vector<1x8xf32>,
    %121 = vector.extract_strided_slice %60 {offsets = [114, 0], sizes = [1, 8], strides = [1, 1]} : vector<253x8xf32> to vector<1x8xf32>
    %c47 = arith.constant 47 : index
    %c0_75 = arith.constant 0 : index
    %122 = vector.load %arg30[%c47, %c0_75] : memref<100x8xf32, #tpu.memory_space<vmem>>, vector<1x8xf32>
    tpu.vector_store %arg30[%c47, %c0_75], %121 {strides = array<i32>} : memref<100x8xf32, #tpu.memory_space<vmem>>, vector<1x8xf32>,
    %123 = vector.extract_strided_slice %60 {offsets = [116, 0], sizes = [1, 8], strides = [1, 1]} : vector<253x8xf32> to vector<1x8xf32>
    %c48 = arith.constant 48 : index
    %c0_76 = arith.constant 0 : index
    %124 = vector.load %arg30[%c48, %c0_76] : memref<100x8xf32, #tpu.memory_space<vmem>>, vector<1x8xf32>
    tpu.vector_store %arg30[%c48, %c0_76], %123 {strides = array<i32>} : memref<100x8xf32, #tpu.memory_space<vmem>>, vector<1x8xf32>,
    %125 = vector.extract_strided_slice %60 {offsets = [136, 0], sizes = [1, 8], strides = [1, 1]} : vector<253x8xf32> to vector<1x8xf32>
    %c51 = arith.constant 51 : index
    %c0_77 = arith.constant 0 : index
    %126 = vector.load %arg30[%c51, %c0_77] : memref<100x8xf32, #tpu.memory_space<vmem>>, vector<1x8xf32>
    tpu.vector_store %arg30[%c51, %c0_77], %125 {strides = array<i32>} : memref<100x8xf32, #tpu.memory_space<vmem>>, vector<1x8xf32>,
    %127 = vector.extract_strided_slice %60 {offsets = [138, 0], sizes = [1, 8], strides = [1, 1]} : vector<253x8xf32> to vector<1x8xf32>
    %c52_78 = arith.constant 52 : index
    %c0_79 = arith.constant 0 : index
    %128 = vector.load %arg30[%c52_78, %c0_79] : memref<100x8xf32, #tpu.memory_space<vmem>>, vector<1x8xf32>
    tpu.vector_store %arg30[%c52_78, %c0_79], %127 {strides = array<i32>} : memref<100x8xf32, #tpu.memory_space<vmem>>, vector<1x8xf32>,
    %129 = vector.extract_strided_slice %60 {offsets = [140, 0], sizes = [1, 8], strides = [1, 1]} : vector<253x8xf32> to vector<1x8xf32>
    %c53 = arith.constant 53 : index
    %c0_80 = arith.constant 0 : index
    %130 = vector.load %arg30[%c53, %c0_80] : memref<100x8xf32, #tpu.memory_space<vmem>>, vector<1x8xf32>
    tpu.vector_store %arg30[%c53, %c0_80], %129 {strides = array<i32>} : memref<100x8xf32, #tpu.memory_space<vmem>>, vector<1x8xf32>,
    %131 = vector.extract_strided_slice %60 {offsets = [142, 0], sizes = [1, 8], strides = [1, 1]} : vector<253x8xf32> to vector<1x8xf32>
    %c54 = arith.constant 54 : index
    %c0_81 = arith.constant 0 : index
    %132 = vector.load %arg30[%c54, %c0_81] : memref<100x8xf32, #tpu.memory_space<vmem>>, vector<1x8xf32>
    tpu.vector_store %arg30[%c54, %c0_81], %131 {strides = array<i32>} : memref<100x8xf32, #tpu.memory_space<vmem>>, vector<1x8xf32>,
    %133 = vector.extract_strided_slice %60 {offsets = [144, 0], sizes = [1, 8], strides = [1, 1]} : vector<253x8xf32> to vector<1x8xf32>
    %c55 = arith.constant 55 : index
    %c0_82 = arith.constant 0 : index
    %134 = vector.load %arg30[%c55, %c0_82] : memref<100x8xf32, #tpu.memory_space<vmem>>, vector<1x8xf32>
    tpu.vector_store %arg30[%c55, %c0_82], %133 {strides = array<i32>} : memref<100x8xf32, #tpu.memory_space<vmem>>, vector<1x8xf32>,
    %135 = vector.extract_strided_slice %60 {offsets = [146, 0], sizes = [1, 8], strides = [1, 1]} : vector<253x8xf32> to vector<1x8xf32>
    %c56 = arith.constant 56 : index
    %c0_83 = arith.constant 0 : index
    %136 = vector.load %arg30[%c56, %c0_83] : memref<100x8xf32, #tpu.memory_space<vmem>>, vector<1x8xf32>
    tpu.vector_store %arg30[%c56, %c0_83], %135 {strides = array<i32>} : memref<100x8xf32, #tpu.memory_space<vmem>>, vector<1x8xf32>,
    %137 = vector.extract_strided_slice %60 {offsets = [148, 0], sizes = [1, 8], strides = [1, 1]} : vector<253x8xf32> to vector<1x8xf32>
    %c57 = arith.constant 57 : index
    %c0_84 = arith.constant 0 : index
    %138 = vector.load %arg30[%c57, %c0_84] : memref<100x8xf32, #tpu.memory_space<vmem>>, vector<1x8xf32>
    tpu.vector_store %arg30[%c57, %c0_84], %137 {strides = array<i32>} : memref<100x8xf32, #tpu.memory_space<vmem>>, vector<1x8xf32>,
    %139 = vector.extract_strided_slice %60 {offsets = [150, 0], sizes = [1, 8], strides = [1, 1]} : vector<253x8xf32> to vector<1x8xf32>
    %c58 = arith.constant 58 : index
    %c0_85 = arith.constant 0 : index
    %140 = vector.load %arg30[%c58, %c0_85] : memref<100x8xf32, #tpu.memory_space<vmem>>, vector<1x8xf32>
    tpu.vector_store %arg30[%c58, %c0_85], %139 {strides = array<i32>} : memref<100x8xf32, #tpu.memory_space<vmem>>, vector<1x8xf32>,
    %141 = vector.extract_strided_slice %60 {offsets = [170, 0], sizes = [1, 8], strides = [1, 1]} : vector<253x8xf32> to vector<1x8xf32>
    %c61 = arith.constant 61 : index
    %c0_86 = arith.constant 0 : index
    %142 = vector.load %arg30[%c61, %c0_86] : memref<100x8xf32, #tpu.memory_space<vmem>>, vector<1x8xf32>
    tpu.vector_store %arg30[%c61, %c0_86], %141 {strides = array<i32>} : memref<100x8xf32, #tpu.memory_space<vmem>>, vector<1x8xf32>,
    %143 = vector.extract_strided_slice %60 {offsets = [172, 0], sizes = [1, 8], strides = [1, 1]} : vector<253x8xf32> to vector<1x8xf32>
    %c62 = arith.constant 62 : index
    %c0_87 = arith.constant 0 : index
    %144 = vector.load %arg30[%c62, %c0_87] : memref<100x8xf32, #tpu.memory_space<vmem>>, vector<1x8xf32>
    tpu.vector_store %arg30[%c62, %c0_87], %143 {strides = array<i32>} : memref<100x8xf32, #tpu.memory_space<vmem>>, vector<1x8xf32>,
    %145 = vector.extract_strided_slice %60 {offsets = [174, 0], sizes = [1, 8], strides = [1, 1]} : vector<253x8xf32> to vector<1x8xf32>
    %c63 = arith.constant 63 : index
    %c0_88 = arith.constant 0 : index
    %146 = vector.load %arg30[%c63, %c0_88] : memref<100x8xf32, #tpu.memory_space<vmem>>, vector<1x8xf32>
    tpu.vector_store %arg30[%c63, %c0_88], %145 {strides = array<i32>} : memref<100x8xf32, #tpu.memory_space<vmem>>, vector<1x8xf32>,
    %147 = vector.extract_strided_slice %60 {offsets = [176, 0], sizes = [1, 8], strides = [1, 1]} : vector<253x8xf32> to vector<1x8xf32>
    %c64 = arith.constant 64 : index
    %c0_89 = arith.constant 0 : index
    %148 = vector.load %arg30[%c64, %c0_89] : memref<100x8xf32, #tpu.memory_space<vmem>>, vector<1x8xf32>
    tpu.vector_store %arg30[%c64, %c0_89], %147 {strides = array<i32>} : memref<100x8xf32, #tpu.memory_space<vmem>>, vector<1x8xf32>,
    %149 = vector.extract_strided_slice %60 {offsets = [178, 0], sizes = [1, 8], strides = [1, 1]} : vector<253x8xf32> to vector<1x8xf32>
    %c65 = arith.constant 65 : index
    %c0_90 = arith.constant 0 : index
    %150 = vector.load %arg30[%c65, %c0_90] : memref<100x8xf32, #tpu.memory_space<vmem>>, vector<1x8xf32>
    tpu.vector_store %arg30[%c65, %c0_90], %149 {strides = array<i32>} : memref<100x8xf32, #tpu.memory_space<vmem>>, vector<1x8xf32>,
    %151 = vector.extract_strided_slice %60 {offsets = [180, 0], sizes = [1, 8], strides = [1, 1]} : vector<253x8xf32> to vector<1x8xf32>
    %c66 = arith.constant 66 : index
    %c0_91 = arith.constant 0 : index
    %152 = vector.load %arg30[%c66, %c0_91] : memref<100x8xf32, #tpu.memory_space<vmem>>, vector<1x8xf32>
    tpu.vector_store %arg30[%c66, %c0_91], %151 {strides = array<i32>} : memref<100x8xf32, #tpu.memory_space<vmem>>, vector<1x8xf32>,
    %153 = vector.extract_strided_slice %60 {offsets = [182, 0], sizes = [1, 8], strides = [1, 1]} : vector<253x8xf32> to vector<1x8xf32>
    %c67 = arith.constant 67 : index
    %c0_92 = arith.constant 0 : index
    %154 = vector.load %arg30[%c67, %c0_92] : memref<100x8xf32, #tpu.memory_space<vmem>>, vector<1x8xf32>
    tpu.vector_store %arg30[%c67, %c0_92], %153 {strides = array<i32>} : memref<100x8xf32, #tpu.memory_space<vmem>>, vector<1x8xf32>,
    %155 = vector.extract_strided_slice %60 {offsets = [184, 0], sizes = [1, 8], strides = [1, 1]} : vector<253x8xf32> to vector<1x8xf32>
    %c68 = arith.constant 68 : index
    %c0_93 = arith.constant 0 : index
    %156 = vector.load %arg30[%c68, %c0_93] : memref<100x8xf32, #tpu.memory_space<vmem>>, vector<1x8xf32>
    tpu.vector_store %arg30[%c68, %c0_93], %155 {strides = array<i32>} : memref<100x8xf32, #tpu.memory_space<vmem>>, vector<1x8xf32>,
    %157 = vector.extract_strided_slice %60 {offsets = [204, 0], sizes = [1, 8], strides = [1, 1]} : vector<253x8xf32> to vector<1x8xf32>
    %c71 = arith.constant 71 : index
    %c0_94 = arith.constant 0 : index
    %158 = vector.load %arg30[%c71, %c0_94] : memref<100x8xf32, #tpu.memory_space<vmem>>, vector<1x8xf32>
    tpu.vector_store %arg30[%c71, %c0_94], %157 {strides = array<i32>} : memref<100x8xf32, #tpu.memory_space<vmem>>, vector<1x8xf32>,
    %159 = vector.extract_strided_slice %60 {offsets = [206, 0], sizes = [1, 8], strides = [1, 1]} : vector<253x8xf32> to vector<1x8xf32>
    %c72 = arith.constant 72 : index
    %c0_95 = arith.constant 0 : index
    %160 = vector.load %arg30[%c72, %c0_95] : memref<100x8xf32, #tpu.memory_space<vmem>>, vector<1x8xf32>
    tpu.vector_store %arg30[%c72, %c0_95], %159 {strides = array<i32>} : memref<100x8xf32, #tpu.memory_space<vmem>>, vector<1x8xf32>,
    %161 = vector.extract_strided_slice %60 {offsets = [208, 0], sizes = [1, 8], strides = [1, 1]} : vector<253x8xf32> to vector<1x8xf32>
    %c73 = arith.constant 73 : index
    %c0_96 = arith.constant 0 : index
    %162 = vector.load %arg30[%c73, %c0_96] : memref<100x8xf32, #tpu.memory_space<vmem>>, vector<1x8xf32>
    tpu.vector_store %arg30[%c73, %c0_96], %161 {strides = array<i32>} : memref<100x8xf32, #tpu.memory_space<vmem>>, vector<1x8xf32>,
    %163 = vector.extract_strided_slice %60 {offsets = [210, 0], sizes = [1, 8], strides = [1, 1]} : vector<253x8xf32> to vector<1x8xf32>
    %c74 = arith.constant 74 : index
    %c0_97 = arith.constant 0 : index
    %164 = vector.load %arg30[%c74, %c0_97] : memref<100x8xf32, #tpu.memory_space<vmem>>, vector<1x8xf32>
    tpu.vector_store %arg30[%c74, %c0_97], %163 {strides = array<i32>} : memref<100x8xf32, #tpu.memory_space<vmem>>, vector<1x8xf32>,
    %165 = vector.extract_strided_slice %60 {offsets = [212, 0], sizes = [1, 8], strides = [1, 1]} : vector<253x8xf32> to vector<1x8xf32>
    %c75 = arith.constant 75 : index
    %c0_98 = arith.constant 0 : index
    %166 = vector.load %arg30[%c75, %c0_98] : memref<100x8xf32, #tpu.memory_space<vmem>>, vector<1x8xf32>
    tpu.vector_store %arg30[%c75, %c0_98], %165 {strides = array<i32>} : memref<100x8xf32, #tpu.memory_space<vmem>>, vector<1x8xf32>,
    %167 = vector.extract_strided_slice %60 {offsets = [214, 0], sizes = [1, 8], strides = [1, 1]} : vector<253x8xf32> to vector<1x8xf32>
    %c76 = arith.constant 76 : index
    %c0_99 = arith.constant 0 : index
    %168 = vector.load %arg30[%c76, %c0_99] : memref<100x8xf32, #tpu.memory_space<vmem>>, vector<1x8xf32>
    tpu.vector_store %arg30[%c76, %c0_99], %167 {strides = array<i32>} : memref<100x8xf32, #tpu.memory_space<vmem>>, vector<1x8xf32>,
    %169 = vector.extract_strided_slice %60 {offsets = [216, 0], sizes = [1, 8], strides = [1, 1]} : vector<253x8xf32> to vector<1x8xf32>
    %c77 = arith.constant 77 : index
    %c0_100 = arith.constant 0 : index
    %170 = vector.load %arg30[%c77, %c0_100] : memref<100x8xf32, #tpu.memory_space<vmem>>, vector<1x8xf32>
    tpu.vector_store %arg30[%c77, %c0_100], %169 {strides = array<i32>} : memref<100x8xf32, #tpu.memory_space<vmem>>, vector<1x8xf32>,
    %171 = vector.extract_strided_slice %60 {offsets = [218, 0], sizes = [1, 8], strides = [1, 1]} : vector<253x8xf32> to vector<1x8xf32>
    %c78 = arith.constant 78 : index
    %c0_101 = arith.constant 0 : index
    %172 = vector.load %arg30[%c78, %c0_101] : memref<100x8xf32, #tpu.memory_space<vmem>>, vector<1x8xf32>
    tpu.vector_store %arg30[%c78, %c0_101], %171 {strides = array<i32>} : memref<100x8xf32, #tpu.memory_space<vmem>>, vector<1x8xf32>,
    %173 = vector.extract_strided_slice %60 {offsets = [238, 0], sizes = [1, 8], strides = [1, 1]} : vector<253x8xf32> to vector<1x8xf32>
    %c81 = arith.constant 81 : index
    %c0_102 = arith.constant 0 : index
    %174 = vector.load %arg30[%c81, %c0_102] : memref<100x8xf32, #tpu.memory_space<vmem>>, vector<1x8xf32>
    tpu.vector_store %arg30[%c81, %c0_102], %173 {strides = array<i32>} : memref<100x8xf32, #tpu.memory_space<vmem>>, vector<1x8xf32>,
    %175 = vector.extract_strided_slice %60 {offsets = [240, 0], sizes = [1, 8], strides = [1, 1]} : vector<253x8xf32> to vector<1x8xf32>
    %c82 = arith.constant 82 : index
    %c0_103 = arith.constant 0 : index
    %176 = vector.load %arg30[%c82, %c0_103] : memref<100x8xf32, #tpu.memory_space<vmem>>, vector<1x8xf32>
    tpu.vector_store %arg30[%c82, %c0_103], %175 {strides = array<i32>} : memref<100x8xf32, #tpu.memory_space<vmem>>, vector<1x8xf32>,
    %177 = vector.extract_strided_slice %60 {offsets = [242, 0], sizes = [1, 8], strides = [1, 1]} : vector<253x8xf32> to vector<1x8xf32>
    %c83 = arith.constant 83 : index
    %c0_104 = arith.constant 0 : index
    %178 = vector.load %arg30[%c83, %c0_104] : memref<100x8xf32, #tpu.memory_space<vmem>>, vector<1x8xf32>
    tpu.vector_store %arg30[%c83, %c0_104], %177 {strides = array<i32>} : memref<100x8xf32, #tpu.memory_space<vmem>>, vector<1x8xf32>,
    %179 = vector.extract_strided_slice %60 {offsets = [244, 0], sizes = [1, 8], strides = [1, 1]} : vector<253x8xf32> to vector<1x8xf32>
    %c84 = arith.constant 84 : index
    %c0_105 = arith.constant 0 : index
    %180 = vector.load %arg30[%c84, %c0_105] : memref<100x8xf32, #tpu.memory_space<vmem>>, vector<1x8xf32>
    tpu.vector_store %arg30[%c84, %c0_105], %179 {strides = array<i32>} : memref<100x8xf32, #tpu.memory_space<vmem>>, vector<1x8xf32>,
    %181 = vector.extract_strided_slice %60 {offsets = [246, 0], sizes = [1, 8], strides = [1, 1]} : vector<253x8xf32> to vector<1x8xf32>
    %c85 = arith.constant 85 : index
    %c0_106 = arith.constant 0 : index
    %182 = vector.load %arg30[%c85, %c0_106] : memref<100x8xf32, #tpu.memory_space<vmem>>, vector<1x8xf32>
    tpu.vector_store %arg30[%c85, %c0_106], %181 {strides = array<i32>} : memref<100x8xf32, #tpu.memory_space<vmem>>, vector<1x8xf32>,
    %183 = vector.extract_strided_slice %60 {offsets = [248, 0], sizes = [1, 8], strides = [1, 1]} : vector<253x8xf32> to vector<1x8xf32>
    %c86_107 = arith.constant 86 : index
    %c0_108 = arith.constant 0 : index
    %184 = vector.load %arg30[%c86_107, %c0_108] : memref<100x8xf32, #tpu.memory_space<vmem>>, vector<1x8xf32>
    tpu.vector_store %arg30[%c86_107, %c0_108], %183 {strides = array<i32>} : memref<100x8xf32, #tpu.memory_space<vmem>>, vector<1x8xf32>,
    %185 = vector.extract_strided_slice %60 {offsets = [250, 0], sizes = [1, 8], strides = [1, 1]} : vector<253x8xf32> to vector<1x8xf32>
    %c87 = arith.constant 87 : index
    %c0_109 = arith.constant 0 : index
    %186 = vector.load %arg30[%c87, %c0_109] : memref<100x8xf32, #tpu.memory_space<vmem>>, vector<1x8xf32>
    tpu.vector_store %arg30[%c87, %c0_109], %185 {strides = array<i32>} : memref<100x8xf32, #tpu.memory_space<vmem>>, vector<1x8xf32>,
    %187 = vector.extract_strided_slice %60 {offsets = [252, 0], sizes = [1, 8], strides = [1, 1]} : vector<253x8xf32> to vector<1x8xf32>
    %c88 = arith.constant 88 : index
    %c0_110 = arith.constant 0 : index
    %188 = vector.load %arg30[%c88, %c0_110] : memref<100x8xf32, #tpu.memory_space<vmem>>, vector<1x8xf32>
    tpu.vector_store %arg30[%c88, %c0_110], %187 {strides = array<i32>} : memref<100x8xf32, #tpu.memory_space<vmem>>, vector<1x8xf32>,
    %c0_111 = arith.constant 0 : index
    %c0_112 = arith.constant 0 : index
    %189 = vector.load %arg30[%c0_111, %c0_112] : memref<100x8xf32, #tpu.memory_space<vmem>>, vector<78x8xf32>
    %c1_113 = arith.constant 1 : index
    %c0_114 = arith.constant 0 : index
    %190 = vector.load %arg30[%c1_113, %c0_114] : memref<100x8xf32, #tpu.memory_space<vmem>>, vector<78x8xf32>
    %c2_115 = arith.constant 2 : index
    %c0_116 = arith.constant 0 : index
    %191 = vector.load %arg30[%c2_115, %c0_116] : memref<100x8xf32, #tpu.memory_space<vmem>>, vector<78x8xf32>
    %c10 = arith.constant 10 : index
    %c0_117 = arith.constant 0 : index
    %192 = vector.load %arg30[%c10, %c0_117] : memref<100x8xf32, #tpu.memory_space<vmem>>, vector<78x8xf32>
    %c11_118 = arith.constant 11 : index
    %c0_119 = arith.constant 0 : index
    %193 = vector.load %arg30[%c11_118, %c0_119] : memref<100x8xf32, #tpu.memory_space<vmem>>, vector<78x8xf32>
    %c12_120 = arith.constant 12 : index
    %c0_121 = arith.constant 0 : index
    %194 = vector.load %arg30[%c12_120, %c0_121] : memref<100x8xf32, #tpu.memory_space<vmem>>, vector<78x8xf32>
    %c20 = arith.constant 20 : index
    %c0_122 = arith.constant 0 : index
    %195 = vector.load %arg30[%c20, %c0_122] : memref<100x8xf32, #tpu.memory_space<vmem>>, vector<78x8xf32>
    %c21_123 = arith.constant 21 : index
    %c0_124 = arith.constant 0 : index
    %196 = vector.load %arg30[%c21_123, %c0_124] : memref<100x8xf32, #tpu.memory_space<vmem>>, vector<78x8xf32>
    %c22_125 = arith.constant 22 : index
    %c0_126 = arith.constant 0 : index
    %197 = vector.load %arg30[%c22_125, %c0_126] : memref<100x8xf32, #tpu.memory_space<vmem>>, vector<78x8xf32>
    %198 = tpu.concatenate %189, %190, %191, %192, %193, %194, %195, %196, %197 in 1 : vector<78x8xf32>, vector<78x8xf32>, vector<78x8xf32>, vector<78x8xf32>, vector<78x8xf32>, vector<78x8xf32>, vector<78x8xf32>, vector<78x8xf32>, vector<78x8xf32> -> vector<78x72xf32>
    %199 = arith.truncf %198 : vector<78x72xf32> to vector<78x72xbf16>
    %c0_127 = arith.constant 0 : index
    %c0_128 = arith.constant 0 : index
    %200 = vector.load %arg4[%c0_127, %c0_128] : memref<72x8xbf16, #tpu.memory_space<vmem>>, vector<72x8xbf16>
    %cst_129 = arith.constant dense<0.000000e+00> : vector<78x8xf32>
    %201 = tpu.matmul %199, %200, %cst_129 {dimension_numbers = #tpu.dot_dimension_numbers<[1], [0], [0], [1], [0, 0, 1, 1], [], []>} : vector<78x72xbf16>, vector<72x8xbf16>, vector<78x8xf32> -> vector<78x8xf32>
    %c0_130 = arith.constant 0 : index
    %c0_131 = arith.constant 0 : index
    %202 = vector.load %arg5[%c0_130, %c0_131] : memref<1x8xf32, #tpu.memory_space<vmem>>, vector<1x8xf32>
    %203 = vector.broadcast %202 : vector<1x8xf32> to vector<78x8xf32>
    %204 = arith.addf %201, %203 : vector<78x8xf32>
    %cst_132 = arith.constant 0.000000e+00 : f32
    %205 = vector.broadcast %cst_132 : f32 to vector<100x8xf32>
    %c0_133 = arith.constant 0 : index
    %c0_134 = arith.constant 0 : index
    %206 = vector.load %arg31[%c0_133, %c0_134] : memref<100x8xf32, #tpu.memory_space<vmem>>, vector<100x8xf32>
    tpu.vector_store %arg31[%c0_133, %c0_134], %205 {strides = array<i32>} : memref<100x8xf32, #tpu.memory_space<vmem>>, vector<100x8xf32>,
    %207 = vector.extract_strided_slice %204 {offsets = [0, 0], sizes = [8, 8], strides = [1, 1]} : vector<78x8xf32> to vector<8x8xf32>
    %cst_135 = arith.constant 0.000000e+00 : f32
    %208 = vector.broadcast %cst_135 : f32 to vector<8x8xf32>
    %209 = arith.maximumf %207, %208 : vector<8x8xf32>
    %c11_136 = arith.constant 11 : index
    %c0_137 = arith.constant 0 : index
    %210 = vector.load %arg31[%c11_136, %c0_137] : memref<100x8xf32, #tpu.memory_space<vmem>>, vector<8x8xf32>
    tpu.vector_store %arg31[%c11_136, %c0_137], %209 {strides = array<i32>} : memref<100x8xf32, #tpu.memory_space<vmem>>, vector<8x8xf32>,
    %211 = vector.extract_strided_slice %204 {offsets = [10, 0], sizes = [8, 8], strides = [1, 1]} : vector<78x8xf32> to vector<8x8xf32>
    %cst_138 = arith.constant 0.000000e+00 : f32
    %212 = vector.broadcast %cst_138 : f32 to vector<8x8xf32>
    %213 = arith.maximumf %211, %212 : vector<8x8xf32>
    %c21_139 = arith.constant 21 : index
    %c0_140 = arith.constant 0 : index
    %214 = vector.load %arg31[%c21_139, %c0_140] : memref<100x8xf32, #tpu.memory_space<vmem>>, vector<8x8xf32>
    tpu.vector_store %arg31[%c21_139, %c0_140], %213 {strides = array<i32>} : memref<100x8xf32, #tpu.memory_space<vmem>>, vector<8x8xf32>,
    %215 = vector.extract_strided_slice %204 {offsets = [20, 0], sizes = [8, 8], strides = [1, 1]} : vector<78x8xf32> to vector<8x8xf32>
    %cst_141 = arith.constant 0.000000e+00 : f32
    %216 = vector.broadcast %cst_141 : f32 to vector<8x8xf32>
    %217 = arith.maximumf %215, %216 : vector<8x8xf32>
    %c31_142 = arith.constant 31 : index
    %c0_143 = arith.constant 0 : index
    %218 = vector.load %arg31[%c31_142, %c0_143] : memref<100x8xf32, #tpu.memory_space<vmem>>, vector<8x8xf32>
    tpu.vector_store %arg31[%c31_142, %c0_143], %217 {strides = array<i32>} : memref<100x8xf32, #tpu.memory_space<vmem>>, vector<8x8xf32>,
    %219 = vector.extract_strided_slice %204 {offsets = [30, 0], sizes = [8, 8], strides = [1, 1]} : vector<78x8xf32> to vector<8x8xf32>
    %cst_144 = arith.constant 0.000000e+00 : f32
    %220 = vector.broadcast %cst_144 : f32 to vector<8x8xf32>
    %221 = arith.maximumf %219, %220 : vector<8x8xf32>
    %c41_145 = arith.constant 41 : index
    %c0_146 = arith.constant 0 : index
    %222 = vector.load %arg31[%c41_145, %c0_146] : memref<100x8xf32, #tpu.memory_space<vmem>>, vector<8x8xf32>
    tpu.vector_store %arg31[%c41_145, %c0_146], %221 {strides = array<i32>} : memref<100x8xf32, #tpu.memory_space<vmem>>, vector<8x8xf32>,
    %223 = vector.extract_strided_slice %204 {offsets = [40, 0], sizes = [8, 8], strides = [1, 1]} : vector<78x8xf32> to vector<8x8xf32>
    %cst_147 = arith.constant 0.000000e+00 : f32
    %224 = vector.broadcast %cst_147 : f32 to vector<8x8xf32>
    %225 = arith.maximumf %223, %224 : vector<8x8xf32>
    %c51_148 = arith.constant 51 : index
    %c0_149 = arith.constant 0 : index
    %226 = vector.load %arg31[%c51_148, %c0_149] : memref<100x8xf32, #tpu.memory_space<vmem>>, vector<8x8xf32>
    tpu.vector_store %arg31[%c51_148, %c0_149], %225 {strides = array<i32>} : memref<100x8xf32, #tpu.memory_space<vmem>>, vector<8x8xf32>,
    %227 = vector.extract_strided_slice %204 {offsets = [50, 0], sizes = [8, 8], strides = [1, 1]} : vector<78x8xf32> to vector<8x8xf32>
    %cst_150 = arith.constant 0.000000e+00 : f32
    %228 = vector.broadcast %cst_150 : f32 to vector<8x8xf32>
    %229 = arith.maximumf %227, %228 : vector<8x8xf32>
    %c61_151 = arith.constant 61 : index
    %c0_152 = arith.constant 0 : index
    %230 = vector.load %arg31[%c61_151, %c0_152] : memref<100x8xf32, #tpu.memory_space<vmem>>, vector<8x8xf32>
    tpu.vector_store %arg31[%c61_151, %c0_152], %229 {strides = array<i32>} : memref<100x8xf32, #tpu.memory_space<vmem>>, vector<8x8xf32>,
    %231 = vector.extract_strided_slice %204 {offsets = [60, 0], sizes = [8, 8], strides = [1, 1]} : vector<78x8xf32> to vector<8x8xf32>
    %cst_153 = arith.constant 0.000000e+00 : f32
    %232 = vector.broadcast %cst_153 : f32 to vector<8x8xf32>
    %233 = arith.maximumf %231, %232 : vector<8x8xf32>
    %c71_154 = arith.constant 71 : index
    %c0_155 = arith.constant 0 : index
    %234 = vector.load %arg31[%c71_154, %c0_155] : memref<100x8xf32, #tpu.memory_space<vmem>>, vector<8x8xf32>
    tpu.vector_store %arg31[%c71_154, %c0_155], %233 {strides = array<i32>} : memref<100x8xf32, #tpu.memory_space<vmem>>, vector<8x8xf32>,
    %235 = vector.extract_strided_slice %204 {offsets = [70, 0], sizes = [8, 8], strides = [1, 1]} : vector<78x8xf32> to vector<8x8xf32>
    %cst_156 = arith.constant 0.000000e+00 : f32
    %236 = vector.broadcast %cst_156 : f32 to vector<8x8xf32>
    %237 = arith.maximumf %235, %236 : vector<8x8xf32>
    %c81_157 = arith.constant 81 : index
    %c0_158 = arith.constant 0 : index
    %238 = vector.load %arg31[%c81_157, %c0_158] : memref<100x8xf32, #tpu.memory_space<vmem>>, vector<8x8xf32>
    tpu.vector_store %arg31[%c81_157, %c0_158], %237 {strides = array<i32>} : memref<100x8xf32, #tpu.memory_space<vmem>>, vector<8x8xf32>,
    %c0_159 = arith.constant 0 : index
    %c0_160 = arith.constant 0 : index
    %239 = vector.load %arg31[%c0_159, %c0_160] : memref<100x8xf32, #tpu.memory_space<vmem>>, vector<78x8xf32>
    %c1_161 = arith.constant 1 : index
    %c0_162 = arith.constant 0 : index
    %240 = vector.load %arg31[%c1_161, %c0_162] : memref<100x8xf32, #tpu.memory_space<vmem>>, vector<78x8xf32>
    %c2_163 = arith.constant 2 : index
    %c0_164 = arith.constant 0 : index
    %241 = vector.load %arg31[%c2_163, %c0_164] : memref<100x8xf32, #tpu.memory_space<vmem>>, vector<78x8xf32>
    %c10_165 = arith.constant 10 : index
    %c0_166 = arith.constant 0 : index
    %242 = vector.load %arg31[%c10_165, %c0_166] : memref<100x8xf32, #tpu.memory_space<vmem>>, vector<78x8xf32>
    %c11_167 = arith.constant 11 : index
    %c0_168 = arith.constant 0 : index
    %243 = vector.load %arg31[%c11_167, %c0_168] : memref<100x8xf32, #tpu.memory_space<vmem>>, vector<78x8xf32>
    %c12_169 = arith.constant 12 : index
    %c0_170 = arith.constant 0 : index
    %244 = vector.load %arg31[%c12_169, %c0_170] : memref<100x8xf32, #tpu.memory_space<vmem>>, vector<78x8xf32>
    %c20_171 = arith.constant 20 : index
    %c0_172 = arith.constant 0 : index
    %245 = vector.load %arg31[%c20_171, %c0_172] : memref<100x8xf32, #tpu.memory_space<vmem>>, vector<78x8xf32>
    %c21_173 = arith.constant 21 : index
    %c0_174 = arith.constant 0 : index
    %246 = vector.load %arg31[%c21_173, %c0_174] : memref<100x8xf32, #tpu.memory_space<vmem>>, vector<78x8xf32>
    %c22_175 = arith.constant 22 : index
    %c0_176 = arith.constant 0 : index
    %247 = vector.load %arg31[%c22_175, %c0_176] : memref<100x8xf32, #tpu.memory_space<vmem>>, vector<78x8xf32>
    %248 = tpu.concatenate %239, %240, %241, %242, %243, %244, %245, %246, %247 in 1 : vector<78x8xf32>, vector<78x8xf32>, vector<78x8xf32>, vector<78x8xf32>, vector<78x8xf32>, vector<78x8xf32>, vector<78x8xf32>, vector<78x8xf32>, vector<78x8xf32> -> vector<78x72xf32>
    %249 = arith.truncf %248 : vector<78x72xf32> to vector<78x72xbf16>
    %c0_177 = arith.constant 0 : index
    %c0_178 = arith.constant 0 : index
    %250 = vector.load %arg6[%c0_177, %c0_178] : memref<72x8xbf16, #tpu.memory_space<vmem>>, vector<72x8xbf16>
    %cst_179 = arith.constant dense<0.000000e+00> : vector<78x8xf32>
    %251 = tpu.matmul %249, %250, %cst_179 {dimension_numbers = #tpu.dot_dimension_numbers<[1], [0], [0], [1], [0, 0, 1, 1], [], []>} : vector<78x72xbf16>, vector<72x8xbf16>, vector<78x8xf32> -> vector<78x8xf32>
    %c0_180 = arith.constant 0 : index
    %c0_181 = arith.constant 0 : index
    %252 = vector.load %arg7[%c0_180, %c0_181] : memref<1x8xf32, #tpu.memory_space<vmem>>, vector<1x8xf32>
    %253 = vector.broadcast %252 : vector<1x8xf32> to vector<78x8xf32>
    %254 = arith.addf %251, %253 : vector<78x8xf32>
    %c11_182 = arith.constant 11 : index
    %c0_183 = arith.constant 0 : index
    %255 = vector.load %arg30[%c11_182, %c0_183] : memref<100x8xf32, #tpu.memory_space<vmem>>, vector<8x8xf32>
    %256 = vector.extract_strided_slice %254 {offsets = [0, 0], sizes = [8, 8], strides = [1, 1]} : vector<78x8xf32> to vector<8x8xf32>
    %257 = arith.addf %256, %255 : vector<8x8xf32>
    %cst_184 = arith.constant 0.000000e+00 : f32
    %258 = vector.broadcast %cst_184 : f32 to vector<8x8xf32>
    %259 = arith.maximumf %257, %258 : vector<8x8xf32>
    %c0_185 = arith.constant 0 : index
    %c0_186 = arith.constant 0 : index
    %260 = vector.load %arg32[%c0_185, %c0_186] : memref<64x8xf32, #tpu.memory_space<vmem>>, vector<8x8xf32>
    tpu.vector_store %arg32[%c0_185, %c0_186], %259 {strides = array<i32>} : memref<64x8xf32, #tpu.memory_space<vmem>>, vector<8x8xf32>,
    %c21_187 = arith.constant 21 : index
    %c0_188 = arith.constant 0 : index
    %261 = vector.load %arg30[%c21_187, %c0_188] : memref<100x8xf32, #tpu.memory_space<vmem>>, vector<8x8xf32>
    %262 = vector.extract_strided_slice %254 {offsets = [10, 0], sizes = [8, 8], strides = [1, 1]} : vector<78x8xf32> to vector<8x8xf32>
    %263 = arith.addf %262, %261 : vector<8x8xf32>
    %cst_189 = arith.constant 0.000000e+00 : f32
    %264 = vector.broadcast %cst_189 : f32 to vector<8x8xf32>
    %265 = arith.maximumf %263, %264 : vector<8x8xf32>
    %c8 = arith.constant 8 : index
    %c0_190 = arith.constant 0 : index
    %266 = vector.load %arg32[%c8, %c0_190] : memref<64x8xf32, #tpu.memory_space<vmem>>, vector<8x8xf32>
    tpu.vector_store %arg32[%c8, %c0_190], %265 {strides = array<i32>} : memref<64x8xf32, #tpu.memory_space<vmem>>, vector<8x8xf32>,
    %c31_191 = arith.constant 31 : index
    %c0_192 = arith.constant 0 : index
    %267 = vector.load %arg30[%c31_191, %c0_192] : memref<100x8xf32, #tpu.memory_space<vmem>>, vector<8x8xf32>
    %268 = vector.extract_strided_slice %254 {offsets = [20, 0], sizes = [8, 8], strides = [1, 1]} : vector<78x8xf32> to vector<8x8xf32>
    %269 = arith.addf %268, %267 : vector<8x8xf32>
    %cst_193 = arith.constant 0.000000e+00 : f32
    %270 = vector.broadcast %cst_193 : f32 to vector<8x8xf32>
    %271 = arith.maximumf %269, %270 : vector<8x8xf32>
    %c16_194 = arith.constant 16 : index
    %c0_195 = arith.constant 0 : index
    %272 = vector.load %arg32[%c16_194, %c0_195] : memref<64x8xf32, #tpu.memory_space<vmem>>, vector<8x8xf32>
    tpu.vector_store %arg32[%c16_194, %c0_195], %271 {strides = array<i32>} : memref<64x8xf32, #tpu.memory_space<vmem>>, vector<8x8xf32>,
    %c41_196 = arith.constant 41 : index
    %c0_197 = arith.constant 0 : index
    %273 = vector.load %arg30[%c41_196, %c0_197] : memref<100x8xf32, #tpu.memory_space<vmem>>, vector<8x8xf32>
    %274 = vector.extract_strided_slice %254 {offsets = [30, 0], sizes = [8, 8], strides = [1, 1]} : vector<78x8xf32> to vector<8x8xf32>
    %275 = arith.addf %274, %273 : vector<8x8xf32>
    %cst_198 = arith.constant 0.000000e+00 : f32
    %276 = vector.broadcast %cst_198 : f32 to vector<8x8xf32>
    %277 = arith.maximumf %275, %276 : vector<8x8xf32>
    %c24_199 = arith.constant 24 : index
    %c0_200 = arith.constant 0 : index
    %278 = vector.load %arg32[%c24_199, %c0_200] : memref<64x8xf32, #tpu.memory_space<vmem>>, vector<8x8xf32>
    tpu.vector_store %arg32[%c24_199, %c0_200], %277 {strides = array<i32>} : memref<64x8xf32, #tpu.memory_space<vmem>>, vector<8x8xf32>,
    %c51_201 = arith.constant 51 : index
    %c0_202 = arith.constant 0 : index
    %279 = vector.load %arg30[%c51_201, %c0_202] : memref<100x8xf32, #tpu.memory_space<vmem>>, vector<8x8xf32>
    %280 = vector.extract_strided_slice %254 {offsets = [40, 0], sizes = [8, 8], strides = [1, 1]} : vector<78x8xf32> to vector<8x8xf32>
    %281 = arith.addf %280, %279 : vector<8x8xf32>
    %cst_203 = arith.constant 0.000000e+00 : f32
    %282 = vector.broadcast %cst_203 : f32 to vector<8x8xf32>
    %283 = arith.maximumf %281, %282 : vector<8x8xf32>
    %c32_204 = arith.constant 32 : index
    %c0_205 = arith.constant 0 : index
    %284 = vector.load %arg32[%c32_204, %c0_205] : memref<64x8xf32, #tpu.memory_space<vmem>>, vector<8x8xf32>
    tpu.vector_store %arg32[%c32_204, %c0_205], %283 {strides = array<i32>} : memref<64x8xf32, #tpu.memory_space<vmem>>, vector<8x8xf32>,
    %c61_206 = arith.constant 61 : index
    %c0_207 = arith.constant 0 : index
    %285 = vector.load %arg30[%c61_206, %c0_207] : memref<100x8xf32, #tpu.memory_space<vmem>>, vector<8x8xf32>
    %286 = vector.extract_strided_slice %254 {offsets = [50, 0], sizes = [8, 8], strides = [1, 1]} : vector<78x8xf32> to vector<8x8xf32>
    %287 = arith.addf %286, %285 : vector<8x8xf32>
    %cst_208 = arith.constant 0.000000e+00 : f32
    %288 = vector.broadcast %cst_208 : f32 to vector<8x8xf32>
    %289 = arith.maximumf %287, %288 : vector<8x8xf32>
    %c40 = arith.constant 40 : index
    %c0_209 = arith.constant 0 : index
    %290 = vector.load %arg32[%c40, %c0_209] : memref<64x8xf32, #tpu.memory_space<vmem>>, vector<8x8xf32>
    tpu.vector_store %arg32[%c40, %c0_209], %289 {strides = array<i32>} : memref<64x8xf32, #tpu.memory_space<vmem>>, vector<8x8xf32>,
    %c71_210 = arith.constant 71 : index
    %c0_211 = arith.constant 0 : index
    %291 = vector.load %arg30[%c71_210, %c0_211] : memref<100x8xf32, #tpu.memory_space<vmem>>, vector<8x8xf32>
    %292 = vector.extract_strided_slice %254 {offsets = [60, 0], sizes = [8, 8], strides = [1, 1]} : vector<78x8xf32> to vector<8x8xf32>
    %293 = arith.addf %292, %291 : vector<8x8xf32>
    %cst_212 = arith.constant 0.000000e+00 : f32
    %294 = vector.broadcast %cst_212 : f32 to vector<8x8xf32>
    %295 = arith.maximumf %293, %294 : vector<8x8xf32>
    %c48_213 = arith.constant 48 : index
    %c0_214 = arith.constant 0 : index
    %296 = vector.load %arg32[%c48_213, %c0_214] : memref<64x8xf32, #tpu.memory_space<vmem>>, vector<8x8xf32>
    tpu.vector_store %arg32[%c48_213, %c0_214], %295 {strides = array<i32>} : memref<64x8xf32, #tpu.memory_space<vmem>>, vector<8x8xf32>,
    %c81_215 = arith.constant 81 : index
    %c0_216 = arith.constant 0 : index
    %297 = vector.load %arg30[%c81_215, %c0_216] : memref<100x8xf32, #tpu.memory_space<vmem>>, vector<8x8xf32>
    %298 = vector.extract_strided_slice %254 {offsets = [70, 0], sizes = [8, 8], strides = [1, 1]} : vector<78x8xf32> to vector<8x8xf32>
    %299 = arith.addf %298, %297 : vector<8x8xf32>
    %cst_217 = arith.constant 0.000000e+00 : f32
    %300 = vector.broadcast %cst_217 : f32 to vector<8x8xf32>
    %301 = arith.maximumf %299, %300 : vector<8x8xf32>
    %c56_218 = arith.constant 56 : index
    %c0_219 = arith.constant 0 : index
    %302 = vector.load %arg32[%c56_218, %c0_219] : memref<64x8xf32, #tpu.memory_space<vmem>>, vector<8x8xf32>
    tpu.vector_store %arg32[%c56_218, %c0_219], %301 {strides = array<i32>} : memref<64x8xf32, #tpu.memory_space<vmem>>, vector<8x8xf32>,
    %c0_220 = arith.constant 0 : index
    %c0_221 = arith.constant 0 : index
    %303 = vector.load %arg32[%c0_220, %c0_221] : memref<64x8xf32, #tpu.memory_space<vmem>>, vector<55x8xf32>
    %c1_222 = arith.constant 1 : index
    %c0_223 = arith.constant 0 : index
    %304 = vector.load %arg32[%c1_222, %c0_223] : memref<64x8xf32, #tpu.memory_space<vmem>>, vector<55x8xf32>
    %305 = arith.minimumf %303, %304 : vector<55x8xf32>
    %c8_224 = arith.constant 8 : index
    %c0_225 = arith.constant 0 : index
    %306 = vector.load %arg32[%c8_224, %c0_225] : memref<64x8xf32, #tpu.memory_space<vmem>>, vector<55x8xf32>
    %307 = arith.minimumf %305, %306 : vector<55x8xf32>
    %c9 = arith.constant 9 : index
    %c0_226 = arith.constant 0 : index
    %308 = vector.load %arg32[%c9, %c0_226] : memref<64x8xf32, #tpu.memory_space<vmem>>, vector<55x8xf32>
    %309 = arith.minimumf %307, %308 : vector<55x8xf32>
    %310 = vector.extract_strided_slice %309 {offsets = [0, 0], sizes = [1, 8], strides = [1, 1]} : vector<55x8xf32> to vector<1x8xf32>
    %c0_227 = arith.constant 0 : index
    %c0_228 = arith.constant 0 : index
    %311 = vector.load %arg33[%c0_227, %c0_228] : memref<16x8xf32, #tpu.memory_space<vmem>>, vector<1x8xf32>
    tpu.vector_store %arg33[%c0_227, %c0_228], %310 {strides = array<i32>} : memref<16x8xf32, #tpu.memory_space<vmem>>, vector<1x8xf32>,
    %312 = vector.extract_strided_slice %309 {offsets = [2, 0], sizes = [1, 8], strides = [1, 1]} : vector<55x8xf32> to vector<1x8xf32>
    %c1_229 = arith.constant 1 : index
    %c0_230 = arith.constant 0 : index
    %313 = vector.load %arg33[%c1_229, %c0_230] : memref<16x8xf32, #tpu.memory_space<vmem>>, vector<1x8xf32>
    tpu.vector_store %arg33[%c1_229, %c0_230], %312 {strides = array<i32>} : memref<16x8xf32, #tpu.memory_space<vmem>>, vector<1x8xf32>,
    %314 = vector.extract_strided_slice %309 {offsets = [4, 0], sizes = [1, 8], strides = [1, 1]} : vector<55x8xf32> to vector<1x8xf32>
    %c2_231 = arith.constant 2 : index
    %c0_232 = arith.constant 0 : index
    %315 = vector.load %arg33[%c2_231, %c0_232] : memref<16x8xf32, #tpu.memory_space<vmem>>, vector<1x8xf32>
    tpu.vector_store %arg33[%c2_231, %c0_232], %314 {strides = array<i32>} : memref<16x8xf32, #tpu.memory_space<vmem>>, vector<1x8xf32>,
    %316 = vector.extract_strided_slice %309 {offsets = [6, 0], sizes = [1, 8], strides = [1, 1]} : vector<55x8xf32> to vector<1x8xf32>
    %c3 = arith.constant 3 : index
    %c0_233 = arith.constant 0 : index
    %317 = vector.load %arg33[%c3, %c0_233] : memref<16x8xf32, #tpu.memory_space<vmem>>, vector<1x8xf32>
    tpu.vector_store %arg33[%c3, %c0_233], %316 {strides = array<i32>} : memref<16x8xf32, #tpu.memory_space<vmem>>, vector<1x8xf32>,
    %318 = vector.extract_strided_slice %309 {offsets = [16, 0], sizes = [1, 8], strides = [1, 1]} : vector<55x8xf32> to vector<1x8xf32>
    %c4 = arith.constant 4 : index
    %c0_234 = arith.constant 0 : index
    %319 = vector.load %arg33[%c4, %c0_234] : memref<16x8xf32, #tpu.memory_space<vmem>>, vector<1x8xf32>
    tpu.vector_store %arg33[%c4, %c0_234], %318 {strides = array<i32>} : memref<16x8xf32, #tpu.memory_space<vmem>>, vector<1x8xf32>,
    %320 = vector.extract_strided_slice %309 {offsets = [18, 0], sizes = [1, 8], strides = [1, 1]} : vector<55x8xf32> to vector<1x8xf32>
    %c5 = arith.constant 5 : index
    %c0_235 = arith.constant 0 : index
    %321 = vector.load %arg33[%c5, %c0_235] : memref<16x8xf32, #tpu.memory_space<vmem>>, vector<1x8xf32>
    tpu.vector_store %arg33[%c5, %c0_235], %320 {strides = array<i32>} : memref<16x8xf32, #tpu.memory_space<vmem>>, vector<1x8xf32>,
    %322 = vector.extract_strided_slice %309 {offsets = [20, 0], sizes = [1, 8], strides = [1, 1]} : vector<55x8xf32> to vector<1x8xf32>
    %c6 = arith.constant 6 : index
    %c0_236 = arith.constant 0 : index
    %323 = vector.load %arg33[%c6, %c0_236] : memref<16x8xf32, #tpu.memory_space<vmem>>, vector<1x8xf32>
    tpu.vector_store %arg33[%c6, %c0_236], %322 {strides = array<i32>} : memref<16x8xf32, #tpu.memory_space<vmem>>, vector<1x8xf32>,
    %324 = vector.extract_strided_slice %309 {offsets = [22, 0], sizes = [1, 8], strides = [1, 1]} : vector<55x8xf32> to vector<1x8xf32>
    %c7 = arith.constant 7 : index
    %c0_237 = arith.constant 0 : index
    %325 = vector.load %arg33[%c7, %c0_237] : memref<16x8xf32, #tpu.memory_space<vmem>>, vector<1x8xf32>
    tpu.vector_store %arg33[%c7, %c0_237], %324 {strides = array<i32>} : memref<16x8xf32, #tpu.memory_space<vmem>>, vector<1x8xf32>,
    %326 = vector.extract_strided_slice %309 {offsets = [32, 0], sizes = [1, 8], strides = [1, 1]} : vector<55x8xf32> to vector<1x8xf32>
    %c8_238 = arith.constant 8 : index
    %c0_239 = arith.constant 0 : index
    %327 = vector.load %arg33[%c8_238, %c0_239] : memref<16x8xf32, #tpu.memory_space<vmem>>, vector<1x8xf32>
    tpu.vector_store %arg33[%c8_238, %c0_239], %326 {strides = array<i32>} : memref<16x8xf32, #tpu.memory_space<vmem>>, vector<1x8xf32>,
    %328 = vector.extract_strided_slice %309 {offsets = [34, 0], sizes = [1, 8], strides = [1, 1]} : vector<55x8xf32> to vector<1x8xf32>
    %c9_240 = arith.constant 9 : index
    %c0_241 = arith.constant 0 : index
    %329 = vector.load %arg33[%c9_240, %c0_241] : memref<16x8xf32, #tpu.memory_space<vmem>>, vector<1x8xf32>
    tpu.vector_store %arg33[%c9_240, %c0_241], %328 {strides = array<i32>} : memref<16x8xf32, #tpu.memory_space<vmem>>, vector<1x8xf32>,
    %330 = vector.extract_strided_slice %309 {offsets = [36, 0], sizes = [1, 8], strides = [1, 1]} : vector<55x8xf32> to vector<1x8xf32>
    %c10_242 = arith.constant 10 : index
    %c0_243 = arith.constant 0 : index
    %331 = vector.load %arg33[%c10_242, %c0_243] : memref<16x8xf32, #tpu.memory_space<vmem>>, vector<1x8xf32>
    tpu.vector_store %arg33[%c10_242, %c0_243], %330 {strides = array<i32>} : memref<16x8xf32, #tpu.memory_space<vmem>>, vector<1x8xf32>,
    %332 = vector.extract_strided_slice %309 {offsets = [38, 0], sizes = [1, 8], strides = [1, 1]} : vector<55x8xf32> to vector<1x8xf32>
    %c11_244 = arith.constant 11 : index
    %c0_245 = arith.constant 0 : index
    %333 = vector.load %arg33[%c11_244, %c0_245] : memref<16x8xf32, #tpu.memory_space<vmem>>, vector<1x8xf32>
    tpu.vector_store %arg33[%c11_244, %c0_245], %332 {strides = array<i32>} : memref<16x8xf32, #tpu.memory_space<vmem>>, vector<1x8xf32>,
    %334 = vector.extract_strided_slice %309 {offsets = [48, 0], sizes = [1, 8], strides = [1, 1]} : vector<55x8xf32> to vector<1x8xf32>
    %c12_246 = arith.constant 12 : index
    %c0_247 = arith.constant 0 : index
    %335 = vector.load %arg33[%c12_246, %c0_247] : memref<16x8xf32, #tpu.memory_space<vmem>>, vector<1x8xf32>
    tpu.vector_store %arg33[%c12_246, %c0_247], %334 {strides = array<i32>} : memref<16x8xf32, #tpu.memory_space<vmem>>, vector<1x8xf32>,
    %336 = vector.extract_strided_slice %309 {offsets = [50, 0], sizes = [1, 8], strides = [1, 1]} : vector<55x8xf32> to vector<1x8xf32>
    %c13_248 = arith.constant 13 : index
    %c0_249 = arith.constant 0 : index
    %337 = vector.load %arg33[%c13_248, %c0_249] : memref<16x8xf32, #tpu.memory_space<vmem>>, vector<1x8xf32>
    tpu.vector_store %arg33[%c13_248, %c0_249], %336 {strides = array<i32>} : memref<16x8xf32, #tpu.memory_space<vmem>>, vector<1x8xf32>,
    %338 = vector.extract_strided_slice %309 {offsets = [52, 0], sizes = [1, 8], strides = [1, 1]} : vector<55x8xf32> to vector<1x8xf32>
    %c14_250 = arith.constant 14 : index
    %c0_251 = arith.constant 0 : index
    %339 = vector.load %arg33[%c14_250, %c0_251] : memref<16x8xf32, #tpu.memory_space<vmem>>, vector<1x8xf32>
    tpu.vector_store %arg33[%c14_250, %c0_251], %338 {strides = array<i32>} : memref<16x8xf32, #tpu.memory_space<vmem>>, vector<1x8xf32>,
    %340 = vector.extract_strided_slice %309 {offsets = [54, 0], sizes = [1, 8], strides = [1, 1]} : vector<55x8xf32> to vector<1x8xf32>
    %c15_252 = arith.constant 15 : index
    %c0_253 = arith.constant 0 : index
    %341 = vector.load %arg33[%c15_252, %c0_253] : memref<16x8xf32, #tpu.memory_space<vmem>>, vector<1x8xf32>
    tpu.vector_store %arg33[%c15_252, %c0_253], %340 {strides = array<i32>} : memref<16x8xf32, #tpu.memory_space<vmem>>, vector<1x8xf32>,
    %c0_254 = arith.constant 0 : index
    %c0_255 = arith.constant 0 : index
    %342 = vector.load %arg33[%c0_254, %c0_255] : memref<16x8xf32, #tpu.memory_space<vmem>>, vector<16x8xf32>
    %343 = arith.truncf %342 : vector<16x8xf32> to vector<16x8xbf16>
    %c0_256 = arith.constant 0 : index
    %c0_257 = arith.constant 0 : index
    %344 = vector.load %arg8[%c0_256, %c0_257] : memref<8x16xbf16, #tpu.memory_space<vmem>>, vector<8x16xbf16>
    %cst_258 = arith.constant dense<0.000000e+00> : vector<16x16xf32>
    %345 = tpu.matmul %343, %344, %cst_258 {dimension_numbers = #tpu.dot_dimension_numbers<[1], [0], [0], [1], [0, 0, 1, 1], [], []>} : vector<16x8xbf16>, vector<8x16xbf16>, vector<16x16xf32> -> vector<16x16xf32>
    %c0_259 = arith.constant 0 : index
    %c0_260 = arith.constant 0 : index
    %346 = vector.load %arg9[%c0_259, %c0_260] : memref<1x16xf32, #tpu.memory_space<vmem>>, vector<1x16xf32>
    %347 = vector.broadcast %346 : vector<1x16xf32> to vector<16x16xf32>
    %348 = arith.addf %345, %347 : vector<16x16xf32>
    %c0_261 = arith.constant 0 : index
    %c0_262 = arith.constant 0 : index
    %349 = vector.load %arg10[%c0_261, %c0_262] : memref<8x16xbf16, #tpu.memory_space<vmem>>, vector<8x16xbf16>
    %cst_263 = arith.constant dense<0.000000e+00> : vector<16x16xf32>
    %350 = tpu.matmul %343, %349, %cst_263 {dimension_numbers = #tpu.dot_dimension_numbers<[1], [0], [0], [1], [0, 0, 1, 1], [], []>} : vector<16x8xbf16>, vector<8x16xbf16>, vector<16x16xf32> -> vector<16x16xf32>
    %c0_264 = arith.constant 0 : index
    %c0_265 = arith.constant 0 : index
    %351 = vector.load %arg11[%c0_264, %c0_265] : memref<1x16xf32, #tpu.memory_space<vmem>>, vector<1x16xf32>
    %352 = vector.broadcast %351 : vector<1x16xf32> to vector<16x16xf32>
    %353 = arith.addf %350, %352 : vector<16x16xf32>
    %cst_266 = arith.constant 0.000000e+00 : f32
    %354 = vector.broadcast %cst_266 : f32 to vector<16x16xf32>
    %355 = arith.maximumf %353, %354 : vector<16x16xf32>
    %cst_267 = arith.constant 0.000000e+00 : f32
    %356 = vector.broadcast %cst_267 : f32 to vector<36x16xf32>
    %c0_268 = arith.constant 0 : index
    %c0_269 = arith.constant 0 : index
    %357 = vector.load %arg34[%c0_268, %c0_269] : memref<36x16xf32, #tpu.memory_space<vmem>>, vector<36x16xf32>
    tpu.vector_store %arg34[%c0_268, %c0_269], %356 {strides = array<i32>} : memref<36x16xf32, #tpu.memory_space<vmem>>, vector<36x16xf32>,
    %358 = vector.extract_strided_slice %355 {offsets = [0, 0], sizes = [4, 16], strides = [1, 1]} : vector<16x16xf32> to vector<4x16xf32>
    %c7_270 = arith.constant 7 : index
    %c0_271 = arith.constant 0 : index
    %359 = vector.load %arg34[%c7_270, %c0_271] : memref<36x16xf32, #tpu.memory_space<vmem>>, vector<4x16xf32>
    tpu.vector_store %arg34[%c7_270, %c0_271], %358 {strides = array<i32>} : memref<36x16xf32, #tpu.memory_space<vmem>>, vector<4x16xf32>,
    %360 = vector.extract_strided_slice %355 {offsets = [4, 0], sizes = [4, 16], strides = [1, 1]} : vector<16x16xf32> to vector<4x16xf32>
    %c13_272 = arith.constant 13 : index
    %c0_273 = arith.constant 0 : index
    %361 = vector.load %arg34[%c13_272, %c0_273] : memref<36x16xf32, #tpu.memory_space<vmem>>, vector<4x16xf32>
    tpu.vector_store %arg34[%c13_272, %c0_273], %360 {strides = array<i32>} : memref<36x16xf32, #tpu.memory_space<vmem>>, vector<4x16xf32>,
    %362 = vector.extract_strided_slice %355 {offsets = [8, 0], sizes = [4, 16], strides = [1, 1]} : vector<16x16xf32> to vector<4x16xf32>
    %c19_274 = arith.constant 19 : index
    %c0_275 = arith.constant 0 : index
    %363 = vector.load %arg34[%c19_274, %c0_275] : memref<36x16xf32, #tpu.memory_space<vmem>>, vector<4x16xf32>
    tpu.vector_store %arg34[%c19_274, %c0_275], %362 {strides = array<i32>} : memref<36x16xf32, #tpu.memory_space<vmem>>, vector<4x16xf32>,
    %364 = vector.extract_strided_slice %355 {offsets = [12, 0], sizes = [4, 16], strides = [1, 1]} : vector<16x16xf32> to vector<4x16xf32>
    %c25_276 = arith.constant 25 : index
    %c0_277 = arith.constant 0 : index
    %365 = vector.load %arg34[%c25_276, %c0_277] : memref<36x16xf32, #tpu.memory_space<vmem>>, vector<4x16xf32>
    tpu.vector_store %arg34[%c25_276, %c0_277], %364 {strides = array<i32>} : memref<36x16xf32, #tpu.memory_space<vmem>>, vector<4x16xf32>,
    %c0_278 = arith.constant 0 : index
    %c0_279 = arith.constant 0 : index
    %366 = vector.load %arg34[%c0_278, %c0_279] : memref<36x16xf32, #tpu.memory_space<vmem>>, vector<22x16xf32>
    %c1_280 = arith.constant 1 : index
    %c0_281 = arith.constant 0 : index
    %367 = vector.load %arg34[%c1_280, %c0_281] : memref<36x16xf32, #tpu.memory_space<vmem>>, vector<22x16xf32>
    %c2_282 = arith.constant 2 : index
    %c0_283 = arith.constant 0 : index
    %368 = vector.load %arg34[%c2_282, %c0_283] : memref<36x16xf32, #tpu.memory_space<vmem>>, vector<22x16xf32>
    %c6_284 = arith.constant 6 : index
    %c0_285 = arith.constant 0 : index
    %369 = vector.load %arg34[%c6_284, %c0_285] : memref<36x16xf32, #tpu.memory_space<vmem>>, vector<22x16xf32>
    %c7_286 = arith.constant 7 : index
    %c0_287 = arith.constant 0 : index
    %370 = vector.load %arg34[%c7_286, %c0_287] : memref<36x16xf32, #tpu.memory_space<vmem>>, vector<22x16xf32>
    %c8_288 = arith.constant 8 : index
    %c0_289 = arith.constant 0 : index
    %371 = vector.load %arg34[%c8_288, %c0_289] : memref<36x16xf32, #tpu.memory_space<vmem>>, vector<22x16xf32>
    %c12_290 = arith.constant 12 : index
    %c0_291 = arith.constant 0 : index
    %372 = vector.load %arg34[%c12_290, %c0_291] : memref<36x16xf32, #tpu.memory_space<vmem>>, vector<22x16xf32>
    %c13_292 = arith.constant 13 : index
    %c0_293 = arith.constant 0 : index
    %373 = vector.load %arg34[%c13_292, %c0_293] : memref<36x16xf32, #tpu.memory_space<vmem>>, vector<22x16xf32>
    %c14_294 = arith.constant 14 : index
    %c0_295 = arith.constant 0 : index
    %374 = vector.load %arg34[%c14_294, %c0_295] : memref<36x16xf32, #tpu.memory_space<vmem>>, vector<22x16xf32>
    %375 = tpu.concatenate %366, %367, %368, %369, %370, %371, %372, %373, %374 in 1 : vector<22x16xf32>, vector<22x16xf32>, vector<22x16xf32>, vector<22x16xf32>, vector<22x16xf32>, vector<22x16xf32>, vector<22x16xf32>, vector<22x16xf32>, vector<22x16xf32> -> vector<22x144xf32>
    %376 = arith.truncf %375 : vector<22x144xf32> to vector<22x144xbf16>
    %c0_296 = arith.constant 0 : index
    %c0_297 = arith.constant 0 : index
    %377 = vector.load %arg12[%c0_296, %c0_297] : memref<144x16xbf16, #tpu.memory_space<vmem>>, vector<144x16xbf16>
    %cst_298 = arith.constant dense<0.000000e+00> : vector<22x16xf32>
    %378 = tpu.matmul %376, %377, %cst_298 {dimension_numbers = #tpu.dot_dimension_numbers<[1], [0], [0], [1], [0, 0, 1, 1], [], []>} : vector<22x144xbf16>, vector<144x16xbf16>, vector<22x16xf32> -> vector<22x16xf32>
    %c0_299 = arith.constant 0 : index
    %c0_300 = arith.constant 0 : index
    %379 = vector.load %arg13[%c0_299, %c0_300] : memref<1x16xf32, #tpu.memory_space<vmem>>, vector<1x16xf32>
    %380 = vector.broadcast %379 : vector<1x16xf32> to vector<22x16xf32>
    %381 = arith.addf %378, %380 : vector<22x16xf32>
    %382 = vector.extract_strided_slice %381 {offsets = [0, 0], sizes = [4, 16], strides = [1, 1]} : vector<22x16xf32> to vector<4x16xf32>
    %383 = vector.extract_strided_slice %348 {offsets = [0, 0], sizes = [4, 16], strides = [1, 1]} : vector<16x16xf32> to vector<4x16xf32>
    %384 = arith.addf %382, %383 : vector<4x16xf32>
    %cst_301 = arith.constant 0.000000e+00 : f32
    %385 = vector.broadcast %cst_301 : f32 to vector<4x16xf32>
    %386 = arith.maximumf %384, %385 : vector<4x16xf32>
    %c0_302 = arith.constant 0 : index
    %c0_303 = arith.constant 0 : index
    %387 = vector.load %arg35[%c0_302, %c0_303] : memref<16x16xf32, #tpu.memory_space<vmem>>, vector<4x16xf32>
    tpu.vector_store %arg35[%c0_302, %c0_303], %386 {strides = array<i32>} : memref<16x16xf32, #tpu.memory_space<vmem>>, vector<4x16xf32>,
    %388 = vector.extract_strided_slice %381 {offsets = [6, 0], sizes = [4, 16], strides = [1, 1]} : vector<22x16xf32> to vector<4x16xf32>
    %389 = vector.extract_strided_slice %348 {offsets = [4, 0], sizes = [4, 16], strides = [1, 1]} : vector<16x16xf32> to vector<4x16xf32>
    %390 = arith.addf %388, %389 : vector<4x16xf32>
    %cst_304 = arith.constant 0.000000e+00 : f32
    %391 = vector.broadcast %cst_304 : f32 to vector<4x16xf32>
    %392 = arith.maximumf %390, %391 : vector<4x16xf32>
    %c4_305 = arith.constant 4 : index
    %c0_306 = arith.constant 0 : index
    %393 = vector.load %arg35[%c4_305, %c0_306] : memref<16x16xf32, #tpu.memory_space<vmem>>, vector<4x16xf32>
    tpu.vector_store %arg35[%c4_305, %c0_306], %392 {strides = array<i32>} : memref<16x16xf32, #tpu.memory_space<vmem>>, vector<4x16xf32>,
    %394 = vector.extract_strided_slice %381 {offsets = [12, 0], sizes = [4, 16], strides = [1, 1]} : vector<22x16xf32> to vector<4x16xf32>
    %395 = vector.extract_strided_slice %348 {offsets = [8, 0], sizes = [4, 16], strides = [1, 1]} : vector<16x16xf32> to vector<4x16xf32>
    %396 = arith.addf %394, %395 : vector<4x16xf32>
    %cst_307 = arith.constant 0.000000e+00 : f32
    %397 = vector.broadcast %cst_307 : f32 to vector<4x16xf32>
    %398 = arith.maximumf %396, %397 : vector<4x16xf32>
    %c8_308 = arith.constant 8 : index
    %c0_309 = arith.constant 0 : index
    %399 = vector.load %arg35[%c8_308, %c0_309] : memref<16x16xf32, #tpu.memory_space<vmem>>, vector<4x16xf32>
    tpu.vector_store %arg35[%c8_308, %c0_309], %398 {strides = array<i32>} : memref<16x16xf32, #tpu.memory_space<vmem>>, vector<4x16xf32>,
    %400 = vector.extract_strided_slice %381 {offsets = [18, 0], sizes = [4, 16], strides = [1, 1]} : vector<22x16xf32> to vector<4x16xf32>
    %401 = vector.extract_strided_slice %348 {offsets = [12, 0], sizes = [4, 16], strides = [1, 1]} : vector<16x16xf32> to vector<4x16xf32>
    %402 = arith.addf %400, %401 : vector<4x16xf32>
    %cst_310 = arith.constant 0.000000e+00 : f32
    %403 = vector.broadcast %cst_310 : f32 to vector<4x16xf32>
    %404 = arith.maximumf %402, %403 : vector<4x16xf32>
    %c12_311 = arith.constant 12 : index
    %c0_312 = arith.constant 0 : index
    %405 = vector.load %arg35[%c12_311, %c0_312] : memref<16x16xf32, #tpu.memory_space<vmem>>, vector<4x16xf32>
    tpu.vector_store %arg35[%c12_311, %c0_312], %404 {strides = array<i32>} : memref<16x16xf32, #tpu.memory_space<vmem>>, vector<4x16xf32>,
    %c0_313 = arith.constant 0 : index
    %c0_314 = arith.constant 0 : index
    %406 = vector.load %arg35[%c0_313, %c0_314] : memref<16x16xf32, #tpu.memory_space<vmem>>, vector<11x16xf32>
    %c1_315 = arith.constant 1 : index
    %c0_316 = arith.constant 0 : index
    %407 = vector.load %arg35[%c1_315, %c0_316] : memref<16x16xf32, #tpu.memory_space<vmem>>, vector<11x16xf32>
    %408 = arith.minimumf %406, %407 : vector<11x16xf32>
    %c4_317 = arith.constant 4 : index
    %c0_318 = arith.constant 0 : index
    %409 = vector.load %arg35[%c4_317, %c0_318] : memref<16x16xf32, #tpu.memory_space<vmem>>, vector<11x16xf32>
    %410 = arith.minimumf %408, %409 : vector<11x16xf32>
    %c5_319 = arith.constant 5 : index
    %c0_320 = arith.constant 0 : index
    %411 = vector.load %arg35[%c5_319, %c0_320] : memref<16x16xf32, #tpu.memory_space<vmem>>, vector<11x16xf32>
    %412 = arith.minimumf %410, %411 : vector<11x16xf32>
    %413 = vector.extract_strided_slice %412 {offsets = [0, 0], sizes = [1, 16], strides = [1, 1]} : vector<11x16xf32> to vector<1x16xf32>
    %c0_321 = arith.constant 0 : index
    %c0_322 = arith.constant 0 : index
    %414 = vector.load %arg36[%c0_321, %c0_322] : memref<4x16xf32, #tpu.memory_space<vmem>>, vector<1x16xf32>
    tpu.vector_store %arg36[%c0_321, %c0_322], %413 {strides = array<i32>} : memref<4x16xf32, #tpu.memory_space<vmem>>, vector<1x16xf32>,
    %415 = vector.extract_strided_slice %412 {offsets = [2, 0], sizes = [1, 16], strides = [1, 1]} : vector<11x16xf32> to vector<1x16xf32>
    %c1_323 = arith.constant 1 : index
    %c0_324 = arith.constant 0 : index
    %416 = vector.load %arg36[%c1_323, %c0_324] : memref<4x16xf32, #tpu.memory_space<vmem>>, vector<1x16xf32>
    tpu.vector_store %arg36[%c1_323, %c0_324], %415 {strides = array<i32>} : memref<4x16xf32, #tpu.memory_space<vmem>>, vector<1x16xf32>,
    %417 = vector.extract_strided_slice %412 {offsets = [8, 0], sizes = [1, 16], strides = [1, 1]} : vector<11x16xf32> to vector<1x16xf32>
    %c2_325 = arith.constant 2 : index
    %c0_326 = arith.constant 0 : index
    %418 = vector.load %arg36[%c2_325, %c0_326] : memref<4x16xf32, #tpu.memory_space<vmem>>, vector<1x16xf32>
    tpu.vector_store %arg36[%c2_325, %c0_326], %417 {strides = array<i32>} : memref<4x16xf32, #tpu.memory_space<vmem>>, vector<1x16xf32>,
    %419 = vector.extract_strided_slice %412 {offsets = [10, 0], sizes = [1, 16], strides = [1, 1]} : vector<11x16xf32> to vector<1x16xf32>
    %c3_327 = arith.constant 3 : index
    %c0_328 = arith.constant 0 : index
    %420 = vector.load %arg36[%c3_327, %c0_328] : memref<4x16xf32, #tpu.memory_space<vmem>>, vector<1x16xf32>
    tpu.vector_store %arg36[%c3_327, %c0_328], %419 {strides = array<i32>} : memref<4x16xf32, #tpu.memory_space<vmem>>, vector<1x16xf32>,
    %c0_329 = arith.constant 0 : index
    %c0_330 = arith.constant 0 : index
    %421 = vector.load %arg36[%c0_329, %c0_330] : memref<4x16xf32, #tpu.memory_space<vmem>>, vector<4x16xf32>
    %422 = arith.truncf %421 : vector<4x16xf32> to vector<4x16xbf16>
    %c0_331 = arith.constant 0 : index
    %c0_332 = arith.constant 0 : index
    %423 = vector.load %arg14[%c0_331, %c0_332] : memref<16x32xbf16, #tpu.memory_space<vmem>>, vector<16x32xbf16>
    %cst_333 = arith.constant dense<0.000000e+00> : vector<4x32xf32>
    %424 = tpu.matmul %422, %423, %cst_333 {dimension_numbers = #tpu.dot_dimension_numbers<[1], [0], [0], [1], [0, 0, 1, 1], [], []>} : vector<4x16xbf16>, vector<16x32xbf16>, vector<4x32xf32> -> vector<4x32xf32>
    %c0_334 = arith.constant 0 : index
    %c0_335 = arith.constant 0 : index
    %425 = vector.load %arg15[%c0_334, %c0_335] : memref<1x32xf32, #tpu.memory_space<vmem>>, vector<1x32xf32>
    %426 = vector.broadcast %425 : vector<1x32xf32> to vector<4x32xf32>
    %427 = arith.addf %424, %426 : vector<4x32xf32>
    %c0_336 = arith.constant 0 : index
    %c0_337 = arith.constant 0 : index
    %428 = vector.load %arg16[%c0_336, %c0_337] : memref<16x32xbf16, #tpu.memory_space<vmem>>, vector<16x32xbf16>
    %cst_338 = arith.constant dense<0.000000e+00> : vector<4x32xf32>
    %429 = tpu.matmul %422, %428, %cst_338 {dimension_numbers = #tpu.dot_dimension_numbers<[1], [0], [0], [1], [0, 0, 1, 1], [], []>} : vector<4x16xbf16>, vector<16x32xbf16>, vector<4x32xf32> -> vector<4x32xf32>
    %c0_339 = arith.constant 0 : index
    %c0_340 = arith.constant 0 : index
    %430 = vector.load %arg17[%c0_339, %c0_340] : memref<1x32xf32, #tpu.memory_space<vmem>>, vector<1x32xf32>
    %431 = vector.broadcast %430 : vector<1x32xf32> to vector<4x32xf32>
    %432 = arith.addf %429, %431 : vector<4x32xf32>
    %cst_341 = arith.constant 0.000000e+00 : f32
    %433 = vector.broadcast %cst_341 : f32 to vector<4x32xf32>
    %434 = arith.maximumf %432, %433 : vector<4x32xf32>
    %cst_342 = arith.constant 0.000000e+00 : f32
    %435 = vector.broadcast %cst_342 : f32 to vector<16x32xf32>
    %c0_343 = arith.constant 0 : index
    %c0_344 = arith.constant 0 : index
    %436 = vector.load %arg37[%c0_343, %c0_344] : memref<16x32xf32, #tpu.memory_space<vmem>>, vector<16x32xf32>
    tpu.vector_store %arg37[%c0_343, %c0_344], %435 {strides = array<i32>} : memref<16x32xf32, #tpu.memory_space<vmem>>, vector<16x32xf32>,
    %437 = vector.extract_strided_slice %434 {offsets = [0, 0], sizes = [2, 32], strides = [1, 1]} : vector<4x32xf32> to vector<2x32xf32>
    %c5_345 = arith.constant 5 : index
    %c0_346 = arith.constant 0 : index
    %438 = vector.load %arg37[%c5_345, %c0_346] : memref<16x32xf32, #tpu.memory_space<vmem>>, vector<2x32xf32>
    tpu.vector_store %arg37[%c5_345, %c0_346], %437 {strides = array<i32>} : memref<16x32xf32, #tpu.memory_space<vmem>>, vector<2x32xf32>,
    %439 = vector.extract_strided_slice %434 {offsets = [2, 0], sizes = [2, 32], strides = [1, 1]} : vector<4x32xf32> to vector<2x32xf32>
    %c9_347 = arith.constant 9 : index
    %c0_348 = arith.constant 0 : index
    %440 = vector.load %arg37[%c9_347, %c0_348] : memref<16x32xf32, #tpu.memory_space<vmem>>, vector<2x32xf32>
    tpu.vector_store %arg37[%c9_347, %c0_348], %439 {strides = array<i32>} : memref<16x32xf32, #tpu.memory_space<vmem>>, vector<2x32xf32>,
    %c0_349 = arith.constant 0 : index
    %c0_350 = arith.constant 0 : index
    %441 = vector.load %arg37[%c0_349, %c0_350] : memref<16x32xf32, #tpu.memory_space<vmem>>, vector<6x32xf32>
    %c1_351 = arith.constant 1 : index
    %c0_352 = arith.constant 0 : index
    %442 = vector.load %arg37[%c1_351, %c0_352] : memref<16x32xf32, #tpu.memory_space<vmem>>, vector<6x32xf32>
    %c2_353 = arith.constant 2 : index
    %c0_354 = arith.constant 0 : index
    %443 = vector.load %arg37[%c2_353, %c0_354] : memref<16x32xf32, #tpu.memory_space<vmem>>, vector<6x32xf32>
    %c4_355 = arith.constant 4 : index
    %c0_356 = arith.constant 0 : index
    %444 = vector.load %arg37[%c4_355, %c0_356] : memref<16x32xf32, #tpu.memory_space<vmem>>, vector<6x32xf32>
    %c5_357 = arith.constant 5 : index
    %c0_358 = arith.constant 0 : index
    %445 = vector.load %arg37[%c5_357, %c0_358] : memref<16x32xf32, #tpu.memory_space<vmem>>, vector<6x32xf32>
    %c6_359 = arith.constant 6 : index
    %c0_360 = arith.constant 0 : index
    %446 = vector.load %arg37[%c6_359, %c0_360] : memref<16x32xf32, #tpu.memory_space<vmem>>, vector<6x32xf32>
    %c8_361 = arith.constant 8 : index
    %c0_362 = arith.constant 0 : index
    %447 = vector.load %arg37[%c8_361, %c0_362] : memref<16x32xf32, #tpu.memory_space<vmem>>, vector<6x32xf32>
    %c9_363 = arith.constant 9 : index
    %c0_364 = arith.constant 0 : index
    %448 = vector.load %arg37[%c9_363, %c0_364] : memref<16x32xf32, #tpu.memory_space<vmem>>, vector<6x32xf32>
    %c10_365 = arith.constant 10 : index
    %c0_366 = arith.constant 0 : index
    %449 = vector.load %arg37[%c10_365, %c0_366] : memref<16x32xf32, #tpu.memory_space<vmem>>, vector<6x32xf32>
    %450 = tpu.concatenate %441, %442, %443, %444, %445, %446, %447, %448, %449 in 1 : vector<6x32xf32>, vector<6x32xf32>, vector<6x32xf32>, vector<6x32xf32>, vector<6x32xf32>, vector<6x32xf32>, vector<6x32xf32>, vector<6x32xf32>, vector<6x32xf32> -> vector<6x288xf32>
    %451 = arith.truncf %450 : vector<6x288xf32> to vector<6x288xbf16>
    %c0_367 = arith.constant 0 : index
    %c0_368 = arith.constant 0 : index
    %452 = vector.load %arg18[%c0_367, %c0_368] : memref<288x32xbf16, #tpu.memory_space<vmem>>, vector<288x32xbf16>
    %cst_369 = arith.constant dense<0.000000e+00> : vector<6x32xf32>
    %453 = tpu.matmul %451, %452, %cst_369 {dimension_numbers = #tpu.dot_dimension_numbers<[1], [0], [0], [1], [0, 0, 1, 1], [], []>} : vector<6x288xbf16>, vector<288x32xbf16>, vector<6x32xf32> -> vector<6x32xf32>
    %c0_370 = arith.constant 0 : index
    %c0_371 = arith.constant 0 : index
    %454 = vector.load %arg19[%c0_370, %c0_371] : memref<1x32xf32, #tpu.memory_space<vmem>>, vector<1x32xf32>
    %455 = vector.broadcast %454 : vector<1x32xf32> to vector<6x32xf32>
    %456 = arith.addf %453, %455 : vector<6x32xf32>
    %457 = vector.extract_strided_slice %456 {offsets = [0, 0], sizes = [2, 32], strides = [1, 1]} : vector<6x32xf32> to vector<2x32xf32>
    %458 = vector.extract_strided_slice %427 {offsets = [0, 0], sizes = [2, 32], strides = [1, 1]} : vector<4x32xf32> to vector<2x32xf32>
    %459 = arith.addf %457, %458 : vector<2x32xf32>
    %cst_372 = arith.constant 0.000000e+00 : f32
    %460 = vector.broadcast %cst_372 : f32 to vector<2x32xf32>
    %461 = arith.maximumf %459, %460 : vector<2x32xf32>
    %c0_373 = arith.constant 0 : index
    %c0_374 = arith.constant 0 : index
    %462 = vector.load %arg38[%c0_373, %c0_374] : memref<4x32xf32, #tpu.memory_space<vmem>>, vector<2x32xf32>
    tpu.vector_store %arg38[%c0_373, %c0_374], %461 {strides = array<i32>} : memref<4x32xf32, #tpu.memory_space<vmem>>, vector<2x32xf32>,
    %463 = vector.extract_strided_slice %456 {offsets = [4, 0], sizes = [2, 32], strides = [1, 1]} : vector<6x32xf32> to vector<2x32xf32>
    %464 = vector.extract_strided_slice %427 {offsets = [2, 0], sizes = [2, 32], strides = [1, 1]} : vector<4x32xf32> to vector<2x32xf32>
    %465 = arith.addf %463, %464 : vector<2x32xf32>
    %cst_375 = arith.constant 0.000000e+00 : f32
    %466 = vector.broadcast %cst_375 : f32 to vector<2x32xf32>
    %467 = arith.maximumf %465, %466 : vector<2x32xf32>
    %c2_376 = arith.constant 2 : index
    %c0_377 = arith.constant 0 : index
    %468 = vector.load %arg38[%c2_376, %c0_377] : memref<4x32xf32, #tpu.memory_space<vmem>>, vector<2x32xf32>
    tpu.vector_store %arg38[%c2_376, %c0_377], %467 {strides = array<i32>} : memref<4x32xf32, #tpu.memory_space<vmem>>, vector<2x32xf32>,
    %c0_378 = arith.constant 0 : index
    %c0_379 = arith.constant 0 : index
    %469 = vector.load %arg38[%c0_378, %c0_379] : memref<4x32xf32, #tpu.memory_space<vmem>>, vector<1x32xf32>
    %c1_380 = arith.constant 1 : index
    %c0_381 = arith.constant 0 : index
    %470 = vector.load %arg38[%c1_380, %c0_381] : memref<4x32xf32, #tpu.memory_space<vmem>>, vector<1x32xf32>
    %471 = arith.minimumf %469, %470 : vector<1x32xf32>
    %c2_382 = arith.constant 2 : index
    %c0_383 = arith.constant 0 : index
    %472 = vector.load %arg38[%c2_382, %c0_383] : memref<4x32xf32, #tpu.memory_space<vmem>>, vector<1x32xf32>
    %473 = arith.minimumf %471, %472 : vector<1x32xf32>
    %c3_384 = arith.constant 3 : index
    %c0_385 = arith.constant 0 : index
    %474 = vector.load %arg38[%c3_384, %c0_385] : memref<4x32xf32, #tpu.memory_space<vmem>>, vector<1x32xf32>
    %475 = arith.minimumf %473, %474 : vector<1x32xf32>
    %c0_386 = arith.constant 0 : index
    %c0_387 = arith.constant 0 : index
    %476 = vector.load %arg39[%c0_386, %c0_387] : memref<1x32xf32, #tpu.memory_space<vmem>>, vector<1x32xf32>
    tpu.vector_store %arg39[%c0_386, %c0_387], %475 {strides = array<i32>} : memref<1x32xf32, #tpu.memory_space<vmem>>, vector<1x32xf32>,
    %c0_388 = arith.constant 0 : index
    %c0_389 = arith.constant 0 : index
    %477 = vector.load %arg39[%c0_388, %c0_389] : memref<1x32xf32, #tpu.memory_space<vmem>>, vector<1x32xf32>
    %478 = arith.truncf %477 : vector<1x32xf32> to vector<1x32xbf16>
    %c0_390 = arith.constant 0 : index
    %c0_391 = arith.constant 0 : index
    %479 = vector.load %arg20[%c0_390, %c0_391] : memref<32x64xbf16, #tpu.memory_space<vmem>>, vector<32x64xbf16>
    %cst_392 = arith.constant dense<0.000000e+00> : vector<1x64xf32>
    %480 = tpu.matmul %478, %479, %cst_392 {dimension_numbers = #tpu.dot_dimension_numbers<[1], [0], [0], [1], [0, 0, 1, 1], [], []>} : vector<1x32xbf16>, vector<32x64xbf16>, vector<1x64xf32> -> vector<1x64xf32>
    %c0_393 = arith.constant 0 : index
    %c0_394 = arith.constant 0 : index
    %481 = vector.load %arg21[%c0_393, %c0_394] : memref<1x64xf32, #tpu.memory_space<vmem>>, vector<1x64xf32>
    %482 = arith.addf %480, %481 : vector<1x64xf32>
    %c0_395 = arith.constant 0 : index
    %c0_396 = arith.constant 0 : index
    %483 = vector.load %arg22[%c0_395, %c0_396] : memref<32x64xbf16, #tpu.memory_space<vmem>>, vector<32x64xbf16>
    %cst_397 = arith.constant dense<0.000000e+00> : vector<1x64xf32>
    %484 = tpu.matmul %478, %483, %cst_397 {dimension_numbers = #tpu.dot_dimension_numbers<[1], [0], [0], [1], [0, 0, 1, 1], [], []>} : vector<1x32xbf16>, vector<32x64xbf16>, vector<1x64xf32> -> vector<1x64xf32>
    %c0_398 = arith.constant 0 : index
    %c0_399 = arith.constant 0 : index
    %485 = vector.load %arg23[%c0_398, %c0_399] : memref<1x64xf32, #tpu.memory_space<vmem>>, vector<1x64xf32>
    %486 = arith.addf %484, %485 : vector<1x64xf32>
    %cst_400 = arith.constant 0.000000e+00 : f32
    %487 = vector.broadcast %cst_400 : f32 to vector<1x64xf32>
    %488 = arith.maximumf %486, %487 : vector<1x64xf32>
    %cst_401 = arith.constant 0.000000e+00 : f32
    %489 = vector.broadcast %cst_401 : f32 to vector<9x64xf32>
    %c0_402 = arith.constant 0 : index
    %c0_403 = arith.constant 0 : index
    %490 = vector.load %arg40[%c0_402, %c0_403] : memref<9x64xf32, #tpu.memory_space<vmem>>, vector<9x64xf32>
    tpu.vector_store %arg40[%c0_402, %c0_403], %489 {strides = array<i32>} : memref<9x64xf32, #tpu.memory_space<vmem>>, vector<9x64xf32>,
    %c4_404 = arith.constant 4 : index
    %c0_405 = arith.constant 0 : index
    %491 = vector.load %arg40[%c4_404, %c0_405] : memref<9x64xf32, #tpu.memory_space<vmem>>, vector<1x64xf32>
    tpu.vector_store %arg40[%c4_404, %c0_405], %488 {strides = array<i32>} : memref<9x64xf32, #tpu.memory_space<vmem>>, vector<1x64xf32>,
    %c0_406 = arith.constant 0 : index
    %c0_407 = arith.constant 0 : index
    %492 = vector.load %arg40[%c0_406, %c0_407] : memref<9x64xf32, #tpu.memory_space<vmem>>, vector<1x64xf32>
    %c1_408 = arith.constant 1 : index
    %c0_409 = arith.constant 0 : index
    %493 = vector.load %arg40[%c1_408, %c0_409] : memref<9x64xf32, #tpu.memory_space<vmem>>, vector<1x64xf32>
    %c2_410 = arith.constant 2 : index
    %c0_411 = arith.constant 0 : index
    %494 = vector.load %arg40[%c2_410, %c0_411] : memref<9x64xf32, #tpu.memory_space<vmem>>, vector<1x64xf32>
    %c3_412 = arith.constant 3 : index
    %c0_413 = arith.constant 0 : index
    %495 = vector.load %arg40[%c3_412, %c0_413] : memref<9x64xf32, #tpu.memory_space<vmem>>, vector<1x64xf32>
    %c4_414 = arith.constant 4 : index
    %c0_415 = arith.constant 0 : index
    %496 = vector.load %arg40[%c4_414, %c0_415] : memref<9x64xf32, #tpu.memory_space<vmem>>, vector<1x64xf32>
    %c5_416 = arith.constant 5 : index
    %c0_417 = arith.constant 0 : index
    %497 = vector.load %arg40[%c5_416, %c0_417] : memref<9x64xf32, #tpu.memory_space<vmem>>, vector<1x64xf32>
    %c6_418 = arith.constant 6 : index
    %c0_419 = arith.constant 0 : index
    %498 = vector.load %arg40[%c6_418, %c0_419] : memref<9x64xf32, #tpu.memory_space<vmem>>, vector<1x64xf32>
    %c7_420 = arith.constant 7 : index
    %c0_421 = arith.constant 0 : index
    %499 = vector.load %arg40[%c7_420, %c0_421] : memref<9x64xf32, #tpu.memory_space<vmem>>, vector<1x64xf32>
    %c8_422 = arith.constant 8 : index
    %c0_423 = arith.constant 0 : index
    %500 = vector.load %arg40[%c8_422, %c0_423] : memref<9x64xf32, #tpu.memory_space<vmem>>, vector<1x64xf32>
    %501 = tpu.concatenate %492, %493, %494, %495, %496, %497, %498, %499, %500 in 1 : vector<1x64xf32>, vector<1x64xf32>, vector<1x64xf32>, vector<1x64xf32>, vector<1x64xf32>, vector<1x64xf32>, vector<1x64xf32>, vector<1x64xf32>, vector<1x64xf32> -> vector<1x576xf32>
    %502 = arith.truncf %501 : vector<1x576xf32> to vector<1x576xbf16>
    %c0_424 = arith.constant 0 : index
    %c0_425 = arith.constant 0 : index
    %503 = vector.load %arg24[%c0_424, %c0_425] : memref<576x64xbf16, #tpu.memory_space<vmem>>, vector<576x64xbf16>
    %cst_426 = arith.constant dense<0.000000e+00> : vector<1x64xf32>
    %504 = tpu.matmul %502, %503, %cst_426 {dimension_numbers = #tpu.dot_dimension_numbers<[1], [0], [0], [1], [0, 0, 1, 1], [], []>} : vector<1x576xbf16>, vector<576x64xbf16>, vector<1x64xf32> -> vector<1x64xf32>
    %c0_427 = arith.constant 0 : index
    %c0_428 = arith.constant 0 : index
    %505 = vector.load %arg25[%c0_427, %c0_428] : memref<1x64xf32, #tpu.memory_space<vmem>>, vector<1x64xf32>
    %506 = arith.addf %504, %505 : vector<1x64xf32>
    %507 = arith.addf %506, %482 : vector<1x64xf32>
    %cst_429 = arith.constant 0.000000e+00 : f32
    %508 = vector.broadcast %cst_429 : f32 to vector<1x64xf32>
    %509 = arith.maximumf %507, %508 : vector<1x64xf32>
    %c0_430 = arith.constant 0 : index
    %c0_431 = arith.constant 0 : index
    %510 = vector.load %arg41[%c0_430, %c0_431] : memref<1x64xf32, #tpu.memory_space<vmem>>, vector<1x64xf32>
    tpu.vector_store %arg41[%c0_430, %c0_431], %509 {strides = array<i32>} : memref<1x64xf32, #tpu.memory_space<vmem>>, vector<1x64xf32>,
    %c0_432 = arith.constant 0 : index
    %c0_433 = arith.constant 0 : index
    %511 = vector.load %arg41[%c0_432, %c0_433] : memref<1x64xf32, #tpu.memory_space<vmem>>, vector<1x64xf32>
    %512 = arith.truncf %511 : vector<1x64xf32> to vector<1x64xbf16>
    %c0_434 = arith.constant 0 : index
    %c0_435 = arith.constant 0 : index
    %513 = vector.load %arg26[%c0_434, %c0_435] : memref<64x10xbf16, #tpu.memory_space<vmem>>, vector<64x10xbf16>
    %cst_436 = arith.constant dense<0.000000e+00> : vector<1x10xf32>
    %514 = tpu.matmul %512, %513, %cst_436 {dimension_numbers = #tpu.dot_dimension_numbers<[1], [0], [0], [1], [0, 0, 1, 1], [], []>} : vector<1x64xbf16>, vector<64x10xbf16>, vector<1x10xf32> -> vector<1x10xf32>
    %c0_437 = arith.constant 0 : index
    %c0_438 = arith.constant 0 : index
    %515 = vector.load %arg27[%c0_437, %c0_438] : memref<1x10xf32, #tpu.memory_space<vmem>>, vector<1x10xf32>
    %516 = arith.addf %514, %515 : vector<1x10xf32>
    %cst_439 = arith.constant 0.000000e+00 : f32
    %517 = vector.broadcast %cst_439 : f32 to vector<8x10xf32>
    %c0_440 = arith.constant 0 : index
    %c0_441 = arith.constant 0 : index
    %518 = vector.load %arg28[%c0_440, %c0_441] : memref<8x10xf32, #tpu.memory_space<vmem>>, vector<8x10xf32>
    tpu.vector_store %arg28[%c0_440, %c0_441], %517 {strides = array<i32>} : memref<8x10xf32, #tpu.memory_space<vmem>>, vector<8x10xf32>,
    %c0_442 = arith.constant 0 : index
    %c0_443 = arith.constant 0 : index
    %519 = vector.load %arg28[%c0_442, %c0_443] : memref<8x10xf32, #tpu.memory_space<vmem>>, vector<1x10xf32>
    tpu.vector_store %arg28[%c0_442, %c0_443], %516 {strides = array<i32>} : memref<8x10xf32, #tpu.memory_space<vmem>>, vector<1x10xf32>,
    return
  }
  func.func @transform_0(%arg0: i32) -> (i32, i32) {
    %c0_i32 = arith.constant 0 : i32
    %c0_i32_0 = arith.constant 0 : i32
    return %arg0, %c0_i32 : i32, i32
  }
  func.func @transform_1(%arg0: i32) -> (i32, i32) {
    %c0_i32 = arith.constant 0 : i32
    %c0_i32_0 = arith.constant 0 : i32
    %c0_i32_1 = arith.constant 0 : i32
    return %c0_i32, %c0_i32_0 : i32, i32
  }
  func.func @transform_2(%arg0: i32) -> (i32, i32) {
    %c0_i32 = arith.constant 0 : i32
    %c0_i32_0 = arith.constant 0 : i32
    %c0_i32_1 = arith.constant 0 : i32
    return %c0_i32, %c0_i32_0 : i32, i32
  }
  func.func @transform_3(%arg0: i32) -> (i32, i32) {
    %c0_i32 = arith.constant 0 : i32
    %c0_i32_0 = arith.constant 0 : i32
    %c0_i32_1 = arith.constant 0 : i32
    return %c0_i32, %c0_i32_0 : i32, i32
  }
  func.func @transform_4(%arg0: i32) -> (i32, i32) {
    %c0_i32 = arith.constant 0 : i32
    %c0_i32_0 = arith.constant 0 : i32
    %c0_i32_1 = arith.constant 0 : i32
    return %c0_i32, %c0_i32_0 : i32, i32
  }
  func.func @transform_5(%arg0: i32) -> (i32, i32) {
    %c0_i32 = arith.constant 0 : i32
    %c0_i32_0 = arith.constant 0 : i32
    %c0_i32_1 = arith.constant 0 : i32
    return %c0_i32, %c0_i32_0 : i32, i32
  }
  func.func @transform_6(%arg0: i32) -> (i32, i32) {
    %c0_i32 = arith.constant 0 : i32
    %c0_i32_0 = arith.constant 0 : i32
    %c0_i32_1 = arith.constant 0 : i32
    return %c0_i32, %c0_i32_0 : i32, i32
  }
  func.func @transform_7(%arg0: i32) -> (i32, i32) {
    %c0_i32 = arith.constant 0 : i32
    %c0_i32_0 = arith.constant 0 : i32
    %c0_i32_1 = arith.constant 0 : i32
    return %c0_i32, %c0_i32_0 : i32, i32
  }
  func.func @transform_8(%arg0: i32) -> (i32, i32) {
    %c0_i32 = arith.constant 0 : i32
    %c0_i32_0 = arith.constant 0 : i32
    %c0_i32_1 = arith.constant 0 : i32
    return %c0_i32, %c0_i32_0 : i32, i32
  }
  func.func @transform_9(%arg0: i32) -> (i32, i32) {
    %c0_i32 = arith.constant 0 : i32
    %c0_i32_0 = arith.constant 0 : i32
    %c0_i32_1 = arith.constant 0 : i32
    return %c0_i32, %c0_i32_0 : i32, i32
  }
  func.func @transform_10(%arg0: i32) -> (i32, i32) {
    %c0_i32 = arith.constant 0 : i32
    %c0_i32_0 = arith.constant 0 : i32
    %c0_i32_1 = arith.constant 0 : i32
    return %c0_i32, %c0_i32_0 : i32, i32
  }
  func.func @transform_11(%arg0: i32) -> (i32, i32) {
    %c0_i32 = arith.constant 0 : i32
    %c0_i32_0 = arith.constant 0 : i32
    %c0_i32_1 = arith.constant 0 : i32
    return %c0_i32, %c0_i32_0 : i32, i32
  }
  func.func @transform_12(%arg0: i32) -> (i32, i32) {
    %c0_i32 = arith.constant 0 : i32
    %c0_i32_0 = arith.constant 0 : i32
    %c0_i32_1 = arith.constant 0 : i32
    return %c0_i32, %c0_i32_0 : i32, i32
  }
  func.func @transform_13(%arg0: i32) -> (i32, i32) {
    %c0_i32 = arith.constant 0 : i32
    %c0_i32_0 = arith.constant 0 : i32
    %c0_i32_1 = arith.constant 0 : i32
    return %c0_i32, %c0_i32_0 : i32, i32
  }
  func.func @transform_14(%arg0: i32) -> (i32, i32) {
    %c0_i32 = arith.constant 0 : i32
    %c0_i32_0 = arith.constant 0 : i32
    %c0_i32_1 = arith.constant 0 : i32
    return %c0_i32, %c0_i32_0 : i32, i32
  }
  func.func @transform_15(%arg0: i32) -> (i32, i32) {
    %c0_i32 = arith.constant 0 : i32
    %c0_i32_0 = arith.constant 0 : i32
    %c0_i32_1 = arith.constant 0 : i32
    return %c0_i32, %c0_i32_0 : i32, i32
  }
  func.func @transform_16(%arg0: i32) -> (i32, i32) {
    %c0_i32 = arith.constant 0 : i32
    %c0_i32_0 = arith.constant 0 : i32
    %c0_i32_1 = arith.constant 0 : i32
    return %c0_i32, %c0_i32_0 : i32, i32
  }
  func.func @transform_17(%arg0: i32) -> (i32, i32) {
    %c0_i32 = arith.constant 0 : i32
    %c0_i32_0 = arith.constant 0 : i32
    %c0_i32_1 = arith.constant 0 : i32
    return %c0_i32, %c0_i32_0 : i32, i32
  }
  func.func @transform_18(%arg0: i32) -> (i32, i32) {
    %c0_i32 = arith.constant 0 : i32
    %c0_i32_0 = arith.constant 0 : i32
    %c0_i32_1 = arith.constant 0 : i32
    return %c0_i32, %c0_i32_0 : i32, i32
  }
  func.func @transform_19(%arg0: i32) -> (i32, i32) {
    %c0_i32 = arith.constant 0 : i32
    %c0_i32_0 = arith.constant 0 : i32
    %c0_i32_1 = arith.constant 0 : i32
    return %c0_i32, %c0_i32_0 : i32, i32
  }
  func.func @transform_20(%arg0: i32) -> (i32, i32) {
    %c0_i32 = arith.constant 0 : i32
    %c0_i32_0 = arith.constant 0 : i32
    %c0_i32_1 = arith.constant 0 : i32
    return %c0_i32, %c0_i32_0 : i32, i32
  }
  func.func @transform_21(%arg0: i32) -> (i32, i32) {
    %c0_i32 = arith.constant 0 : i32
    %c0_i32_0 = arith.constant 0 : i32
    %c0_i32_1 = arith.constant 0 : i32
    return %c0_i32, %c0_i32_0 : i32, i32
  }
  func.func @transform_22(%arg0: i32) -> (i32, i32) {
    %c0_i32 = arith.constant 0 : i32
    %c0_i32_0 = arith.constant 0 : i32
    %c0_i32_1 = arith.constant 0 : i32
    return %c0_i32, %c0_i32_0 : i32, i32
  }
  func.func @transform_23(%arg0: i32) -> (i32, i32) {
    %c0_i32 = arith.constant 0 : i32
    %c0_i32_0 = arith.constant 0 : i32
    %c0_i32_1 = arith.constant 0 : i32
    return %c0_i32, %c0_i32_0 : i32, i32
  }
  func.func @transform_24(%arg0: i32) -> (i32, i32) {
    %c0_i32 = arith.constant 0 : i32
    %c0_i32_0 = arith.constant 0 : i32
    %c0_i32_1 = arith.constant 0 : i32
    return %c0_i32, %c0_i32_0 : i32, i32
  }
  func.func @transform_25(%arg0: i32) -> (i32, i32) {
    %c0_i32 = arith.constant 0 : i32
    %c0_i32_0 = arith.constant 0 : i32
    %c0_i32_1 = arith.constant 0 : i32
    return %c0_i32, %c0_i32_0 : i32, i32
  }
  func.func @transform_26(%arg0: i32) -> (i32, i32) {
    %c0_i32 = arith.constant 0 : i32
    %c0_i32_0 = arith.constant 0 : i32
    %c0_i32_1 = arith.constant 0 : i32
    return %c0_i32, %c0_i32_0 : i32, i32
  }
  func.func @transform_27(%arg0: i32) -> (i32, i32) {
    %c0_i32 = arith.constant 0 : i32
    %c0_i32_0 = arith.constant 0 : i32
    return %arg0, %c0_i32 : i32, i32
  }
}

</mosaic_0001>

<llo_original>
// kernel: forward.1
$region0: #{forward.1}
  #allocation0 [shape = 'u32[]', space=smem, size = 0x4, offset = 0x4, fixed_abs, tag = 'smem constant byte address 0x4 - core index']
  #allocation1 [shape = 'u32[72,128]{1,0:T(1,128)}', space=vmem, size = 0x9000, scoped, tag = 'internal scratch']
  #allocation2 [shape = 'f32[289,8]{1,0:T(8,128)}', space=vmem, size = 0x25000, scoped, tag = 'scratch operand']
  #allocation3 [shape = 'f32[100,8]{1,0:T(8,128)}', space=vmem, size = 0xd000, scoped, tag = 'scratch operand']
  #allocation4 [shape = 'f32[100,8]{1,0:T(8,128)}', space=vmem, size = 0xd000, scoped, tag = 'scratch operand']
  #allocation5 [shape = 'f32[64,8]{1,0:T(8,128)}', space=vmem, size = 0x8000, scoped, tag = 'scratch operand']
  #allocation6 [shape = 'f32[16,8]{1,0:T(8,128)}', space=vmem, size = 0x2000, scoped, tag = 'scratch operand']
  #allocation7 [shape = 'f32[36,16]{1,0:T(8,128)}', space=vmem, size = 0x5000, scoped, tag = 'scratch operand']
  #allocation8 [shape = 'f32[16,16]{1,0:T(8,128)}', space=vmem, size = 0x2000, scoped, tag = 'scratch operand']
  #allocation9 [shape = 'f32[4,16]{1,0:T(4,128)}', space=vmem, size = 0x800, scoped, tag = 'scratch operand']
  #allocation10 [shape = 'f32[16,32]{1,0:T(8,128)}', space=vmem, size = 0x2000, scoped, tag = 'scratch operand']
  #allocation11 [shape = 'f32[4,32]{1,0:T(4,128)}', space=vmem, size = 0x800, scoped, tag = 'scratch operand']
  #allocation12 [shape = 'f32[1,32]{1,0:T(1,128)}', space=vmem, size = 0x200, scoped, tag = 'scratch operand']
  #allocation13 [shape = 'f32[9,64]{1,0:T(8,128)}', space=vmem, size = 0x2000, scoped, tag = 'scratch operand']
  #allocation14 [shape = 'f32[1,64]{1,0:T(1,128)}', space=vmem, size = 0x200, scoped, tag = 'scratch operand']
  %s0 = inlined_call_operand.vmem [shape: bf16[512,147], index: 0, kind: input, shape index: {}]
  %s1 = inlined_call_operand.vmem [shape: bf16[147,8], index: 1, kind: input, shape index: {}]
  %s2 = inlined_call_operand.vmem [shape: f32[1,8], index: 2, kind: input, shape index: {}]
  %s3 = inlined_call_operand.vmem [shape: bf16[72,8], index: 3, kind: input, shape index: {}]
  %s4 = inlined_call_operand.vmem [shape: f32[1,8], index: 4, kind: input, shape index: {}]
  %s5 = inlined_call_operand.vmem [shape: bf16[72,8], index: 5, kind: input, shape index: {}]
  %s6 = inlined_call_operand.vmem [shape: f32[1,8], index: 6, kind: input, shape index: {}]
  %s7 = inlined_call_operand.vmem [shape: bf16[8,16], index: 7, kind: input, shape index: {}]
  %s8 = inlined_call_operand.vmem [shape: f32[1,16], index: 8, kind: input, shape index: {}]
  %s9 = inlined_call_operand.vmem [shape: bf16[8,16], index: 9, kind: input, shape index: {}]
  %s10 = inlined_call_operand.vmem [shape: f32[1,16], index: 10, kind: input, shape index: {}]
  %s11 = inlined_call_operand.vmem [shape: bf16[144,16], index: 11, kind: input, shape index: {}]
  %s12 = inlined_call_operand.vmem [shape: f32[1,16], index: 12, kind: input, shape index: {}]
  %s13 = inlined_call_operand.vmem [shape: bf16[16,32], index: 13, kind: input, shape index: {}]
  %s14 = inlined_call_operand.vmem [shape: f32[1,32], index: 14, kind: input, shape index: {}]
  %s15 = inlined_call_operand.vmem [shape: bf16[16,32], index: 15, kind: input, shape index: {}]
  %s16 = inlined_call_operand.vmem [shape: f32[1,32], index: 16, kind: input, shape index: {}]
  %s17 = inlined_call_operand.vmem [shape: bf16[288,32], index: 17, kind: input, shape index: {}]
  %s18 = inlined_call_operand.vmem [shape: f32[1,32], index: 18, kind: input, shape index: {}]
  %s19 = inlined_call_operand.vmem [shape: bf16[32,64], index: 19, kind: input, shape index: {}]
  %s20 = inlined_call_operand.vmem [shape: f32[1,64], index: 20, kind: input, shape index: {}]
  %s21 = inlined_call_operand.vmem [shape: bf16[32,64], index: 21, kind: input, shape index: {}]
  %s22 = inlined_call_operand.vmem [shape: f32[1,64], index: 22, kind: input, shape index: {}]
  %s23 = inlined_call_operand.vmem [shape: bf16[576,64], index: 23, kind: input, shape index: {}]
  %s24 = inlined_call_operand.vmem [shape: f32[1,64], index: 24, kind: input, shape index: {}]
  %s25 = inlined_call_operand.vmem [shape: bf16[64,10], index: 25, kind: input, shape index: {}]
  %s26 = inlined_call_operand.vmem [shape: f32[1,10], index: 26, kind: input, shape index: {}]
  %s27 = inlined_call_operand.vmem [shape: f32[16,10], index: 27, kind: output, shape index: {}]
  %s28 = sld [smem:[#allocation0]]
  $region141: #{forward.1} parent=0
    _
  %s30 = ssub.s32 1, %s28
  %s31 = scalar_select 0, %s30, %s28
  loop: start=0, step=1, limit=4
  $region2: #{forward.1} parent=0 // loop_pre_header
    _
  $region3: #{forward.1} parent=0 // loop_header
    %s33 = sphi 0, %s37
    %p34 = scmp.ge.s32.totalorder %s33, 4
    %s43 = sphi 0, %s45
    %s46 = sphi 0, %s43
    %s47 = sphi 0, %s46
    %s63 = sphi 0, %s47
    %s67 = sphi 0, %s67
    %s69 = sphi 0, %s67
    %s70 = sphi 0, %s69
    %s84 = sphi 0, %s70
    %s88 = sphi 0, %s88
    %s90 = sphi 0, %s88
    %s91 = sphi 0, %s90
    %s105 = sphi 0, %s91
    %s109 = sphi 0, %s109
    %s111 = sphi 0, %s109
    %s112 = sphi 0, %s111
    %s126 = sphi 0, %s112
    %s130 = sphi 0, %s130
    %s132 = sphi 0, %s130
    %s133 = sphi 0, %s132
    %s147 = sphi 0, %s133
    %s151 = sphi 0, %s151
    %s153 = sphi 0, %s151
    %s154 = sphi 0, %s153
    %s168 = sphi 0, %s154
    %s172 = sphi 0, %s172
    %s174 = sphi 0, %s172
    %s175 = sphi 0, %s174
    %s189 = sphi 0, %s175
    %s193 = sphi 0, %s193
    %s195 = sphi 0, %s193
    %s196 = sphi 0, %s195
    %s210 = sphi 0, %s196
    %s214 = sphi 0, %s214
    %s216 = sphi 0, %s214
    %s217 = sphi 0, %s216
    %s231 = sphi 0, %s217
    %s235 = sphi 0, %s235
    %s237 = sphi 0, %s235
    %s238 = sphi 0, %s237
    %s252 = sphi 0, %s238
    %s256 = sphi 0, %s256
    %s258 = sphi 0, %s256
    %s259 = sphi 0, %s258
    %s273 = sphi 0, %s259
    %s277 = sphi 0, %s277
    %s279 = sphi 0, %s277
    %s280 = sphi 0, %s279
    %s294 = sphi 0, %s280
    %s298 = sphi 0, %s298
    %s300 = sphi 0, %s298
    %s301 = sphi 0, %s300
    %s315 = sphi 0, %s301
    %s319 = sphi 0, %s319
    %s321 = sphi 0, %s319
    %s322 = sphi 0, %s321
    %s336 = sphi 0, %s322
    %s340 = sphi 0, %s340
    %s342 = sphi 0, %s340
    %s343 = sphi 0, %s342
    %s357 = sphi 0, %s343
    %s361 = sphi 0, %s361
    %s363 = sphi 0, %s361
    %s364 = sphi 0, %s363
    %s378 = sphi 0, %s364
    %s382 = sphi 0, %s382
    %s384 = sphi 0, %s382
    %s385 = sphi 0, %s384
    %s399 = sphi 0, %s385
    %s403 = sphi 0, %s403
    %s405 = sphi 0, %s403
    %s406 = sphi 0, %s405
    %s420 = sphi 0, %s406
    %s424 = sphi 0, %s424
    %s426 = sphi 0, %s424
    %s427 = sphi 0, %s426
    %s441 = sphi 0, %s427
    %s445 = sphi 0, %s445
    %s447 = sphi 0, %s445
    %s448 = sphi 0, %s447
    %s462 = sphi 0, %s448
    %s466 = sphi 0, %s466
    %s468 = sphi 0, %s466
    %s469 = sphi 0, %s468
    %s483 = sphi 0, %s469
    %s487 = sphi 0, %s487
    %s489 = sphi 0, %s487
    %s490 = sphi 0, %s489
    %s504 = sphi 0, %s490
    %s508 = sphi 0, %s508
    %s510 = sphi 0, %s508
    %s511 = sphi 0, %s510
    %s525 = sphi 0, %s511
    %s529 = sphi 0, %s529
    %s531 = sphi 0, %s529
    %s532 = sphi 0, %s531
    %s546 = sphi 0, %s532
    %s550 = sphi 0, %s550
    %s552 = sphi 0, %s550
    %s553 = sphi 0, %s552
    %s567 = sphi 0, %s553
    %s571 = sphi 0, %s571
    %s573 = sphi 0, %s571
    %s574 = sphi 0, %s573
    %s588 = sphi 0, %s574
    %s592 = sphi 0, %s592
    %s594 = sphi 0, %s592
    %s595 = sphi 0, %s594
    %s609 = sphi 0, %s595
    %s615 = sphi 0, %s617
    %s618 = sphi 0, %s615
    %s619 = sphi 0, %s618
    %s635 = sphi 0, %s619
  $region4: #{forward.1} parent=0 // loop_header_branch
    %36 = sbr.rel (%p34) target = $region8
  $region5: #{forward.1} parent=0 // loop_body
    %s38 = ssub.s32 %s33, 1
    %s39 = ssub.s32 %s33, 2
    %s40 = sadd.s32 %s33, 1
    %s41 = ssub.s32 %s33, %s40
    %p42 = scmp.eq.s32.totalorder %s41, 0
    %s44 = sadd.s32 %s43, 1
    %s45 = scalar_select %p42, %s43, %s44
    %p48 = pneg %p42
    %p49 = scmp.eq.s32.totalorder %s33, 1
    %p50 = por %p48, %p49
    %p51 = scmp.ne.s32.totalorder %s43, %s46
    %p52 = scmp.eq.s32.totalorder %s33, 0
    %p53 = por %p51, %p52
    %p54 = scmp.ne.s32.totalorder %s43, %s46
    %p55 = scmp.eq.s32.totalorder %s38, 1
    %p56 = por %p54, %p55
    %p57 = scmp.ne.s32.totalorder %s46, %s47
    %p58 = scmp.eq.s32.totalorder %s38, 0
    %p59 = por %p57, %p58
    %p60 = scmp.ne.s32.totalorder %s46, %s47
    %p61 = scmp.eq.s32.totalorder %s39, 1
    %p62 = por %p60, %p61
    %p64 = scmp.ne.s32.totalorder %s47, %s63
    %p65 = scmp.eq.s32.totalorder %s39, 0
    %p66 = por %p64, %p65
    %s68 = sadd.s32 %s67, 1
    %p71 = scmp.eq.s32.totalorder %s33, 1
    %p72 = scmp.ne.s32.totalorder %s67, %s69
    %p73 = scmp.eq.s32.totalorder %s33, 0
    %p74 = por %p72, %p73
    %p75 = scmp.ne.s32.totalorder %s67, %s69
    %p76 = scmp.eq.s32.totalorder %s38, 1
    %p77 = por %p75, %p76
    %p78 = scmp.ne.s32.totalorder %s69, %s70
    %p79 = scmp.eq.s32.totalorder %s38, 0
    %p80 = por %p78, %p79
    %p81 = scmp.ne.s32.totalorder %s69, %s70
    %p82 = scmp.eq.s32.totalorder %s39, 1
    %p83 = por %p81, %p82
    %p85 = scmp.ne.s32.totalorder %s70, %s84
    %p86 = scmp.eq.s32.totalorder %s39, 0
    %p87 = por %p85, %p86
    %s89 = sadd.s32 %s88, 1
    %p92 = scmp.eq.s32.totalorder %s33, 1
    %p93 = scmp.ne.s32.totalorder %s88, %s90
    %p94 = scmp.eq.s32.totalorder %s33, 0
    %p95 = por %p93, %p94
    %p96 = scmp.ne.s32.totalorder %s88, %s90
    %p97 = scmp.eq.s32.totalorder %s38, 1
    %p98 = por %p96, %p97
    %p99 = scmp.ne.s32.totalorder %s90, %s91
    %p100 = scmp.eq.s32.totalorder %s38, 0
    %p101 = por %p99, %p100
    %p102 = scmp.ne.s32.totalorder %s90, %s91
    %p103 = scmp.eq.s32.totalorder %s39, 1
    %p104 = por %p102, %p103
    %p106 = scmp.ne.s32.totalorder %s91, %s105
    %p107 = scmp.eq.s32.totalorder %s39, 0
    %p108 = por %p106, %p107
    %s110 = sadd.s32 %s109, 1
    %p113 = scmp.eq.s32.totalorder %s33, 1
    %p114 = scmp.ne.s32.totalorder %s109, %s111
    %p115 = scmp.eq.s32.totalorder %s33, 0
    %p116 = por %p114, %p115
    %p117 = scmp.ne.s32.totalorder %s109, %s111
    %p118 = scmp.eq.s32.totalorder %s38, 1
    %p119 = por %p117, %p118
    %p120 = scmp.ne.s32.totalorder %s111, %s112
    %p121 = scmp.eq.s32.totalorder %s38, 0
    %p122 = por %p120, %p121
    %p123 = scmp.ne.s32.totalorder %s111, %s112
    %p124 = scmp.eq.s32.totalorder %s39, 1
    %p125 = por %p123, %p124
    %p127 = scmp.ne.s32.totalorder %s112, %s126
    %p128 = scmp.eq.s32.totalorder %s39, 0
    %p129 = por %p127, %p128
    %s131 = sadd.s32 %s130, 1
    %p134 = scmp.eq.s32.totalorder %s33, 1
    %p135 = scmp.ne.s32.totalorder %s130, %s132
    %p136 = scmp.eq.s32.totalorder %s33, 0
    %p137 = por %p135, %p136
    %p138 = scmp.ne.s32.totalorder %s130, %s132
    %p139 = scmp.eq.s32.totalorder %s38, 1
    %p140 = por %p138, %p139
    %p141 = scmp.ne.s32.totalorder %s132, %s133
    %p142 = scmp.eq.s32.totalorder %s38, 0
    %p143 = por %p141, %p142
    %p144 = scmp.ne.s32.totalorder %s132, %s133
    %p145 = scmp.eq.s32.totalorder %s39, 1
    %p146 = por %p144, %p145
    %p148 = scmp.ne.s32.totalorder %s133, %s147
    %p149 = scmp.eq.s32.totalorder %s39, 0
    %p150 = por %p148, %p149
    %s152 = sadd.s32 %s151, 1
    %p155 = scmp.eq.s32.totalorder %s33, 1
    %p156 = scmp.ne.s32.totalorder %s151, %s153
    %p157 = scmp.eq.s32.totalorder %s33, 0
    %p158 = por %p156, %p157
    %p159 = scmp.ne.s32.totalorder %s151, %s153
    %p160 = scmp.eq.s32.totalorder %s38, 1
    %p161 = por %p159, %p160
    %p162 = scmp.ne.s32.totalorder %s153, %s154
    %p163 = scmp.eq.s32.totalorder %s38, 0
    %p164 = por %p162, %p163
    %p165 = scmp.ne.s32.totalorder %s153, %s154
    %p166 = scmp.eq.s32.totalorder %s39, 1
    %p167 = por %p165, %p166
    %p169 = scmp.ne.s32.totalorder %s154, %s168
    %p170 = scmp.eq.s32.totalorder %s39, 0
    %p171 = por %p169, %p170
    %s173 = sadd.s32 %s172, 1
    %p176 = scmp.eq.s32.totalorder %s33, 1
    %p177 = scmp.ne.s32.totalorder %s172, %s174
    %p178 = scmp.eq.s32.totalorder %s33, 0
    %p179 = por %p177, %p178
    %p180 = scmp.ne.s32.totalorder %s172, %s174
    %p181 = scmp.eq.s32.totalorder %s38, 1
    %p182 = por %p180, %p181
    %p183 = scmp.ne.s32.totalorder %s174, %s175
    %p184 = scmp.eq.s32.totalorder %s38, 0
    %p185 = por %p183, %p184
    %p186 = scmp.ne.s32.totalorder %s174, %s175
    %p187 = scmp.eq.s32.totalorder %s39, 1
    %p188 = por %p186, %p187
    %p190 = scmp.ne.s32.totalorder %s175, %s189
    %p191 = scmp.eq.s32.totalorder %s39, 0
    %p192 = por %p190, %p191
    %s194 = sadd.s32 %s193, 1
    %p197 = scmp.eq.s32.totalorder %s33, 1
    %p198 = scmp.ne.s32.totalorder %s193, %s195
    %p199 = scmp.eq.s32.totalorder %s33, 0
    %p200 = por %p198, %p199
    %p201 = scmp.ne.s32.totalorder %s193, %s195
    %p202 = scmp.eq.s32.totalorder %s38, 1
    %p203 = por %p201, %p202
    %p204 = scmp.ne.s32.totalorder %s195, %s196
    %p205 = scmp.eq.s32.totalorder %s38, 0
    %p206 = por %p204, %p205
    %p207 = scmp.ne.s32.totalorder %s195, %s196
    %p208 = scmp.eq.s32.totalorder %s39, 1
    %p209 = por %p207, %p208
    %p211 = scmp.ne.s32.totalorder %s196, %s210
    %p212 = scmp.eq.s32.totalorder %s39, 0
    %p213 = por %p211, %p212
    %s215 = sadd.s32 %s214, 1
    %p218 = scmp.eq.s32.totalorder %s33, 1
    %p219 = scmp.ne.s32.totalorder %s214, %s216
    %p220 = scmp.eq.s32.totalorder %s33, 0
    %p221 = por %p219, %p220
    %p222 = scmp.ne.s32.totalorder %s214, %s216
    %p223 = scmp.eq.s32.totalorder %s38, 1
    %p224 = por %p222, %p223
    %p225 = scmp.ne.s32.totalorder %s216, %s217
    %p226 = scmp.eq.s32.totalorder %s38, 0
    %p227 = por %p225, %p226
    %p228 = scmp.ne.s32.totalorder %s216, %s217
    %p229 = scmp.eq.s32.totalorder %s39, 1
    %p230 = por %p228, %p229
    %p232 = scmp.ne.s32.totalorder %s217, %s231
    %p233 = scmp.eq.s32.totalorder %s39, 0
    %p234 = por %p232, %p233
    %s236 = sadd.s32 %s235, 1
    %p239 = scmp.eq.s32.totalorder %s33, 1
    %p240 = scmp.ne.s32.totalorder %s235, %s237
    %p241 = scmp.eq.s32.totalorder %s33, 0
    %p242 = por %p240, %p241
    %p243 = scmp.ne.s32.totalorder %s235, %s237
    %p244 = scmp.eq.s32.totalorder %s38, 1
    %p245 = por %p243, %p244
    %p246 = scmp.ne.s32.totalorder %s237, %s238
    %p247 = scmp.eq.s32.totalorder %s38, 0
    %p248 = por %p246, %p247
    %p249 = scmp.ne.s32.totalorder %s237, %s238
    %p250 = scmp.eq.s32.totalorder %s39, 1
    %p251 = por %p249, %p250
    %p253 = scmp.ne.s32.totalorder %s238, %s252
    %p254 = scmp.eq.s32.totalorder %s39, 0
    %p255 = por %p253, %p254
    %s257 = sadd.s32 %s256, 1
    %p260 = scmp.eq.s32.totalorder %s33, 1
    %p261 = scmp.ne.s32.totalorder %s256, %s258
    %p262 = scmp.eq.s32.totalorder %s33, 0
    %p263 = por %p261, %p262
    %p264 = scmp.ne.s32.totalorder %s256, %s258
    %p265 = scmp.eq.s32.totalorder %s38, 1
    %p266 = por %p264, %p265
    %p267 = scmp.ne.s32.totalorder %s258, %s259
    %p268 = scmp.eq.s32.totalorder %s38, 0
    %p269 = por %p267, %p268
    %p270 = scmp.ne.s32.totalorder %s258, %s259
    %p271 = scmp.eq.s32.totalorder %s39, 1
    %p272 = por %p270, %p271
    %p274 = scmp.ne.s32.totalorder %s259, %s273
    %p275 = scmp.eq.s32.totalorder %s39, 0
    %p276 = por %p274, %p275
    %s278 = sadd.s32 %s277, 1
    %p281 = scmp.eq.s32.totalorder %s33, 1
    %p282 = scmp.ne.s32.totalorder %s277, %s279
    %p283 = scmp.eq.s32.totalorder %s33, 0
    %p284 = por %p282, %p283
    %p285 = scmp.ne.s32.totalorder %s277, %s279
    %p286 = scmp.eq.s32.totalorder %s38, 1
    %p287 = por %p285, %p286
    %p288 = scmp.ne.s32.totalorder %s279, %s280
    %p289 = scmp.eq.s32.totalorder %s38, 0
    %p290 = por %p288, %p289
    %p291 = scmp.ne.s32.totalorder %s279, %s280
    %p292 = scmp.eq.s32.totalorder %s39, 1
    %p293 = por %p291, %p292
    %p295 = scmp.ne.s32.totalorder %s280, %s294
    %p296 = scmp.eq.s32.totalorder %s39, 0
    %p297 = por %p295, %p296
    %s299 = sadd.s32 %s298, 1
    %p302 = scmp.eq.s32.totalorder %s33, 1
    %p303 = scmp.ne.s32.totalorder %s298, %s300
    %p304 = scmp.eq.s32.totalorder %s33, 0
    %p305 = por %p303, %p304
    %p306 = scmp.ne.s32.totalorder %s298, %s300
    %p307 = scmp.eq.s32.totalorder %s38, 1
    %p308 = por %p306, %p307
    %p309 = scmp.ne.s32.totalorder %s300, %s301
    %p310 = scmp.eq.s32.totalorder %s38, 0
    %p311 = por %p309, %p310
    %p312 = scmp.ne.s32.totalorder %s300, %s301
    %p313 = scmp.eq.s32.totalorder %s39, 1
    %p314 = por %p312, %p313
    %p316 = scmp.ne.s32.totalorder %s301, %s315
    %p317 = scmp.eq.s32.totalorder %s39, 0
    %p318 = por %p316, %p317
    %s320 = sadd.s32 %s319, 1
    %p323 = scmp.eq.s32.totalorder %s33, 1
    %p324 = scmp.ne.s32.totalorder %s319, %s321
    %p325 = scmp.eq.s32.totalorder %s33, 0
    %p326 = por %p324, %p325
    %p327 = scmp.ne.s32.totalorder %s319, %s321
    %p328 = scmp.eq.s32.totalorder %s38, 1
    %p329 = por %p327, %p328
    %p330 = scmp.ne.s32.totalorder %s321, %s322
    %p331 = scmp.eq.s32.totalorder %s38, 0
    %p332 = por %p330, %p331
    %p333 = scmp.ne.s32.totalorder %s321, %s322
    %p334 = scmp.eq.s32.totalorder %s39, 1
    %p335 = por %p333, %p334
    %p337 = scmp.ne.s32.totalorder %s322, %s336
    %p338 = scmp.eq.s32.totalorder %s39, 0
    %p339 = por %p337, %p338
    %s341 = sadd.s32 %s340, 1
    %p344 = scmp.eq.s32.totalorder %s33, 1
    %p345 = scmp.ne.s32.totalorder %s340, %s342
    %p346 = scmp.eq.s32.totalorder %s33, 0
    %p347 = por %p345, %p346
    %p348 = scmp.ne.s32.totalorder %s340, %s342
    %p349 = scmp.eq.s32.totalorder %s38, 1
    %p350 = por %p348, %p349
    %p351 = scmp.ne.s32.totalorder %s342, %s343
    %p352 = scmp.eq.s32.totalorder %s38, 0
    %p353 = por %p351, %p352
    %p354 = scmp.ne.s32.totalorder %s342, %s343
    %p355 = scmp.eq.s32.totalorder %s39, 1
    %p356 = por %p354, %p355
    %p358 = scmp.ne.s32.totalorder %s343, %s357
    %p359 = scmp.eq.s32.totalorder %s39, 0
    %p360 = por %p358, %p359
    %s362 = sadd.s32 %s361, 1
    %p365 = scmp.eq.s32.totalorder %s33, 1
    %p366 = scmp.ne.s32.totalorder %s361, %s363
    %p367 = scmp.eq.s32.totalorder %s33, 0
    %p368 = por %p366, %p367
    %p369 = scmp.ne.s32.totalorder %s361, %s363
    %p370 = scmp.eq.s32.totalorder %s38, 1
    %p371 = por %p369, %p370
    %p372 = scmp.ne.s32.totalorder %s363, %s364
    %p373 = scmp.eq.s32.totalorder %s38, 0
    %p374 = por %p372, %p373
    %p375 = scmp.ne.s32.totalorder %s363, %s364
    %p376 = scmp.eq.s32.totalorder %s39, 1
    %p377 = por %p375, %p376
    %p379 = scmp.ne.s32.totalorder %s364, %s378
    %p380 = scmp.eq.s32.totalorder %s39, 0
    %p381 = por %p379, %p380
    %s383 = sadd.s32 %s382, 1
    %p386 = scmp.eq.s32.totalorder %s33, 1
    %p387 = scmp.ne.s32.totalorder %s382, %s384
    %p388 = scmp.eq.s32.totalorder %s33, 0
    %p389 = por %p387, %p388
    %p390 = scmp.ne.s32.totalorder %s382, %s384
    %p391 = scmp.eq.s32.totalorder %s38, 1
    %p392 = por %p390, %p391
    %p393 = scmp.ne.s32.totalorder %s384, %s385
    %p394 = scmp.eq.s32.totalorder %s38, 0
    %p395 = por %p393, %p394
    %p396 = scmp.ne.s32.totalorder %s384, %s385
    %p397 = scmp.eq.s32.totalorder %s39, 1
    %p398 = por %p396, %p397
    %p400 = scmp.ne.s32.totalorder %s385, %s399
    %p401 = scmp.eq.s32.totalorder %s39, 0
    %p402 = por %p400, %p401
    %s404 = sadd.s32 %s403, 1
    %p407 = scmp.eq.s32.totalorder %s33, 1
    %p408 = scmp.ne.s32.totalorder %s403, %s405
    %p409 = scmp.eq.s32.totalorder %s33, 0
    %p410 = por %p408, %p409
    %p411 = scmp.ne.s32.totalorder %s403, %s405
    %p412 = scmp.eq.s32.totalorder %s38, 1
    %p413 = por %p411, %p412
    %p414 = scmp.ne.s32.totalorder %s405, %s406
    %p415 = scmp.eq.s32.totalorder %s38, 0
    %p416 = por %p414, %p415
    %p417 = scmp.ne.s32.totalorder %s405, %s406
    %p418 = scmp.eq.s32.totalorder %s39, 1
    %p419 = por %p417, %p418
    %p421 = scmp.ne.s32.totalorder %s406, %s420
    %p422 = scmp.eq.s32.totalorder %s39, 0
    %p423 = por %p421, %p422
    %s425 = sadd.s32 %s424, 1
    %p428 = scmp.eq.s32.totalorder %s33, 1
    %p429 = scmp.ne.s32.totalorder %s424, %s426
    %p430 = scmp.eq.s32.totalorder %s33, 0
    %p431 = por %p429, %p430
    %p432 = scmp.ne.s32.totalorder %s424, %s426
    %p433 = scmp.eq.s32.totalorder %s38, 1
    %p434 = por %p432, %p433
    %p435 = scmp.ne.s32.totalorder %s426, %s427
    %p436 = scmp.eq.s32.totalorder %s38, 0
    %p437 = por %p435, %p436
    %p438 = scmp.ne.s32.totalorder %s426, %s427
    %p439 = scmp.eq.s32.totalorder %s39, 1
    %p440 = por %p438, %p439
    %p442 = scmp.ne.s32.totalorder %s427, %s441
    %p443 = scmp.eq.s32.totalorder %s39, 0
    %p444 = por %p442, %p443
    %s446 = sadd.s32 %s445, 1
    %p449 = scmp.eq.s32.totalorder %s33, 1
    %p450 = scmp.ne.s32.totalorder %s445, %s447
    %p451 = scmp.eq.s32.totalorder %s33, 0
    %p452 = por %p450, %p451
    %p453 = scmp.ne.s32.totalorder %s445, %s447
    %p454 = scmp.eq.s32.totalorder %s38, 1
    %p455 = por %p453, %p454
    %p456 = scmp.ne.s32.totalorder %s447, %s448
    %p457 = scmp.eq.s32.totalorder %s38, 0
    %p458 = por %p456, %p457
    %p459 = scmp.ne.s32.totalorder %s447, %s448
    %p460 = scmp.eq.s32.totalorder %s39, 1
    %p461 = por %p459, %p460
    %p463 = scmp.ne.s32.totalorder %s448, %s462
    %p464 = scmp.eq.s32.totalorder %s39, 0
    %p465 = por %p463, %p464
    %s467 = sadd.s32 %s466, 1
    %p470 = scmp.eq.s32.totalorder %s33, 1
    %p471 = scmp.ne.s32.totalorder %s466, %s468
    %p472 = scmp.eq.s32.totalorder %s33, 0
    %p473 = por %p471, %p472
    %p474 = scmp.ne.s32.totalorder %s466, %s468
    %p475 = scmp.eq.s32.totalorder %s38, 1
    %p476 = por %p474, %p475
    %p477 = scmp.ne.s32.totalorder %s468, %s469
    %p478 = scmp.eq.s32.totalorder %s38, 0
    %p479 = por %p477, %p478
    %p480 = scmp.ne.s32.totalorder %s468, %s469
    %p481 = scmp.eq.s32.totalorder %s39, 1
    %p482 = por %p480, %p481
    %p484 = scmp.ne.s32.totalorder %s469, %s483
    %p485 = scmp.eq.s32.totalorder %s39, 0
    %p486 = por %p484, %p485
    %s488 = sadd.s32 %s487, 1
    %p491 = scmp.eq.s32.totalorder %s33, 1
    %p492 = scmp.ne.s32.totalorder %s487, %s489
    %p493 = scmp.eq.s32.totalorder %s33, 0
    %p494 = por %p492, %p493
    %p495 = scmp.ne.s32.totalorder %s487, %s489
    %p496 = scmp.eq.s32.totalorder %s38, 1
    %p497 = por %p495, %p496
    %p498 = scmp.ne.s32.totalorder %s489, %s490
    %p499 = scmp.eq.s32.totalorder %s38, 0
    %p500 = por %p498, %p499
    %p501 = scmp.ne.s32.totalorder %s489, %s490
    %p502 = scmp.eq.s32.totalorder %s39, 1
    %p503 = por %p501, %p502
    %p505 = scmp.ne.s32.totalorder %s490, %s504
    %p506 = scmp.eq.s32.totalorder %s39, 0
    %p507 = por %p505, %p506
    %s509 = sadd.s32 %s508, 1
    %p512 = scmp.eq.s32.totalorder %s33, 1
    %p513 = scmp.ne.s32.totalorder %s508, %s510
    %p514 = scmp.eq.s32.totalorder %s33, 0
    %p515 = por %p513, %p514
    %p516 = scmp.ne.s32.totalorder %s508, %s510
    %p517 = scmp.eq.s32.totalorder %s38, 1
    %p518 = por %p516, %p517
    %p519 = scmp.ne.s32.totalorder %s510, %s511
    %p520 = scmp.eq.s32.totalorder %s38, 0
    %p521 = por %p519, %p520
    %p522 = scmp.ne.s32.totalorder %s510, %s511
    %p523 = scmp.eq.s32.totalorder %s39, 1
    %p524 = por %p522, %p523
    %p526 = scmp.ne.s32.totalorder %s511, %s525
    %p527 = scmp.eq.s32.totalorder %s39, 0
    %p528 = por %p526, %p527
    %s530 = sadd.s32 %s529, 1
    %p533 = scmp.eq.s32.totalorder %s33, 1
    %p534 = scmp.ne.s32.totalorder %s529, %s531
    %p535 = scmp.eq.s32.totalorder %s33, 0
    %p536 = por %p534, %p535
    %p537 = scmp.ne.s32.totalorder %s529, %s531
    %p538 = scmp.eq.s32.totalorder %s38, 1
    %p539 = por %p537, %p538
    %p540 = scmp.ne.s32.totalorder %s531, %s532
    %p541 = scmp.eq.s32.totalorder %s38, 0
    %p542 = por %p540, %p541
    %p543 = scmp.ne.s32.totalorder %s531, %s532
    %p544 = scmp.eq.s32.totalorder %s39, 1
    %p545 = por %p543, %p544
    %p547 = scmp.ne.s32.totalorder %s532, %s546
    %p548 = scmp.eq.s32.totalorder %s39, 0
    %p549 = por %p547, %p548
    %s551 = sadd.s32 %s550, 1
    %p554 = scmp.eq.s32.totalorder %s33, 1
    %p555 = scmp.ne.s32.totalorder %s550, %s552
    %p556 = scmp.eq.s32.totalorder %s33, 0
    %p557 = por %p555, %p556
    %p558 = scmp.ne.s32.totalorder %s550, %s552
    %p559 = scmp.eq.s32.totalorder %s38, 1
    %p560 = por %p558, %p559
    %p561 = scmp.ne.s32.totalorder %s552, %s553
    %p562 = scmp.eq.s32.totalorder %s38, 0
    %p563 = por %p561, %p562
    %p564 = scmp.ne.s32.totalorder %s552, %s553
    %p565 = scmp.eq.s32.totalorder %s39, 1
    %p566 = por %p564, %p565
    %p568 = scmp.ne.s32.totalorder %s553, %s567
    %p569 = scmp.eq.s32.totalorder %s39, 0
    %p570 = por %p568, %p569
    %s572 = sadd.s32 %s571, 1
    %p575 = scmp.eq.s32.totalorder %s33, 1
    %p576 = scmp.ne.s32.totalorder %s571, %s573
    %p577 = scmp.eq.s32.totalorder %s33, 0
    %p578 = por %p576, %p577
    %p579 = scmp.ne.s32.totalorder %s571, %s573
    %p580 = scmp.eq.s32.totalorder %s38, 1
    %p581 = por %p579, %p580
    %p582 = scmp.ne.s32.totalorder %s573, %s574
    %p583 = scmp.eq.s32.totalorder %s38, 0
    %p584 = por %p582, %p583
    %p585 = scmp.ne.s32.totalorder %s573, %s574
    %p586 = scmp.eq.s32.totalorder %s39, 1
    %p587 = por %p585, %p586
    %p589 = scmp.ne.s32.totalorder %s574, %s588
    %p590 = scmp.eq.s32.totalorder %s39, 0
    %p591 = por %p589, %p590
    %s593 = sadd.s32 %s592, 1
    %p596 = scmp.eq.s32.totalorder %s33, 1
    %p597 = scmp.ne.s32.totalorder %s592, %s594
    %p598 = scmp.eq.s32.totalorder %s33, 0
    %p599 = por %p597, %p598
    %p600 = scmp.ne.s32.totalorder %s592, %s594
    %p601 = scmp.eq.s32.totalorder %s38, 1
    %p602 = por %p600, %p601
    %p603 = scmp.ne.s32.totalorder %s594, %s595
    %p604 = scmp.eq.s32.totalorder %s38, 0
    %p605 = por %p603, %p604
    %p606 = scmp.ne.s32.totalorder %s594, %s595
    %p607 = scmp.eq.s32.totalorder %s39, 1
    %p608 = por %p606, %p607
    %p610 = scmp.ne.s32.totalorder %s595, %s609
    %p611 = scmp.eq.s32.totalorder %s39, 0
    %p612 = por %p610, %p611
    %s613 = ssub.s32 %s33, %s40
    %p614 = scmp.eq.s32.totalorder %s613, 0
    %s616 = sadd.s32 %s615, 1
    %s617 = scalar_select %p614, %s615, %s616
    %p620 = pneg %p614
    %p621 = scmp.eq.s32.totalorder %s33, 1
    %p622 = por %p620, %p621
    %p623 = scmp.ne.s32.totalorder %s615, %s618
    %p624 = scmp.eq.s32.totalorder %s33, 0
    %p625 = por %p623, %p624
    %p626 = scmp.ne.s32.totalorder %s615, %s618
    %p627 = scmp.eq.s32.totalorder %s38, 1
    %p628 = por %p626, %p627
    %p629 = scmp.ne.s32.totalorder %s618, %s619
    %p630 = scmp.eq.s32.totalorder %s38, 0
    %p631 = por %p629, %p630
    %p632 = scmp.ne.s32.totalorder %s618, %s619
    %p633 = scmp.eq.s32.totalorder %s39, 1
    %p634 = por %p632, %p633
    %p636 = scmp.ne.s32.totalorder %s619, %s635
    %p637 = scmp.eq.s32.totalorder %s39, 0
    %p638 = por %p636, %p637
    %p639 = scmp.le.s32.totalorder 1, %s33
    %p640 = scmp.lt.s32.totalorder %s33, 3
    %p641 = pnand %p639, %p640
    %p642 = pneg %p641
    // Predicated region
    $region9: #{forward.1} parent=5 // pred_check
      _
    $region10: #{forward.1} parent=5 // pred_check_branch
      %644 = sbr.rel (%p641) target = $region12
    $region11: #{forward.1} parent=5 // pred_region
      %s645 = ssub.s32 %s33, 1
      // Predicated region
      $region13: #{forward.1} parent=11 // pred_check
        %p646 = pneg %p80
      $region14: #{forward.1} parent=11 // pred_check_branch
        %648 = sbr.rel (%p646) target = $region16
      $region15: #{forward.1} parent=11 // pred_region
        _
      $region16: #{forward.1} parent=11 // pred_fallthru
        _
      // Predicated region
      $region17: #{forward.1} parent=11 // pred_check
        %p649 = pneg %p101
      $region18: #{forward.1} parent=11 // pred_check_branch
        %651 = sbr.rel (%p649) target = $region20
      $region19: #{forward.1} parent=11 // pred_region
        _
      $region20: #{forward.1} parent=11 // pred_fallthru
        _
      // Predicated region
      $region21: #{forward.1} parent=11 // pred_check
        %p652 = pneg %p122
      $region22: #{forward.1} parent=11 // pred_check_branch
        %654 = sbr.rel (%p652) target = $region24
      $region23: #{forward.1} parent=11 // pred_region
        _
      $region24: #{forward.1} parent=11 // pred_fallthru
        _
      // Predicated region
      $region25: #{forward.1} parent=11 // pred_check
        %p655 = pneg %p143
      $region26: #{forward.1} parent=11 // pred_check_branch
        %657 = sbr.rel (%p655) target = $region28
      $region27: #{forward.1} parent=11 // pred_region
        _
      $region28: #{forward.1} parent=11 // pred_fallthru
        _
      // Predicated region
      $region29: #{forward.1} parent=11 // pred_check
        %p658 = pneg %p164
      $region30: #{forward.1} parent=11 // pred_check_branch
        %660 = sbr.rel (%p658) target = $region32
      $region31: #{forward.1} parent=11 // pred_region
        _
      $region32: #{forward.1} parent=11 // pred_fallthru
        _
      // Predicated region
      $region33: #{forward.1} parent=11 // pred_check
        %p661 = pneg %p185
      $region34: #{forward.1} parent=11 // pred_check_branch
        %663 = sbr.rel (%p661) target = $region36
      $region35: #{forward.1} parent=11 // pred_region
        _
      $region36: #{forward.1} parent=11 // pred_fallthru
        _
      // Predicated region
      $region37: #{forward.1} parent=11 // pred_check
        %p664 = pneg %p206
      $region38: #{forward.1} parent=11 // pred_check_branch
        %666 = sbr.rel (%p664) target = $region40
      $region39: #{forward.1} parent=11 // pred_region
        _
      $region40: #{forward.1} parent=11 // pred_fallthru
        _
      // Predicated region
      $region41: #{forward.1} parent=11 // pred_check
        %p667 = pneg %p227
      $region42: #{forward.1} parent=11 // pred_check_branch
        %669 = sbr.rel (%p667) target = $region44
      $region43: #{forward.1} parent=11 // pred_region
        _
      $region44: #{forward.1} parent=11 // pred_fallthru
        _
      // Predicated region
      $region45: #{forward.1} parent=11 // pred_check
        %p670 = pneg %p248
      $region46: #{forward.1} parent=11 // pred_check_branch
        %672 = sbr.rel (%p670) target = $region48
      $region47: #{forward.1} parent=11 // pred_region
        _
      $region48: #{forward.1} parent=11 // pred_fallthru
        _
      // Predicated region
      $region49: #{forward.1} parent=11 // pred_check
        %p673 = pneg %p269
      $region50: #{forward.1} parent=11 // pred_check_branch
        %675 = sbr.rel (%p673) target = $region52
      $region51: #{forward.1} parent=11 // pred_region
        _
      $region52: #{forward.1} parent=11 // pred_fallthru
        _
      // Predicated region
      $region53: #{forward.1} parent=11 // pred_check
        %p676 = pneg %p290
      $region54: #{forward.1} parent=11 // pred_check_branch
        %678 = sbr.rel (%p676) target = $region56
      $region55: #{forward.1} parent=11 // pred_region
        _
      $region56: #{forward.1} parent=11 // pred_fallthru
        _
      // Predicated region
      $region57: #{forward.1} parent=11 // pred_check
        %p679 = pneg %p311
      $region58: #{forward.1} parent=11 // pred_check_branch
        %681 = sbr.rel (%p679) target = $region60
      $region59: #{forward.1} parent=11 // pred_region
        _
      $region60: #{forward.1} parent=11 // pred_fallthru
        _
      // Predicated region
      $region61: #{forward.1} parent=11 // pred_check
        %p682 = pneg %p332
      $region62: #{forward.1} parent=11 // pred_check_branch
        %684 = sbr.rel (%p682) target = $region64
      $region63: #{forward.1} parent=11 // pred_region
        _
      $region64: #{forward.1} parent=11 // pred_fallthru
        _
      // Predicated region
      $region65: #{forward.1} parent=11 // pred_check
        %p685 = pneg %p353
      $region66: #{forward.1} parent=11 // pred_check_branch
        %687 = sbr.rel (%p685) target = $region68
      $region67: #{forward.1} parent=11 // pred_region
        _
      $region68: #{forward.1} parent=11 // pred_fallthru
        _
      // Predicated region
      $region69: #{forward.1} parent=11 // pred_check
        %p688 = pneg %p374
      $region70: #{forward.1} parent=11 // pred_check_branch
        %690 = sbr.rel (%p688) target = $region72
      $region71: #{forward.1} parent=11 // pred_region
        _
      $region72: #{forward.1} parent=11 // pred_fallthru
        _
      // Predicated region
      $region73: #{forward.1} parent=11 // pred_check
        %p691 = pneg %p395
      $region74: #{forward.1} parent=11 // pred_check_branch
        %693 = sbr.rel (%p691) target = $region76
      $region75: #{forward.1} parent=11 // pred_region
        _
      $region76: #{forward.1} parent=11 // pred_fallthru
        _
      // Predicated region
      $region77: #{forward.1} parent=11 // pred_check
        %p694 = pneg %p416
      $region78: #{forward.1} parent=11 // pred_check_branch
        %696 = sbr.rel (%p694) target = $region80
      $region79: #{forward.1} parent=11 // pred_region
        _
      $region80: #{forward.1} parent=11 // pred_fallthru
        _
      // Predicated region
      $region81: #{forward.1} parent=11 // pred_check
        %p697 = pneg %p437
      $region82: #{forward.1} parent=11 // pred_check_branch
        %699 = sbr.rel (%p697) target = $region84
      $region83: #{forward.1} parent=11 // pred_region
        _
      $region84: #{forward.1} parent=11 // pred_fallthru
        _
      // Predicated region
      $region85: #{forward.1} parent=11 // pred_check
        %p700 = pneg %p458
      $region86: #{forward.1} parent=11 // pred_check_branch
        %702 = sbr.rel (%p700) target = $region88
      $region87: #{forward.1} parent=11 // pred_region
        _
      $region88: #{forward.1} parent=11 // pred_fallthru
        _
      // Predicated region
      $region89: #{forward.1} parent=11 // pred_check
        %p703 = pneg %p479
      $region90: #{forward.1} parent=11 // pred_check_branch
        %705 = sbr.rel (%p703) target = $region92
      $region91: #{forward.1} parent=11 // pred_region
        _
      $region92: #{forward.1} parent=11 // pred_fallthru
        _
      // Predicated region
      $region93: #{forward.1} parent=11 // pred_check
        %p706 = pneg %p500
      $region94: #{forward.1} parent=11 // pred_check_branch
        %708 = sbr.rel (%p706) target = $region96
      $region95: #{forward.1} parent=11 // pred_region
        _
      $region96: #{forward.1} parent=11 // pred_fallthru
        _
      // Predicated region
      $region97: #{forward.1} parent=11 // pred_check
        %p709 = pneg %p521
      $region98: #{forward.1} parent=11 // pred_check_branch
        %711 = sbr.rel (%p709) target = $region100
      $region99: #{forward.1} parent=11 // pred_region
        _
      $region100: #{forward.1} parent=11 // pred_fallthru
        _
      // Predicated region
      $region101: #{forward.1} parent=11 // pred_check
        %p712 = pneg %p542
      $region102: #{forward.1} parent=11 // pred_check_branch
        %714 = sbr.rel (%p712) target = $region104
      $region103: #{forward.1} parent=11 // pred_region
        _
      $region104: #{forward.1} parent=11 // pred_fallthru
        _
      // Predicated region
      $region105: #{forward.1} parent=11 // pred_check
        %p715 = pneg %p563
      $region106: #{forward.1} parent=11 // pred_check_branch
        %717 = sbr.rel (%p715) target = $region108
      $region107: #{forward.1} parent=11 // pred_region
        _
      $region108: #{forward.1} parent=11 // pred_fallthru
        _
      // Predicated region
      $region109: #{forward.1} parent=11 // pred_check
        %p718 = pneg %p584
      $region110: #{forward.1} parent=11 // pred_check_branch
        %720 = sbr.rel (%p718) target = $region112
      $region111: #{forward.1} parent=11 // pred_region
        _
      $region112: #{forward.1} parent=11 // pred_fallthru
        _
      // Predicated region
      $region113: #{forward.1} parent=11 // pred_check
        %p721 = pneg %p605
      $region114: #{forward.1} parent=11 // pred_check_branch
        %723 = sbr.rel (%p721) target = $region116
      $region115: #{forward.1} parent=11 // pred_region
        _
      $region116: #{forward.1} parent=11 // pred_fallthru
        _
    $region12: #{forward.1} parent=5 // pred_fallthru
      _
    %p724 = scmp.lt.s32.totalorder %s33, 2
    // Predicated region
    $region117: #{forward.1} parent=5 // pred_check
      %p725 = pneg %p724
    $region118: #{forward.1} parent=5 // pred_check_branch
      %727 = sbr.rel (%p725) target = $region120
    $region119: #{forward.1} parent=5 // pred_region
      // Predicated region
      $region121: #{forward.1} parent=119 // pred_check
        %p728 = pneg %p53
      $region122: #{forward.1} parent=119 // pred_check_branch
        %730 = sbr.rel (%p728) target = $region124
      $region123: #{forward.1} parent=119 // pred_region
        %s731 = smul.u32 32, %s33
        %p732 = scmp.lt.s32.totalorder %s731, 63
        %s733 = scalar_select %p732, %s731, 63
        %s734 = smul.addr %s733, 2
        %s735 = smul.addr %s734, 4
        %s736 = scalar_lea.vmem %s0, %s735
        %s737 = smul.u32 32, %s33
      $region124: #{forward.1} parent=119 // pred_fallthru
        _
    $region120: #{forward.1} parent=5 // pred_fallthru
      _
    %p738 = scmp.le.s32.totalorder 1, %s33
    %p739 = scmp.lt.s32.totalorder %s33, 3
    %p740 = pnand %p738, %p739
    %p741 = pneg %p740
    // Predicated region
    $region125: #{forward.1} parent=5 // pred_check
      _
    $region126: #{forward.1} parent=5 // pred_check_branch
      %743 = sbr.rel (%p740) target = $region128
    $region127: #{forward.1} parent=5 // pred_region
      %s744 = ssub.s32 %s33, 1
      %s745 = smul.u32 32, %s38
      %p746 = scmp.lt.s32.totalorder %s745, 63
      %s747 = scalar_select %p746, %s745, 63
      %s748 = smul.addr %s747, 2
      %s749 = smul.addr %s748, 4
      %s750 = scalar_lea.vmem %s0, %s749
      %p751 = pneg %p59
      %p752 = pneg %p56
      %p753 = pneg %p80
      %p754 = pneg %p77
      %p755 = pneg %p101
      %p756 = pneg %p98
      %p757 = pneg %p122
      %p758 = pneg %p119
      %p759 = pneg %p143
      %p760 = pneg %p140
      %p761 = pneg %p164
      %p762 = pneg %p161
      %p763 = pneg %p185
      %p764 = pneg %p182
      %p765 = pneg %p206
      %p766 = pneg %p203
      %p767 = pneg %p227
      %p768 = pneg %p224
      %p769 = pneg %p248
      %p770 = pneg %p245
      %p771 = pneg %p269
      %p772 = pneg %p266
      %p773 = pneg %p290
      %p774 = pneg %p287
      %p775 = pneg %p311
      %p776 = pneg %p308
      %p777 = pneg %p332
      %p778 = pneg %p329
      %p779 = pneg %p353
      %p780 = pneg %p350
      %p781 = pneg %p374
      %p782 = pneg %p371
      %p783 = pneg %p395
      %p784 = pneg %p392
      %p785 = pneg %p416
      %p786 = pneg %p413
      %p787 = pneg %p437
      %p788 = pneg %p434
      %p789 = pneg %p458
      %p790 = pneg %p455
      %p791 = pneg %p479
      %p792 = pneg %p476
      %p793 = pneg %p500
      %p794 = pneg %p497
      %p795 = pneg %p521
      %p796 = pneg %p518
      %p797 = pneg %p542
      %p798 = pneg %p539
      %p799 = pneg %p563
      %p800 = pneg %p560
      %p801 = pneg %p584
      %p802 = pneg %p581
      %p803 = pneg %p605
      %p804 = pneg %p602
      %p805 = pneg %p631
      %p806 = pneg %p628
      %p807 = scmp.lt.s32.totalorder %s38, 1
      %s808 = scalar_select %p807, %s38, 1
      %s809 = smul.addr %s808, 8
      %s810 = scalar_lea.vmem %s27, %s809
      %s811 = smul.u32 32, %s38
      %p812 = scmp.lt.s32.totalorder %s811, 63
      %s813 = scalar_select %p812, %s811, 63
      %s814 = smul.addr %s813, 2
      %s815 = smul.addr %s814, 4
      %s816 = scalar_lea.vmem %s0, %s815
      %s817 = smul.u32 32, %s38
      %p818 = scmp.lt.s32.totalorder %s38, 1
      %s819 = scalar_select %p818, %s38, 1
      %s820 = smul.addr %s819, 8
      %s821 = scalar_lea.vmem %s27, %s820
      %v823 = vld [vmem:[%s816] sm:$0xff]
      %v824 = vld [vmem:[%s816 + $0x8] sm:$0xff]
      %v825 = vld [vmem:[%s816 + $0x10] sm:$0xff]
      %v826 = vld [vmem:[%s816 + $0x18] sm:$0xff]
      %v827 = vld [vmem:[%s816 + $0x20] sm:$0xff]
      %v828 = vld [vmem:[%s816 + $0x28] sm:$0xff]
      %v829 = vld [vmem:[%s816 + $0x30] sm:$0xff]
      %v830 = vld [vmem:[%s816 + $0x38] sm:$0xff]
      %v831 = vld [vmem:[%s816 + $0x40] sm:$0xff]
      %v832 = vld [vmem:[%s816 + $0x48] sm:$0xff]
      %v833 = vld [vmem:[%s816 + $0x50] sm:$0xff]
      %v834 = vld [vmem:[%s816 + $0x58] sm:$0xff]
      %v835 = vld [vmem:[%s816 + $0x60] sm:$0xff]
      %v836 = vld [vmem:[%s816 + $0x68] sm:$0xff]
      %v837 = vld [vmem:[%s816 + $0x70] sm:$0xff]
      %v838 = vld [vmem:[%s816 + $0x78] sm:$0xff]
      %v839 = vld [vmem:[%s816 + $0x80] sm:$0xff]
      %v840 = vld [vmem:[%s816 + $0x88] sm:$0xff]
      %v841 = vld [vmem:[%s816 + $0x90] sm:$0xff]
      %v842 = vld [vmem:[%s816 + $0x98] sm:$0xff]
      %v843 = vld [vmem:[%s816 + $0xa0] sm:$0xff]
      %v844 = vld [vmem:[%s816 + $0xa8] sm:$0xff]
      %v845 = vld [vmem:[%s816 + $0xb0] sm:$0xff]
      %v846 = vld [vmem:[%s816 + $0xb8] sm:$0xff]
      %v847 = vld [vmem:[%s816 + $0xc0] sm:$0xff]
      %v848 = vld [vmem:[%s816 + $0xc8] sm:$0xff]
      %v849 = vld [vmem:[%s816 + $0xd0] sm:$0xff]
      %v850 = vld [vmem:[%s816 + $0xd8] sm:$0xff]
      %v851 = vld [vmem:[%s816 + $0xe0] sm:$0xff]
      %v852 = vld [vmem:[%s816 + $0xe8] sm:$0xff]
      %v853 = vld [vmem:[%s816 + $0xf0] sm:$0xff]
      %v854 = vld [vmem:[%s816 + $0xf8] sm:$0xff]
      %v855 = vld [vmem:[%s1] sm:$0xf]
      %v856 = vld [vmem:[%s1 + $0x4] sm:$0xf]
      %v857 = vld [vmem:[%s1 + $0x8] sm:$0xf]
      %v858 = vld [vmem:[%s1 + $0xc] sm:$0xf]
      %v859 = vld [vmem:[%s1 + $0x10] sm:$0xf]
      %v860 = vld [vmem:[%s1 + $0x14] sm:$0xf]
      %v861 = vld [vmem:[%s1 + $0x18] sm:$0xf]
      %v862 = vld [vmem:[%s1 + $0x1c] sm:$0xf]
      %v863 = vld [vmem:[%s1 + $0x20] sm:$0xf]
      %v864 = vld [vmem:[%s1 + $0x24] sm:$0xf]
      %v865 = vld [vmem:[%s1 + $0x28] sm:$0xf]
      %v866 = vld [vmem:[%s1 + $0x2c] sm:$0xf]
      %v867 = vld [vmem:[%s1 + $0x30] sm:$0xf]
      %v868 = vld [vmem:[%s1 + $0x34] sm:$0xf]
      %v869 = vld [vmem:[%s1 + $0x38] sm:$0xf]
      %v870 = vld [vmem:[%s1 + $0x3c] sm:$0xf]
      %v871 = vld [vmem:[%s1 + $0x40] sm:$0xf]
      %v872 = vld [vmem:[%s1 + $0x44] sm:$0xf]
      %v873 = vld [vmem:[%s1 + $0x48] sm:$0x3]
      %v874 = vld [vmem:[%s2] sm:$0x1]
      %v876 = vperm.slane %v874, 0
      %v910 = vunpack.c.l.b16 %v823
      %v911 = vunpack.c.h.b16 %v823
      %v912 = vunpack.c.l.b16 %v824
      %v913 = vunpack.c.h.b16 %v824
      %v914 = vunpack.c.l.b16 %v825
      %v915 = vunpack.c.h.b16 %v825
      %v916 = vunpack.c.l.b16 %v826
      %v917 = vunpack.c.h.b16 %v826
      %v918 = vunpack.c.l.b16 %v827
      %v919 = vunpack.c.h.b16 %v827
      %v920 = vunpack.c.l.b16 %v828
      %v921 = vunpack.c.h.b16 %v828
      %v922 = vunpack.c.l.b16 %v829
      %v923 = vunpack.c.h.b16 %v829
      %v924 = vunpack.c.l.b16 %v830
      %v925 = vunpack.c.h.b16 %v830
      %v926 = vunpack.c.l.b16 %v831
      %v927 = vunpack.c.h.b16 %v831
      %v928 = vunpack.c.l.b16 %v832
      %v929 = vunpack.c.h.b16 %v832
      %v930 = vunpack.c.l.b16 %v833
      %v931 = vunpack.c.h.b16 %v833
      %v932 = vunpack.c.l.b16 %v834
      %v933 = vunpack.c.h.b16 %v834
      %v934 = vunpack.c.l.b16 %v835
      %v935 = vunpack.c.h.b16 %v835
      %v936 = vunpack.c.l.b16 %v836
      %v937 = vunpack.c.h.b16 %v836
      %v938 = vunpack.c.l.b16 %v837
      %v939 = vunpack.c.h.b16 %v837
      %v940 = vunpack.c.l.b16 %v838
      %v941 = vunpack.c.h.b16 %v838
      %v942 = vunpack.c.l.b16 %v839
      %v943 = vunpack.c.h.b16 %v839
      %v944 = vunpack.c.l.b16 %v840
      %v945 = vunpack.c.h.b16 %v840
      %v946 = vunpack.c.l.b16 %v841
      %v947 = vunpack.c.h.b16 %v841
      %v948 = vunpack.c.l.b16 %v842
      %v949 = vunpack.c.h.b16 %v842
      %v950 = vunpack.c.l.b16 %v843
      %v951 = vunpack.c.h.b16 %v843
      %v952 = vunpack.c.l.b16 %v844
      %v953 = vunpack.c.h.b16 %v844
      %v954 = vunpack.c.l.b16 %v845
      %v955 = vunpack.c.h.b16 %v845
      %v956 = vunpack.c.l.b16 %v846
      %v957 = vunpack.c.h.b16 %v846
      %v958 = vunpack.c.l.b16 %v847
      %v959 = vunpack.c.h.b16 %v847
      %v960 = vunpack.c.l.b16 %v848
      %v961 = vunpack.c.h.b16 %v848
      %v962 = vunpack.c.l.b16 %v849
      %v963 = vunpack.c.h.b16 %v849
      %v964 = vunpack.c.l.b16 %v850
      %v965 = vunpack.c.h.b16 %v850
      %v966 = vunpack.c.l.b16 %v851
      %v967 = vunpack.c.h.b16 %v851
      %v968 = vunpack.c.l.b16 %v852
      %v969 = vunpack.c.h.b16 %v852
      %v970 = vunpack.c.l.b16 %v853
      %v971 = vunpack.c.h.b16 %v853
      %v972 = vunpack.c.l.b16 %v854
      %v973 = vunpack.c.h.b16 %v854
      %v974 = vpack.c.b16 %v912, %v910
      %v975 = vpack.c.b16 %v913, %v911
      %v976 = vpack.c.b16 %v916, %v914
      %v977 = vpack.c.b16 %v917, %v915
      %v978 = vpack.c.b16 %v920, %v918
      %v979 = vpack.c.b16 %v921, %v919
      %v980 = vpack.c.b16 %v924, %v922
      %v981 = vpack.c.b16 %v925, %v923
      %v982 = vpack.c.b16 %v928, %v926
      %v983 = vpack.c.b16 %v929, %v927
      %v984 = vpack.c.b16 %v932, %v930
      %v985 = vpack.c.b16 %v933, %v931
      %v986 = vpack.c.b16 %v936, %v934
      %v987 = vpack.c.b16 %v937, %v935
      %v988 = vpack.c.b16 %v940, %v938
      %v989 = vpack.c.b16 %v941, %v939
      %v990 = vpack.c.b16 %v944, %v942
      %v991 = vpack.c.b16 %v945, %v943
      %v992 = vpack.c.b16 %v948, %v946
      %v993 = vpack.c.b16 %v949, %v947
      %v994 = vpack.c.b16 %v952, %v950
      %v995 = vpack.c.b16 %v953, %v951
      %v996 = vpack.c.b16 %v956, %v954
      %v997 = vpack.c.b16 %v957, %v955
      %v998 = vpack.c.b16 %v960, %v958
      %v999 = vpack.c.b16 %v961, %v959
      %v1000 = vpack.c.b16 %v964, %v962
      %v1001 = vpack.c.b16 %v965, %v963
      %v1002 = vpack.c.b16 %v968, %v966
      %v1003 = vpack.c.b16 %v969, %v967
      %v1004 = vpack.c.b16 %v972, %v970
      %v1005 = vpack.c.b16 %v973, %v971
      %v1041 = vunpack.c.l.b16 %v855
      %v1042 = vunpack.c.l.b16 %v856
      %v1043 = vunpack.c.l.b16 %v857
      %v1044 = vunpack.c.l.b16 %v858
      %v1045 = vunpack.c.l.b16 %v859
      %v1046 = vunpack.c.l.b16 %v860
      %v1047 = vunpack.c.l.b16 %v861
      %v1048 = vunpack.c.l.b16 %v862
      %v1049 = vunpack.c.l.b16 %v863
      %v1050 = vunpack.c.l.b16 %v864
      %v1051 = vunpack.c.l.b16 %v865
      %v1052 = vunpack.c.l.b16 %v866
      %v1053 = vunpack.c.l.b16 %v867
      %v1054 = vunpack.c.l.b16 %v868
      %v1055 = vunpack.c.l.b16 %v869
      %v1056 = vunpack.c.l.b16 %v870
      %v1057 = vunpack.c.l.b16 %v871
      %v1058 = vunpack.c.l.b16 %v872
      %v1059 = vunpack.c.l.b16 %v873
      %v1060 = vpack.c.b16 %v1042, %v1041
      %v1061 = vpack.c.b16 %v1044, %v1043
      %v1062 = vpack.c.b16 %v1046, %v1045
      %v1063 = vpack.c.b16 %v1048, %v1047
      %v1064 = vpack.c.b16 %v1050, %v1049
      %v1065 = vpack.c.b16 %v1052, %v1051
      %v1066 = vpack.c.b16 %v1054, %v1053
      %v1067 = vpack.c.b16 %v1056, %v1055
      %v1068 = vpack.c.b16 %v1058, %v1057
      %v1069 = vpack.c.b16 %v1059, %v1059
      %vm1079 = vcmask 154624
      %v1081 = vsel %vm1079, %v975, 0
      %v1084 = vsel %vm1079, %v977, 0
      %v1087 = vsel %vm1079, %v979, 0
      %v1090 = vsel %vm1079, %v981, 0
      %v1093 = vsel %vm1079, %v983, 0
      %v1096 = vsel %vm1079, %v985, 0
      %v1099 = vsel %vm1079, %v987, 0
      %v1102 = vsel %vm1079, %v989, 0
      %v1105 = vsel %vm1079, %v991, 0
      %v1108 = vsel %vm1079, %v993, 0
      %v1111 = vsel %vm1079, %v995, 0
      %v1114 = vsel %vm1079, %v997, 0
      %v1117 = vsel %vm1079, %v999, 0
      %v1120 = vsel %vm1079, %v1001, 0
      %v1123 = vsel %vm1079, %v1003, 0
      %v1126 = vsel %vm1079, %v1005, 0
      %vm1128 = vcmask 1040384
      %vm1129 = vcmask 1041408
      %v1130 = vsel %vm1128, 4294967295, 65535
      %v1131 = vsel %vm1129, %v1130, 0
      %v1133 = vand.u32 %v1069, %v1131
      %1135 = vmatpush.bf16.msra.mxu0 %v1067
      %1136 = vmatpush.bf16.msra.mxu0 %v1066
      %1137 = vmatpush.bf16.msra.mxu0 %v1065
      %1138 = vmatpush.bf16.msra.mxu0 %v1064
      %1139 = vmatpush.bf16.msra.mxu0 %v1063
      %1140 = vmatpush.bf16.msra.mxu0 %v1062
      %1141 = vmatpush.bf16.msra.mxu0 %v1061
      %1142 = vmatpush.bf16.msra.mxu0 %v1060
      %1143 = vmatmul.bf16.gmra.mxu0 %v974
      %v1144 = vpop.f32.mrf.mxu0
      %v1145 = vadd.f32 %v876, %v1144
      %v1146 = vpop.f32.mrf.mxu0
      %v1147 = vadd.f32 %v876, %v1146
      %1148 = vmatmul.bf16.gmra.mxu0 %v976
      %v1149 = vpop.f32.mrf.mxu0
      %v1150 = vadd.f32 %v876, %v1149
      %v1151 = vpop.f32.mrf.mxu0
      %v1152 = vadd.f32 %v876, %v1151
      %1153 = vmatmul.bf16.gmra.mxu0 %v978
      %v1154 = vpop.f32.mrf.mxu0
      %v1155 = vadd.f32 %v876, %v1154
      %v1156 = vpop.f32.mrf.mxu0
      %v1157 = vadd.f32 %v876, %v1156
      %1158 = vmatmul.bf16.gmra.mxu0 %v980
      %v1159 = vpop.f32.mrf.mxu0
      %v1160 = vadd.f32 %v876, %v1159
      %v1161 = vpop.f32.mrf.mxu0
      %v1162 = vadd.f32 %v876, %v1161
      %1163 = vmatmul.bf16.gmra.mxu0 %v982
      %v1164 = vpop.f32.mrf.mxu0
      %v1165 = vadd.f32 %v876, %v1164
      %v1166 = vpop.f32.mrf.mxu0
      %v1167 = vadd.f32 %v876, %v1166
      %1168 = vmatmul.bf16.gmra.mxu0 %v984
      %v1169 = vpop.f32.mrf.mxu0
      %v1170 = vadd.f32 %v876, %v1169
      %v1171 = vpop.f32.mrf.mxu0
      %v1172 = vadd.f32 %v876, %v1171
      %1173 = vmatmul.bf16.gmra.mxu0 %v986
      %v1174 = vpop.f32.mrf.mxu0
      %v1175 = vadd.f32 %v876, %v1174
      %v1176 = vpop.f32.mrf.mxu0
      %v1177 = vadd.f32 %v876, %v1176
      %1178 = vmatmul.bf16.gmra.mxu0 %v988
      %v1179 = vpop.f32.mrf.mxu0
      %v1180 = vadd.f32 %v876, %v1179
      %v1181 = vpop.f32.mrf.mxu0
      %v1182 = vadd.f32 %v876, %v1181
      %1183 = vmatmul.bf16.gmra.mxu0 %v990
      %v1184 = vpop.f32.mrf.mxu0
      %v1185 = vadd.f32 %v876, %v1184
      %v1186 = vpop.f32.mrf.mxu0
      %v1187 = vadd.f32 %v876, %v1186
      %1188 = vmatmul.bf16.gmra.mxu0 %v992
      %v1189 = vpop.f32.mrf.mxu0
      %v1190 = vadd.f32 %v876, %v1189
      %v1191 = vpop.f32.mrf.mxu0
      %v1192 = vadd.f32 %v876, %v1191
      %1193 = vmatmul.bf16.gmra.mxu0 %v994
      %v1194 = vpop.f32.mrf.mxu0
      %v1195 = vadd.f32 %v876, %v1194
      %v1196 = vpop.f32.mrf.mxu0
      %v1197 = vadd.f32 %v876, %v1196
      %1198 = vmatmul.bf16.gmra.mxu0 %v996
      %v1199 = vpop.f32.mrf.mxu0
      %v1200 = vadd.f32 %v876, %v1199
      %v1201 = vpop.f32.mrf.mxu0
      %v1202 = vadd.f32 %v876, %v1201
      %1203 = vmatmul.bf16.gmra.mxu0 %v998
      %v1204 = vpop.f32.mrf.mxu0
      %v1205 = vadd.f32 %v876, %v1204
      %v1206 = vpop.f32.mrf.mxu0
      %v1207 = vadd.f32 %v876, %v1206
      %1208 = vmatmul.bf16.gmra.mxu0 %v1000
      %v1209 = vpop.f32.mrf.mxu0
      %v1210 = vadd.f32 %v876, %v1209
      %v1211 = vpop.f32.mrf.mxu0
      %v1212 = vadd.f32 %v876, %v1211
      %1213 = vmatmul.bf16.gmra.mxu0 %v1002
      %v1214 = vpop.f32.mrf.mxu0
      %v1215 = vadd.f32 %v876, %v1214
      %v1216 = vpop.f32.mrf.mxu0
      %v1217 = vadd.f32 %v876, %v1216
      %1218 = vmatmul.bf16.gmra.mxu0 %v1004
      %v1219 = vpop.f32.mrf.mxu0
      %v1220 = vadd.f32 %v876, %v1219
      %v1221 = vpop.f32.mrf.mxu0
      %v1222 = vadd.f32 %v876, %v1221
      %1223 = vdwg.mxu0
      %1224 = vmatpush.bf16.msra.mxu0 0
      %1225 = vmatpush.bf16.msra.mxu0 0
      %1226 = vmatpush.bf16.msra.mxu0 0
      %1227 = vmatpush.bf16.msra.mxu0 0
      %1228 = vmatpush.bf16.msra.mxu0 0
      %1229 = vmatpush.bf16.msra.mxu0 0
      %1230 = vmatpush.bf16.msra.mxu0 %v1133
      %1231 = vmatpush.bf16.msra.mxu0 %v1068
      %1232 = vmatmul.bf16.gmra.mxu0 %v1081
      %v1233 = vpop.f32.mrf.mxu0
      %v1234 = vadd.f32 %v1145, %v1233
      %v1235 = vpop.f32.mrf.mxu0
      %v1236 = vadd.f32 %v1147, %v1235
      %1237 = vmatmul.bf16.gmra.mxu0 %v1084
      %v1238 = vpop.f32.mrf.mxu0
      %v1239 = vadd.f32 %v1150, %v1238
      %v1240 = vpop.f32.mrf.mxu0
      %v1241 = vadd.f32 %v1152, %v1240
      %1242 = vmatmul.bf16.gmra.mxu0 %v1087
      %v1243 = vpop.f32.mrf.mxu0
      %v1244 = vadd.f32 %v1155, %v1243
      %v1245 = vpop.f32.mrf.mxu0
      %v1246 = vadd.f32 %v1157, %v1245
      %1247 = vmatmul.bf16.gmra.mxu0 %v1090
      %v1248 = vpop.f32.mrf.mxu0
      %v1249 = vadd.f32 %v1160, %v1248
      %v1250 = vpop.f32.mrf.mxu0
      %v1251 = vadd.f32 %v1162, %v1250
      %1252 = vmatmul.bf16.gmra.mxu0 %v1093
      %v1253 = vpop.f32.mrf.mxu0
      %v1254 = vadd.f32 %v1165, %v1253
      %v1255 = vpop.f32.mrf.mxu0
      %v1256 = vadd.f32 %v1167, %v1255
      %1257 = vmatmul.bf16.gmra.mxu0 %v1096
      %v1258 = vpop.f32.mrf.mxu0
      %v1259 = vadd.f32 %v1170, %v1258
      %v1260 = vpop.f32.mrf.mxu0
      %v1261 = vadd.f32 %v1172, %v1260
      %1262 = vmatmul.bf16.gmra.mxu0 %v1099
      %v1263 = vpop.f32.mrf.mxu0
      %v1264 = vadd.f32 %v1175, %v1263
      %v1265 = vpop.f32.mrf.mxu0
      %v1266 = vadd.f32 %v1177, %v1265
      %1267 = vmatmul.bf16.gmra.mxu0 %v1102
      %v1268 = vpop.f32.mrf.mxu0
      %v1269 = vadd.f32 %v1180, %v1268
      %v1270 = vpop.f32.mrf.mxu0
      %v1271 = vadd.f32 %v1182, %v1270
      %1272 = vmatmul.bf16.gmra.mxu0 %v1105
      %v1273 = vpop.f32.mrf.mxu0
      %v1274 = vadd.f32 %v1185, %v1273
      %v1275 = vpop.f32.mrf.mxu0
      %v1276 = vadd.f32 %v1187, %v1275
      %1277 = vmatmul.bf16.gmra.mxu0 %v1108
      %v1278 = vpop.f32.mrf.mxu0
      %v1279 = vadd.f32 %v1190, %v1278
      %v1280 = vpop.f32.mrf.mxu0
      %v1281 = vadd.f32 %v1192, %v1280
      %1282 = vmatmul.bf16.gmra.mxu0 %v1111
      %v1283 = vpop.f32.mrf.mxu0
      %v1284 = vadd.f32 %v1195, %v1283
      %v1285 = vpop.f32.mrf.mxu0
      %v1286 = vadd.f32 %v1197, %v1285
      %1287 = vmatmul.bf16.gmra.mxu0 %v1114
      %v1288 = vpop.f32.mrf.mxu0
      %v1289 = vadd.f32 %v1200, %v1288
      %v1290 = vpop.f32.mrf.mxu0
      %v1291 = vadd.f32 %v1202, %v1290
      %1292 = vmatmul.bf16.gmra.mxu0 %v1117
      %v1293 = vpop.f32.mrf.mxu0
      %v1294 = vadd.f32 %v1205, %v1293
      %v1295 = vpop.f32.mrf.mxu0
      %v1296 = vadd.f32 %v1207, %v1295
      %1297 = vmatmul.bf16.gmra.mxu0 %v1120
      %v1298 = vpop.f32.mrf.mxu0
      %v1299 = vadd.f32 %v1210, %v1298
      %v1300 = vpop.f32.mrf.mxu0
      %v1301 = vadd.f32 %v1212, %v1300
      %1302 = vmatmul.bf16.gmra.mxu0 %v1123
      %v1303 = vpop.f32.mrf.mxu0
      %v1304 = vadd.f32 %v1215, %v1303
      %v1305 = vpop.f32.mrf.mxu0
      %v1306 = vadd.f32 %v1217, %v1305
      %1307 = vmatmul.bf16.gmra.mxu0 %v1126
      %v1308 = vpop.f32.mrf.mxu0
      %v1309 = vadd.f32 %v1220, %v1308
      %v1310 = vpop.f32.mrf.mxu0
      %v1311 = vadd.f32 %v1222, %v1310
      %1312 = vdwg.mxu0
      %v1313 = vmax.f32 %v1234, 0.0
      %v1314 = vmax.f32 %v1236, 0.0
      %v1315 = vmax.f32 %v1239, 0.0
      %v1316 = vmax.f32 %v1241, 0.0
      %v1317 = vmax.f32 %v1244, 0.0
      %v1318 = vmax.f32 %v1246, 0.0
      %v1319 = vmax.f32 %v1249, 0.0
      %v1320 = vmax.f32 %v1251, 0.0
      %v1321 = vmax.f32 %v1254, 0.0
      %v1322 = vmax.f32 %v1256, 0.0
      %v1323 = vmax.f32 %v1259, 0.0
      %v1324 = vmax.f32 %v1261, 0.0
      %v1325 = vmax.f32 %v1264, 0.0
      %v1326 = vmax.f32 %v1266, 0.0
      %v1327 = vmax.f32 %v1269, 0.0
      %v1328 = vmax.f32 %v1271, 0.0
      %v1329 = vmax.f32 %v1274, 0.0
      %v1330 = vmax.f32 %v1276, 0.0
      %v1331 = vmax.f32 %v1279, 0.0
      %v1332 = vmax.f32 %v1281, 0.0
      %v1333 = vmax.f32 %v1284, 0.0
      %v1334 = vmax.f32 %v1286, 0.0
      %v1335 = vmax.f32 %v1289, 0.0
      %v1336 = vmax.f32 %v1291, 0.0
      %v1337 = vmax.f32 %v1294, 0.0
      %v1338 = vmax.f32 %v1296, 0.0
      %v1339 = vmax.f32 %v1299, 0.0
      %v1340 = vmax.f32 %v1301, 0.0
      %v1341 = vmax.f32 %v1304, 0.0
      %v1342 = vmax.f32 %v1306, 0.0
      %v1343 = vmax.f32 %v1309, 0.0
      %v1344 = vmax.f32 %v1311, 0.0
      %vm1345 = vcmask 64512
      %1346 = vst.msk [vmem:[#allocation2] sm:$0xff] %vm1345, 0.0
      %1347 = vst.msk [vmem:[#allocation2 + $0x8] sm:$0xff] %vm1345, 0.0
      %1348 = vst.msk [vmem:[#allocation2 + $0x10] sm:$0xff] %vm1345, 0.0
      %1349 = vst.msk [vmem:[#allocation2 + $0x18] sm:$0xff] %vm1345, 0.0
      %1350 = vst.msk [vmem:[#allocation2 + $0x20] sm:$0xff] %vm1345, 0.0
      %1351 = vst.msk [vmem:[#allocation2 + $0x28] sm:$0xff] %vm1345, 0.0
      %1352 = vst.msk [vmem:[#allocation2 + $0x30] sm:$0xff] %vm1345, 0.0
      %1353 = vst.msk [vmem:[#allocation2 + $0x38] sm:$0xff] %vm1345, 0.0
      %1354 = vst.msk [vmem:[#allocation2 + $0x40] sm:$0xff] %vm1345, 0.0
      %1355 = vst.msk [vmem:[#allocation2 + $0x48] sm:$0xff] %vm1345, 0.0
      %1356 = vst.msk [vmem:[#allocation2 + $0x50] sm:$0xff] %vm1345, 0.0
      %1357 = vst.msk [vmem:[#allocation2 + $0x58] sm:$0xff] %vm1345, 0.0
      %1358 = vst.msk [vmem:[#allocation2 + $0x60] sm:$0xff] %vm1345, 0.0
      %1359 = vst.msk [vmem:[#allocation2 + $0x68] sm:$0xff] %vm1345, 0.0
      %1360 = vst.msk [vmem:[#allocation2 + $0x70] sm:$0xff] %vm1345, 0.0
      %1361 = vst.msk [vmem:[#allocation2 + $0x78] sm:$0xff] %vm1345, 0.0
      %1362 = vst.msk [vmem:[#allocation2 + $0x80] sm:$0xff] %vm1345, 0.0
      %1363 = vst.msk [vmem:[#allocation2 + $0x88] sm:$0xff] %vm1345, 0.0
      %1364 = vst.msk [vmem:[#allocation2 + $0x90] sm:$0xff] %vm1345, 0.0
      %1365 = vst.msk [vmem:[#allocation2 + $0x98] sm:$0xff] %vm1345, 0.0
      %1366 = vst.msk [vmem:[#allocation2 + $0xa0] sm:$0xff] %vm1345, 0.0
      %1367 = vst.msk [vmem:[#allocation2 + $0xa8] sm:$0xff] %vm1345, 0.0
      %1368 = vst.msk [vmem:[#allocation2 + $0xb0] sm:$0xff] %vm1345, 0.0
      %1369 = vst.msk [vmem:[#allocation2 + $0xb8] sm:$0xff] %vm1345, 0.0
      %1370 = vst.msk [vmem:[#allocation2 + $0xc0] sm:$0xff] %vm1345, 0.0
      %1371 = vst.msk [vmem:[#allocation2 + $0xc8] sm:$0xff] %vm1345, 0.0
      %1372 = vst.msk [vmem:[#allocation2 + $0xd0] sm:$0xff] %vm1345, 0.0
      %1373 = vst.msk [vmem:[#allocation2 + $0xd8] sm:$0xff] %vm1345, 0.0
      %1374 = vst.msk [vmem:[#allocation2 + $0xe0] sm:$0xff] %vm1345, 0.0
      %1375 = vst.msk [vmem:[#allocation2 + $0xe8] sm:$0xff] %vm1345, 0.0
      %1376 = vst.msk [vmem:[#allocation2 + $0xf0] sm:$0xff] %vm1345, 0.0
      %1377 = vst.msk [vmem:[#allocation2 + $0xf8] sm:$0xff] %vm1345, 0.0
      %1378 = vst.msk [vmem:[#allocation2 + $0x100] sm:$0xff] %vm1345, 0.0
      %1379 = vst.msk [vmem:[#allocation2 + $0x108] sm:$0xff] %vm1345, 0.0
      %1380 = vst.msk [vmem:[#allocation2 + $0x110] sm:$0xff] %vm1345, 0.0
      %1381 = vst.msk [vmem:[#allocation2 + $0x118] sm:$0xff] %vm1345, 0.0
      %vm1382 = vcmask 57344
      %1383 = vst.msk [vmem:[#allocation2 + $0x120] sm:$0x1] %vm1382, 0.0
      %1384 = vst.msk [vmem:[#allocation2 + $0x12] sm:$0xff] %vm1345, %v1313
      %1385 = vst.msk [vmem:[#allocation2 + $0x1a] sm:$0xff] %vm1345, %v1314
      %1386 = vst.msk [vmem:[#allocation2 + $0x23] sm:$0xff] %vm1345, %v1315
      %1387 = vst.msk [vmem:[#allocation2 + $0x2b] sm:$0xff] %vm1345, %v1316
      %1388 = vst.msk [vmem:[#allocation2 + $0x34] sm:$0xff] %vm1345, %v1317
      %1389 = vst.msk [vmem:[#allocation2 + $0x3c] sm:$0xff] %vm1345, %v1318
      %1390 = vst.msk [vmem:[#allocation2 + $0x45] sm:$0xff] %vm1345, %v1319
      %1391 = vst.msk [vmem:[#allocation2 + $0x4d] sm:$0xff] %vm1345, %v1320
      %1392 = vst.msk [vmem:[#allocation2 + $0x56] sm:$0xff] %vm1345, %v1321
      %1393 = vst.msk [vmem:[#allocation2 + $0x5e] sm:$0xff] %vm1345, %v1322
      %1394 = vst.msk [vmem:[#allocation2 + $0x67] sm:$0xff] %vm1345, %v1323
      %1395 = vst.msk [vmem:[#allocation2 + $0x6f] sm:$0xff] %vm1345, %v1324
      %1396 = vst.msk [vmem:[#allocation2 + $0x78] sm:$0xff] %vm1345, %v1325
      %1397 = vst.msk [vmem:[#allocation2 + $0x80] sm:$0xff] %vm1345, %v1326
      %1398 = vst.msk [vmem:[#allocation2 + $0x89] sm:$0xff] %vm1345, %v1327
      %1399 = vst.msk [vmem:[#allocation2 + $0x91] sm:$0xff] %vm1345, %v1328
      %1400 = vst.msk [vmem:[#allocation2 + $0x9a] sm:$0xff] %vm1345, %v1329
      %1401 = vst.msk [vmem:[#allocation2 + $0xa2] sm:$0xff] %vm1345, %v1330
      %1402 = vst.msk [vmem:[#allocation2 + $0xab] sm:$0xff] %vm1345, %v1331
      %1403 = vst.msk [vmem:[#allocation2 + $0xb3] sm:$0xff] %vm1345, %v1332
      %1404 = vst.msk [vmem:[#allocation2 + $0xbc] sm:$0xff] %vm1345, %v1333
      %1405 = vst.msk [vmem:[#allocation2 + $0xc4] sm:$0xff] %vm1345, %v1334
      %1406 = vst.msk [vmem:[#allocation2 + $0xcd] sm:$0xff] %vm1345, %v1335
      %1407 = vst.msk [vmem:[#allocation2 + $0xd5] sm:$0xff] %vm1345, %v1336
      %1408 = vst.msk [vmem:[#allocation2 + $0xde] sm:$0xff] %vm1345, %v1337
      %1409 = vst.msk [vmem:[#allocation2 + $0xe6] sm:$0xff] %vm1345, %v1338
      %1410 = vst.msk [vmem:[#allocation2 + $0xef] sm:$0xff] %vm1345, %v1339
      %1411 = vst.msk [vmem:[#allocation2 + $0xf7] sm:$0xff] %vm1345, %v1340
      %1412 = vst.msk [vmem:[#allocation2 + $0x100] sm:$0xff] %vm1345, %v1341
      %1413 = vst.msk [vmem:[#allocation2 + $0x108] sm:$0xff] %vm1345, %v1342
      %1414 = vst.msk [vmem:[#allocation2 + $0x111] sm:$0xff] %vm1345, %v1343
      %1415 = vst.msk [vmem:[#allocation2 + $0x119] sm:$0xff] %vm1345, %v1344
      %1416 = vst.msk [vmem:[#allocation3] sm:$0xff] %vm1345, 0.0
      %1417 = vst.msk [vmem:[#allocation3 + $0x8] sm:$0xff] %vm1345, 0.0
      %1418 = vst.msk [vmem:[#allocation3 + $0x10] sm:$0xff] %vm1345, 0.0
      %1419 = vst.msk [vmem:[#allocation3 + $0x18] sm:$0xff] %vm1345, 0.0
      %1420 = vst.msk [vmem:[#allocation3 + $0x20] sm:$0xff] %vm1345, 0.0
      %1421 = vst.msk [vmem:[#allocation3 + $0x28] sm:$0xff] %vm1345, 0.0
      %1422 = vst.msk [vmem:[#allocation3 + $0x30] sm:$0xff] %vm1345, 0.0
      %1423 = vst.msk [vmem:[#allocation3 + $0x38] sm:$0xff] %vm1345, 0.0
      %1424 = vst.msk [vmem:[#allocation3 + $0x40] sm:$0xff] %vm1345, 0.0
      %1425 = vst.msk [vmem:[#allocation3 + $0x48] sm:$0xff] %vm1345, 0.0
      %1426 = vst.msk [vmem:[#allocation3 + $0x50] sm:$0xff] %vm1345, 0.0
      %1427 = vst.msk [vmem:[#allocation3 + $0x58] sm:$0xff] %vm1345, 0.0
      %vm1428 = vcmask 60416
      %1429 = vst.msk [vmem:[#allocation3 + $0x60] sm:$0xf] %vm1428, 0.0
      %v1430 = vld [vmem:[#allocation2] sm:$0xff]
      %v1431 = vld [vmem:[#allocation2 + $0x8] sm:$0xff]
      %v1432 = vld [vmem:[#allocation2 + $0x20] sm:$0xff]
      %v1433 = vld [vmem:[#allocation2 + $0x28] sm:$0xff]
      %v1434 = vld [vmem:[#allocation2 + $0x30] sm:$0xff]
      %v1435 = vld [vmem:[#allocation2 + $0x40] sm:$0xff]
      %v1436 = vld [vmem:[#allocation2 + $0x48] sm:$0xff]
      %v1437 = vld [vmem:[#allocation2 + $0x50] sm:$0xff]
      %v1438 = vld [vmem:[#allocation2 + $0x60] sm:$0xff]
      %v1439 = vld [vmem:[#allocation2 + $0x68] sm:$0xff]
      %v1440 = vld [vmem:[#allocation2 + $0x70] sm:$0xff]
      %v1441 = vld [vmem:[#allocation2 + $0x88] sm:$0xff]
      %v1442 = vld [vmem:[#allocation2 + $0x90] sm:$0xff]
      %v1443 = vld [vmem:[#allocation2 + $0xa8] sm:$0xff]
      %v1444 = vld [vmem:[#allocation2 + $0xb0] sm:$0xff]
      %v1445 = vld [vmem:[#allocation2 + $0xb8] sm:$0xff]
      %v1446 = vld [vmem:[#allocation2 + $0xc8] sm:$0xff]
      %v1447 = vld [vmem:[#allocation2 + $0xd0] sm:$0xff]
      %v1448 = vld [vmem:[#allocation2 + $0xd8] sm:$0xff]
      %v1449 = vld [vmem:[#allocation2 + $0xe8] sm:$0xff]
      %v1450 = vld [vmem:[#allocation2 + $0xf0] sm:$0xff]
      %v1451 = vld [vmem:[#allocation2 + $0xf8] sm:$0x1f]
      %v1452 = vld [vmem:[#allocation2 + $0x1] sm:$0xff]
      %v1453 = vld [vmem:[#allocation2 + $0x9] sm:$0xff]
      %v1454 = vld [vmem:[#allocation2 + $0x21] sm:$0xff]
      %v1455 = vld [vmem:[#allocation2 + $0x29] sm:$0xff]
      %v1456 = vld [vmem:[#allocation2 + $0x31] sm:$0xff]
      %v1457 = vld [vmem:[#allocation2 + $0x41] sm:$0xff]
      %v1458 = vld [vmem:[#allocation2 + $0x49] sm:$0xff]
      %v1459 = vld [vmem:[#allocation2 + $0x51] sm:$0xff]
      %v1460 = vld [vmem:[#allocation2 + $0x61] sm:$0xff]
      %v1461 = vld [vmem:[#allocation2 + $0x69] sm:$0xff]
      %v1462 = vld [vmem:[#allocation2 + $0x71] sm:$0xff]
      %v1463 = vld [vmem:[#allocation2 + $0x89] sm:$0xff]
      %v1464 = vld [vmem:[#allocation2 + $0x91] sm:$0xff]
      %v1465 = vld [vmem:[#allocation2 + $0xa9] sm:$0xff]
      %v1466 = vld [vmem:[#allocation2 + $0xb1] sm:$0xff]
      %v1467 = vld [vmem:[#allocation2 + $0xb9] sm:$0xff]
      %v1468 = vld [vmem:[#allocation2 + $0xc9] sm:$0xff]
      %v1469 = vld [vmem:[#allocation2 + $0xd1] sm:$0xff]
      %v1470 = vld [vmem:[#allocation2 + $0xd9] sm:$0xff]
      %v1471 = vld [vmem:[#allocation2 + $0xe9] sm:$0xff]
      %v1472 = vld [vmem:[#allocation2 + $0xf1] sm:$0xff]
      %v1473 = vld [vmem:[#allocation2 + $0xf9] sm:$0x1f]
      %v1474 = vmax.f32 %v1430, %v1452
      %v1475 = vmax.f32 %v1431, %v1453
      %v1476 = vmax.f32 %v1432, %v1454
      %v1477 = vmax.f32 %v1433, %v1455
      %v1478 = vmax.f32 %v1434, %v1456
      %v1479 = vmax.f32 %v1435, %v1457
      %v1480 = vmax.f32 %v1436, %v1458
      %v1481 = vmax.f32 %v1437, %v1459
      %v1482 = vmax.f32 %v1438, %v1460
      %v1483 = vmax.f32 %v1439, %v1461
      %v1484 = vmax.f32 %v1440, %v1462
      %v1485 = vmax.f32 %v1441, %v1463
      %v1486 = vmax.f32 %v1442, %v1464
      %v1487 = vmax.f32 %v1443, %v1465
      %v1488 = vmax.f32 %v1444, %v1466
      %v1489 = vmax.f32 %v1445, %v1467
      %v1490 = vmax.f32 %v1446, %v1468
      %v1491 = vmax.f32 %v1447, %v1469
      %v1492 = vmax.f32 %v1448, %v1470
      %v1493 = vmax.f32 %v1449, %v1471
      %v1494 = vmax.f32 %v1450, %v1472
      %v1495 = vmax.f32 %v1451, %v1473
      %v1496 = vld [vmem:[#allocation2 + $0x2] sm:$0xff]
      %v1497 = vld [vmem:[#allocation2 + $0xa] sm:$0xff]
      %v1498 = vld [vmem:[#allocation2 + $0x22] sm:$0xff]
      %v1499 = vld [vmem:[#allocation2 + $0x2a] sm:$0xff]
      %v1500 = vld [vmem:[#allocation2 + $0x32] sm:$0xff]
      %v1501 = vld [vmem:[#allocation2 + $0x42] sm:$0xff]
      %v1502 = vld [vmem:[#allocation2 + $0x4a] sm:$0xff]
      %v1503 = vld [vmem:[#allocation2 + $0x52] sm:$0xff]
      %v1504 = vld [vmem:[#allocation2 + $0x62] sm:$0xff]
      %v1505 = vld [vmem:[#allocation2 + $0x6a] sm:$0xff]
      %v1506 = vld [vmem:[#allocation2 + $0x72] sm:$0xff]
      %v1507 = vld [vmem:[#allocation2 + $0x8a] sm:$0xff]
      %v1508 = vld [vmem:[#allocation2 + $0x92] sm:$0xff]
      %v1509 = vld [vmem:[#allocation2 + $0xaa] sm:$0xff]
      %v1510 = vld [vmem:[#allocation2 + $0xb2] sm:$0xff]
      %v1511 = vld [vmem:[#allocation2 + $0xba] sm:$0xff]
      %v1512 = vld [vmem:[#allocation2 + $0xca] sm:$0xff]
      %v1513 = vld [vmem:[#allocation2 + $0xd2] sm:$0xff]
      %v1514 = vld [vmem:[#allocation2 + $0xda] sm:$0xff]
      %v1515 = vld [vmem:[#allocation2 + $0xea] sm:$0xff]
      %v1516 = vld [vmem:[#allocation2 + $0xf2] sm:$0xff]
      %v1517 = vld [vmem:[#allocation2 + $0xfa] sm:$0x1f]
      %v1518 = vmax.f32 %v1474, %v1496
      %v1519 = vmax.f32 %v1475, %v1497
      %v1520 = vmax.f32 %v1476, %v1498
      %v1521 = vmax.f32 %v1477, %v1499
      %v1522 = vmax.f32 %v1478, %v1500
      %v1523 = vmax.f32 %v1479, %v1501
      %v1524 = vmax.f32 %v1480, %v1502
      %v1525 = vmax.f32 %v1481, %v1503
      %v1526 = vmax.f32 %v1482, %v1504
      %v1527 = vmax.f32 %v1483, %v1505
      %v1528 = vmax.f32 %v1484, %v1506
      %v1529 = vmax.f32 %v1485, %v1507
      %v1530 = vmax.f32 %v1486, %v1508
      %v1531 = vmax.f32 %v1487, %v1509
      %v1532 = vmax.f32 %v1488, %v1510
      %v1533 = vmax.f32 %v1489, %v1511
      %v1534 = vmax.f32 %v1490, %v1512
      %v1535 = vmax.f32 %v1491, %v1513
      %v1536 = vmax.f32 %v1492, %v1514
      %v1537 = vmax.f32 %v1493, %v1515
      %v1538 = vmax.f32 %v1494, %v1516
      %v1539 = vmax.f32 %v1495, %v1517
      %v1540 = vld [vmem:[#allocation2 + $0x11] sm:$0xff]
      %v1541 = vld [vmem:[#allocation2 + $0x19] sm:$0xff]
      %v1542 = vld [vmem:[#allocation2 + $0x39] sm:$0xff]
      %v1543 = vld [vmem:[#allocation2 + $0x59] sm:$0xff]
      %v1544 = vld [vmem:[#allocation2 + $0x79] sm:$0xff]
      %v1545 = vld [vmem:[#allocation2 + $0x81] sm:$0xff]
      %v1546 = vld [vmem:[#allocation2 + $0x99] sm:$0xff]
      %v1547 = vld [vmem:[#allocation2 + $0xa1] sm:$0xff]
      %v1548 = vld [vmem:[#allocation2 + $0xc1] sm:$0xff]
      %v1549 = vld [vmem:[#allocation2 + $0xe1] sm:$0xff]
      %v1550 = vld [vmem:[#allocation2 + $0xf9] sm:$0xff]
      %v1551 = vld [vmem:[#allocation2 + $0x101] sm:$0xff]
      %v1552 = vld [vmem:[#allocation2 + $0x109] sm:$0x1f]
      %v1553 = vmax.f32 %v1518, %v1540
      %v1554 = vmax.f32 %v1519, %v1541
      %v1555 = vmax.f32 %v1520, %v1456
      %v1556 = vmax.f32 %v1521, %v1542
      %v1557 = vmax.f32 %v1522, %v1457
      %v1558 = vmax.f32 %v1523, %v1459
      %v1559 = vmax.f32 %v1524, %v1543
      %v1560 = vmax.f32 %v1525, %v1460
      %v1561 = vmax.f32 %v1526, %v1462
      %v1562 = vmax.f32 %v1527, %v1544
      %v1563 = vmax.f32 %v1528, %v1545
      %v1564 = vmax.f32 %v1529, %v1546
      %v1565 = vmax.f32 %v1530, %v1547
      %v1566 = vmax.f32 %v1531, %v1467
      %v1567 = vmax.f32 %v1532, %v1548
      %v1568 = vmax.f32 %v1533, %v1468
      %v1569 = vmax.f32 %v1534, %v1470
      %v1570 = vmax.f32 %v1535, %v1549
      %v1571 = vmax.f32 %v1536, %v1471
      %v1572 = vmax.f32 %v1537, %v1550
      %v1573 = vmax.f32 %v1538, %v1551
      %v1574 = vmax.f32 %v1539, %v1552
      %v1575 = vld [vmem:[#allocation2 + $0x12] sm:$0xff]
      %v1576 = vld [vmem:[#allocation2 + $0x1a] sm:$0xff]
      %v1577 = vld [vmem:[#allocation2 + $0x3a] sm:$0xff]
      %v1578 = vld [vmem:[#allocation2 + $0x5a] sm:$0xff]
      %v1579 = vld [vmem:[#allocation2 + $0x7a] sm:$0xff]
      %v1580 = vld [vmem:[#allocation2 + $0x82] sm:$0xff]
      %v1581 = vld [vmem:[#allocation2 + $0x9a] sm:$0xff]
      %v1582 = vld [vmem:[#allocation2 + $0xa2] sm:$0xff]
      %v1583 = vld [vmem:[#allocation2 + $0xc2] sm:$0xff]
      %v1584 = vld [vmem:[#allocation2 + $0xe2] sm:$0xff]
      %v1585 = vld [vmem:[#allocation2 + $0xfa] sm:$0xff]
      %v1586 = vld [vmem:[#allocation2 + $0x102] sm:$0xff]
      %v1587 = vld [vmem:[#allocation2 + $0x10a] sm:$0x1f]
      %v1588 = vmax.f32 %v1553, %v1575
      %v1589 = vmax.f32 %v1554, %v1576
      %v1590 = vmax.f32 %v1555, %v1500
      %v1591 = vmax.f32 %v1556, %v1577
      %v1592 = vmax.f32 %v1557, %v1501
      %v1593 = vmax.f32 %v1558, %v1503
      %v1594 = vmax.f32 %v1559, %v1578
      %v1595 = vmax.f32 %v1560, %v1504
      %v1596 = vmax.f32 %v1561, %v1506
      %v1597 = vmax.f32 %v1562, %v1579
      %v1598 = vmax.f32 %v1563, %v1580
      %v1599 = vmax.f32 %v1564, %v1581
      %v1600 = vmax.f32 %v1565, %v1582
      %v1601 = vmax.f32 %v1566, %v1511
      %v1602 = vmax.f32 %v1567, %v1583
      %v1603 = vmax.f32 %v1568, %v1512
      %v1604 = vmax.f32 %v1569, %v1514
      %v1605 = vmax.f32 %v1570, %v1584
      %v1606 = vmax.f32 %v1571, %v1515
      %v1607 = vmax.f32 %v1572, %v1585
      %v1608 = vmax.f32 %v1573, %v1586
      %v1609 = vmax.f32 %v1574, %v1587
      %v1610 = vld [vmem:[#allocation2 + $0x13] sm:$0xff]
      %v1611 = vld [vmem:[#allocation2 + $0x1b] sm:$0xff]
      %v1612 = vld [vmem:[#allocation2 + $0x33] sm:$0xff]
      %v1613 = vld [vmem:[#allocation2 + $0x3b] sm:$0xff]
      %v1614 = vld [vmem:[#allocation2 + $0x43] sm:$0xff]
      %v1615 = vld [vmem:[#allocation2 + $0x53] sm:$0xff]
      %v1616 = vld [vmem:[#allocation2 + $0x5b] sm:$0xff]
      %v1617 = vld [vmem:[#allocation2 + $0x63] sm:$0xff]
      %v1618 = vld [vmem:[#allocation2 + $0x73] sm:$0xff]
      %v1619 = vld [vmem:[#allocation2 + $0x7b] sm:$0xff]
      %v1620 = vld [vmem:[#allocation2 + $0x83] sm:$0xff]
      %v1621 = vld [vmem:[#allocation2 + $0x9b] sm:$0xff]
      %v1622 = vld [vmem:[#allocation2 + $0xa3] sm:$0xff]
      %v1623 = vld [vmem:[#allocation2 + $0xbb] sm:$0xff]
      %v1624 = vld [vmem:[#allocation2 + $0xc3] sm:$0xff]
      %v1625 = vld [vmem:[#allocation2 + $0xcb] sm:$0xff]
      %v1626 = vld [vmem:[#allocation2 + $0xdb] sm:$0xff]
      %v1627 = vld [vmem:[#allocation2 + $0xe3] sm:$0xff]
      %v1628 = vld [vmem:[#allocation2 + $0xeb] sm:$0xff]
      %v1629 = vld [vmem:[#allocation2 + $0xfb] sm:$0xff]
      %v1630 = vld [vmem:[#allocation2 + $0x103] sm:$0xff]
      %v1631 = vld [vmem:[#allocation2 + $0x10b] sm:$0x1f]
      %v1632 = vmax.f32 %v1588, %v1610
      %v1633 = vmax.f32 %v1589, %v1611
      %v1634 = vmax.f32 %v1590, %v1612
      %v1635 = vmax.f32 %v1591, %v1613
      %v1636 = vmax.f32 %v1592, %v1614
      %v1637 = vmax.f32 %v1593, %v1615
      %v1638 = vmax.f32 %v1594, %v1616
      %v1639 = vmax.f32 %v1595, %v1617
      %v1640 = vmax.f32 %v1596, %v1618
      %v1641 = vmax.f32 %v1597, %v1619
      %v1642 = vmax.f32 %v1598, %v1620
      %v1643 = vmax.f32 %v1599, %v1621
      %v1644 = vmax.f32 %v1600, %v1622
      %v1645 = vmax.f32 %v1601, %v1623
      %v1646 = vmax.f32 %v1602, %v1624
      %v1647 = vmax.f32 %v1603, %v1625
      %v1648 = vmax.f32 %v1604, %v1626
      %v1649 = vmax.f32 %v1605, %v1627
      %v1650 = vmax.f32 %v1606, %v1628
      %v1651 = vmax.f32 %v1607, %v1629
      %v1652 = vmax.f32 %v1608, %v1630
      %v1653 = vmax.f32 %v1609, %v1631
      %v1654 = vld [vmem:[#allocation2 + $0x10a] sm:$0xff]
      %v1655 = vld [vmem:[#allocation2 + $0x112] sm:$0xff]
      %v1656 = vld [vmem:[#allocation2 + $0x11a] sm:$0x1f]
      %v1657 = vmax.f32 %v1632, %v1498
      %v1658 = vmax.f32 %v1633, %v1499
      %v1659 = vmax.f32 %v1634, %v1501
      %v1660 = vmax.f32 %v1635, %v1502
      %v1661 = vmax.f32 %v1636, %v1503
      %v1662 = vmax.f32 %v1637, %v1504
      %v1663 = vmax.f32 %v1638, %v1505
      %v1664 = vmax.f32 %v1639, %v1506
      %v1665 = vmax.f32 %v1640, %v1580
      %v1666 = vmax.f32 %v1641, %v1507
      %v1667 = vmax.f32 %v1642, %v1508
      %v1668 = vmax.f32 %v1643, %v1509
      %v1669 = vmax.f32 %v1644, %v1510
      %v1670 = vmax.f32 %v1645, %v1512
      %v1671 = vmax.f32 %v1646, %v1513
      %v1672 = vmax.f32 %v1647, %v1514
      %v1673 = vmax.f32 %v1648, %v1515
      %v1674 = vmax.f32 %v1649, %v1516
      %v1675 = vmax.f32 %v1650, %v1585
      %v1676 = vmax.f32 %v1651, %v1654
      %v1677 = vmax.f32 %v1652, %v1655
      %v1678 = vmax.f32 %v1653, %v1656
      %v1679 = vld [vmem:[#allocation2 + $0x23] sm:$0xff]
      %v1680 = vld [vmem:[#allocation2 + $0x2b] sm:$0xff]
      %v1681 = vld [vmem:[#allocation2 + $0x4b] sm:$0xff]
      %v1682 = vld [vmem:[#allocation2 + $0x6b] sm:$0xff]
      %v1683 = vld [vmem:[#allocation2 + $0x8b] sm:$0xff]
      %v1684 = vld [vmem:[#allocation2 + $0x93] sm:$0xff]
      %v1685 = vld [vmem:[#allocation2 + $0xab] sm:$0xff]
      %v1686 = vld [vmem:[#allocation2 + $0xb3] sm:$0xff]
      %v1687 = vld [vmem:[#allocation2 + $0xd3] sm:$0xff]
      %v1688 = vld [vmem:[#allocation2 + $0xf3] sm:$0xff]
      %v1689 = vld [vmem:[#allocation2 + $0x10b] sm:$0xff]
      %v1690 = vld [vmem:[#allocation2 + $0x113] sm:$0xff]
      %v1691 = vld [vmem:[#allocation2 + $0x11b] sm:$0x1f]
      %v1692 = vmax.f32 %v1657, %v1679
      %v1693 = vmax.f32 %v1658, %v1680
      %v1694 = vmax.f32 %v1659, %v1614
      %v1695 = vmax.f32 %v1660, %v1681
      %v1696 = vmax.f32 %v1661, %v1615
      %v1697 = vmax.f32 %v1662, %v1617
      %v1698 = vmax.f32 %v1663, %v1682
      %v1699 = vmax.f32 %v1664, %v1618
      %v1700 = vmax.f32 %v1665, %v1620
      %v1701 = vmax.f32 %v1666, %v1683
      %v1702 = vmax.f32 %v1667, %v1684
      %v1703 = vmax.f32 %v1668, %v1685
      %v1704 = vmax.f32 %v1669, %v1686
      %v1705 = vmax.f32 %v1670, %v1625
      %v1706 = vmax.f32 %v1671, %v1687
      %v1707 = vmax.f32 %v1672, %v1626
      %v1708 = vmax.f32 %v1673, %v1628
      %v1709 = vmax.f32 %v1674, %v1688
      %v1710 = vmax.f32 %v1675, %v1629
      %v1711 = vmax.f32 %v1676, %v1689
      %v1712 = vmax.f32 %v1677, %v1690
      %v1713 = vmax.f32 %v1678, %v1691
      %v1714 = vld [vmem:[#allocation2 + $0x24] sm:$0xff]
      %v1715 = vld [vmem:[#allocation2 + $0x2c] sm:$0xff]
      %v1716 = vld [vmem:[#allocation2 + $0x44] sm:$0xff]
      %v1717 = vld [vmem:[#allocation2 + $0x4c] sm:$0xff]
      %v1718 = vld [vmem:[#allocation2 + $0x54] sm:$0xff]
      %v1719 = vld [vmem:[#allocation2 + $0x64] sm:$0xff]
      %v1720 = vld [vmem:[#allocation2 + $0x6c] sm:$0xff]
      %v1721 = vld [vmem:[#allocation2 + $0x74] sm:$0xff]
      %v1722 = vld [vmem:[#allocation2 + $0x84] sm:$0xff]
      %v1723 = vld [vmem:[#allocation2 + $0x8c] sm:$0xff]
      %v1724 = vld [vmem:[#allocation2 + $0x94] sm:$0xff]
      %v1725 = vld [vmem:[#allocation2 + $0xac] sm:$0xff]
      %v1726 = vld [vmem:[#allocation2 + $0xb4] sm:$0xff]
      %v1727 = vld [vmem:[#allocation2 + $0xcc] sm:$0xff]
      %v1728 = vld [vmem:[#allocation2 + $0xd4] sm:$0xff]
      %v1729 = vld [vmem:[#allocation2 + $0xdc] sm:$0xff]
      %v1730 = vld [vmem:[#allocation2 + $0xec] sm:$0xff]
      %v1731 = vld [vmem:[#allocation2 + $0xf4] sm:$0xff]
      %v1732 = vld [vmem:[#allocation2 + $0xfc] sm:$0xff]
      %v1733 = vld [vmem:[#allocation2 + $0x10c] sm:$0xff]
      %v1734 = vld [vmem:[#allocation2 + $0x114] sm:$0xff]
      %v1735 = vld [vmem:[#allocation2 + $0x11c] sm:$0x1f]
      %v1736 = vmax.f32 %v1692, %v1714
      %v1737 = vmax.f32 %v1693, %v1715
      %v1738 = vmax.f32 %v1694, %v1716
      %v1739 = vmax.f32 %v1695, %v1717
      %v1740 = vmax.f32 %v1696, %v1718
      %v1741 = vmax.f32 %v1697, %v1719
      %v1742 = vmax.f32 %v1698, %v1720
      %v1743 = vmax.f32 %v1699, %v1721
      %v1744 = vmax.f32 %v1700, %v1722
      %v1745 = vmax.f32 %v1701, %v1723
      %v1746 = vmax.f32 %v1702, %v1724
      %v1747 = vmax.f32 %v1703, %v1725
      %v1748 = vmax.f32 %v1704, %v1726
      %v1749 = vmax.f32 %v1705, %v1727
      %v1750 = vmax.f32 %v1706, %v1728
      %v1751 = vmax.f32 %v1707, %v1729
      %v1752 = vmax.f32 %v1708, %v1730
      %v1753 = vmax.f32 %v1709, %v1731
      %v1754 = vmax.f32 %v1710, %v1732
      %v1755 = vmax.f32 %v1711, %v1733
      %v1756 = vmax.f32 %v1712, %v1734
      %v1757 = vmax.f32 %v1713, %v1735
      %1758 = vst.msk [vmem:[#allocation3 + $0xb] sm:$0x1] %vm1382, %v1736
      %vm1759 = vcmask 59394
      %1760 = vst.msk [vmem:[#allocation3 + $0xa] sm:$0x4] %vm1759, %v1736
      %vm1761 = vcmask 61444
      %1762 = vst.msk [vmem:[#allocation3 + $0x9] sm:$0x10] %vm1761, %v1736
      %vm1763 = vcmask 63494
      %1764 = vst.msk [vmem:[#allocation3 + $0x8] sm:$0x40] %vm1763, %v1736
      %1765 = vst.msk [vmem:[#allocation3 + $0xf] sm:$0x1] %vm1382, %v1737
      %1766 = vst.msk [vmem:[#allocation3 + $0xe] sm:$0x4] %vm1759, %v1737
      %1767 = vst.msk [vmem:[#allocation3 + $0xd] sm:$0x10] %vm1761, %v1737
      %1768 = vst.msk [vmem:[#allocation3 + $0xc] sm:$0x40] %vm1763, %v1737
      %1769 = vst.msk [vmem:[#allocation3 + $0x13] sm:$0x4] %vm1759, %v1738
      %1770 = vst.msk [vmem:[#allocation3 + $0x12] sm:$0x10] %vm1761, %v1738
      %1771 = vst.msk [vmem:[#allocation3 + $0x11] sm:$0x40] %vm1763, %v1738
      %1772 = vst.msk [vmem:[#allocation3 + $0x18] sm:$0x1] %vm1382, %v1739
      %1773 = vst.msk [vmem:[#allocation3 + $0x17] sm:$0x4] %vm1759, %v1739
      %1774 = vst.msk [vmem:[#allocation3 + $0x16] sm:$0x10] %vm1761, %v1739
      %1775 = vst.msk [vmem:[#allocation3 + $0x15] sm:$0x40] %vm1763, %v1739
      %1776 = vst.msk [vmem:[#allocation3 + $0x1c] sm:$0x1] %vm1382, %v1740
      %1777 = vst.msk [vmem:[#allocation3 + $0x1b] sm:$0x10] %vm1761, %v1741
      %1778 = vst.msk [vmem:[#allocation3 + $0x1a] sm:$0x40] %vm1763, %v1741
      %1779 = vst.msk [vmem:[#allocation3 + $0x21] sm:$0x1] %vm1382, %v1742
      %1780 = vst.msk [vmem:[#allocation3 + $0x20] sm:$0x4] %vm1759, %v1742
      %1781 = vst.msk [vmem:[#allocation3 + $0x1f] sm:$0x10] %vm1761, %v1742
      %1782 = vst.msk [vmem:[#allocation3 + $0x1e] sm:$0x40] %vm1763, %v1742
      %1783 = vst.msk [vmem:[#allocation3 + $0x25] sm:$0x1] %vm1382, %v1743
      %1784 = vst.msk [vmem:[#allocation3 + $0x24] sm:$0x4] %vm1759, %v1743
      %1785 = vst.msk [vmem:[#allocation3 + $0x23] sm:$0x40] %vm1763, %v1744
      %1786 = vst.msk [vmem:[#allocation3 + $0x2a] sm:$0x1] %vm1382, %v1745
      %1787 = vst.msk [vmem:[#allocation3 + $0x29] sm:$0x4] %vm1759, %v1745
      %1788 = vst.msk [vmem:[#allocation3 + $0x28] sm:$0x10] %vm1761, %v1745
      %1789 = vst.msk [vmem:[#allocation3 + $0x27] sm:$0x40] %vm1763, %v1745
      %1790 = vst.msk [vmem:[#allocation3 + $0x2e] sm:$0x1] %vm1382, %v1746
      %1791 = vst.msk [vmem:[#allocation3 + $0x2d] sm:$0x4] %vm1759, %v1746
      %1792 = vst.msk [vmem:[#allocation3 + $0x2c] sm:$0x10] %vm1761, %v1746
      %1793 = vst.msk [vmem:[#allocation3 + $0x33] sm:$0x1] %vm1382, %v1747
      %1794 = vst.msk [vmem:[#allocation3 + $0x32] sm:$0x4] %vm1759, %v1747
      %1795 = vst.msk [vmem:[#allocation3 + $0x31] sm:$0x10] %vm1761, %v1747
      %1796 = vst.msk [vmem:[#allocation3 + $0x30] sm:$0x40] %vm1763, %v1747
      %1797 = vst.msk [vmem:[#allocation3 + $0x37] sm:$0x1] %vm1382, %v1748
      %1798 = vst.msk [vmem:[#allocation3 + $0x36] sm:$0x4] %vm1759, %v1748
      %1799 = vst.msk [vmem:[#allocation3 + $0x35] sm:$0x10] %vm1761, %v1748
      %1800 = vst.msk [vmem:[#allocation3 + $0x34] sm:$0x40] %vm1763, %v1748
      %1801 = vst.msk [vmem:[#allocation3 + $0x3b] sm:$0x4] %vm1759, %v1749
      %1802 = vst.msk [vmem:[#allocation3 + $0x3a] sm:$0x10] %vm1761, %v1749
      %1803 = vst.msk [vmem:[#allocation3 + $0x39] sm:$0x40] %vm1763, %v1749
      %1804 = vst.msk [vmem:[#allocation3 + $0x40] sm:$0x1] %vm1382, %v1750
      %1805 = vst.msk [vmem:[#allocation3 + $0x3f] sm:$0x4] %vm1759, %v1750
      %1806 = vst.msk [vmem:[#allocation3 + $0x3e] sm:$0x10] %vm1761, %v1750
      %1807 = vst.msk [vmem:[#allocation3 + $0x3d] sm:$0x40] %vm1763, %v1750
      %1808 = vst.msk [vmem:[#allocation3 + $0x44] sm:$0x1] %vm1382, %v1751
      %1809 = vst.msk [vmem:[#allocation3 + $0x43] sm:$0x10] %vm1761, %v1752
      %1810 = vst.msk [vmem:[#allocation3 + $0x42] sm:$0x40] %vm1763, %v1752
      %1811 = vst.msk [vmem:[#allocation3 + $0x49] sm:$0x1] %vm1382, %v1753
      %1812 = vst.msk [vmem:[#allocation3 + $0x48] sm:$0x4] %vm1759, %v1753
      %1813 = vst.msk [vmem:[#allocation3 + $0x47] sm:$0x10] %vm1761, %v1753
      %1814 = vst.msk [vmem:[#allocation3 + $0x46] sm:$0x40] %vm1763, %v1753
      %1815 = vst.msk [vmem:[#allocation3 + $0x4d] sm:$0x1] %vm1382, %v1754
      %1816 = vst.msk [vmem:[#allocation3 + $0x4c] sm:$0x4] %vm1759, %v1754
      %1817 = vst.msk [vmem:[#allocation3 + $0x4b] sm:$0x40] %vm1763, %v1755
      %1818 = vst.msk [vmem:[#allocation3 + $0x52] sm:$0x1] %vm1382, %v1756
      %1819 = vst.msk [vmem:[#allocation3 + $0x51] sm:$0x4] %vm1759, %v1756
      %1820 = vst.msk [vmem:[#allocation3 + $0x50] sm:$0x10] %vm1761, %v1756
      %1821 = vst.msk [vmem:[#allocation3 + $0x4f] sm:$0x40] %vm1763, %v1756
      %1822 = vst.msk [vmem:[#allocation3 + $0x56] sm:$0x1] %vm1382, %v1757
      %1823 = vst.msk [vmem:[#allocation3 + $0x55] sm:$0x4] %vm1759, %v1757
      %1824 = vst.msk [vmem:[#allocation3 + $0x54] sm:$0x10] %vm1761, %v1757
      %v1825 = vld [vmem:[#allocation3] sm:$0xff]
      %v1826 = vld [vmem:[#allocation3 + $0x8] sm:$0xff]
      %v1827 = vld [vmem:[#allocation3 + $0x10] sm:$0xff]
      %v1828 = vld [vmem:[#allocation3 + $0x18] sm:$0xff]
      %v1829 = vld [vmem:[#allocation3 + $0x20] sm:$0xff]
      %v1830 = vld [vmem:[#allocation3 + $0x28] sm:$0xff]
      %v1831 = vld [vmem:[#allocation3 + $0x30] sm:$0xff]
      %v1832 = vld [vmem:[#allocation3 + $0x38] sm:$0xff]
      %v1833 = vld [vmem:[#allocation3 + $0x40] sm:$0xff]
      %v1834 = vld [vmem:[#allocation3 + $0x48] sm:$0x3f]
      %v1835 = vld [vmem:[#allocation3 + $0x1] sm:$0xff]
      %v1836 = vld [vmem:[#allocation3 + $0x9] sm:$0xff]
      %v1837 = vld [vmem:[#allocation3 + $0x11] sm:$0xff]
      %v1838 = vld [vmem:[#allocation3 + $0x19] sm:$0xff]
      %v1839 = vld [vmem:[#allocation3 + $0x21] sm:$0xff]
      %v1840 = vld [vmem:[#allocation3 + $0x29] sm:$0xff]
      %v1841 = vld [vmem:[#allocation3 + $0x31] sm:$0xff]
      %v1842 = vld [vmem:[#allocation3 + $0x39] sm:$0xff]
      %v1843 = vld [vmem:[#allocation3 + $0x41] sm:$0xff]
      %v1844 = vld [vmem:[#allocation3 + $0x49] sm:$0x3f]
      %v1845 = vld [vmem:[#allocation3 + $0x2] sm:$0xff]
      %v1846 = vld [vmem:[#allocation3 + $0xa] sm:$0xff]
      %v1847 = vld [vmem:[#allocation3 + $0x12] sm:$0xff]
      %v1848 = vld [vmem:[#allocation3 + $0x1a] sm:$0xff]
      %v1849 = vld [vmem:[#allocation3 + $0x22] sm:$0xff]
      %v1850 = vld [vmem:[#allocation3 + $0x2a] sm:$0xff]
      %v1851 = vld [vmem:[#allocation3 + $0x32] sm:$0xff]
      %v1852 = vld [vmem:[#allocation3 + $0x3a] sm:$0xff]
      %v1853 = vld [vmem:[#allocation3 + $0x42] sm:$0xff]
      %v1854 = vld [vmem:[#allocation3 + $0x4a] sm:$0x3f]
      %v1855 = vld [vmem:[#allocation3 + $0x4a] sm:$0xff]
      %v1856 = vld [vmem:[#allocation3 + $0x52] sm:$0x3f]
      %v1857 = vld [vmem:[#allocation3 + $0xb] sm:$0xff]
      %v1858 = vld [vmem:[#allocation3 + $0x13] sm:$0xff]
      %v1859 = vld [vmem:[#allocation3 + $0x1b] sm:$0xff]
      %v1860 = vld [vmem:[#allocation3 + $0x23] sm:$0xff]
      %v1861 = vld [vmem:[#allocation3 + $0x2b] sm:$0xff]
      %v1862 = vld [vmem:[#allocation3 + $0x33] sm:$0xff]
      %v1863 = vld [vmem:[#allocation3 + $0x3b] sm:$0xff]
      %v1864 = vld [vmem:[#allocation3 + $0x43] sm:$0xff]
      %v1865 = vld [vmem:[#allocation3 + $0x4b] sm:$0xff]
      %v1866 = vld [vmem:[#allocation3 + $0x53] sm:$0x3f]
      %v1867 = vld [vmem:[#allocation3 + $0xc] sm:$0xff]
      %v1868 = vld [vmem:[#allocation3 + $0x14] sm:$0xff]
      %v1869 = vld [vmem:[#allocation3 + $0x1c] sm:$0xff]
      %v1870 = vld [vmem:[#allocation3 + $0x24] sm:$0xff]
      %v1871 = vld [vmem:[#allocation3 + $0x2c] sm:$0xff]
      %v1872 = vld [vmem:[#allocation3 + $0x34] sm:$0xff]
      %v1873 = vld [vmem:[#allocation3 + $0x3c] sm:$0xff]
      %v1874 = vld [vmem:[#allocation3 + $0x44] sm:$0xff]
      %v1875 = vld [vmem:[#allocation3 + $0x4c] sm:$0xff]
      %v1876 = vld [vmem:[#allocation3 + $0x54] sm:$0x3f]
      %v1877 = vld [vmem:[#allocation3 + $0x54] sm:$0xff]
      %v1878 = vld [vmem:[#allocation3 + $0x5c] sm:$0x3f]
      %v1879 = vld [vmem:[#allocation3 + $0x15] sm:$0xff]
      %v1880 = vld [vmem:[#allocation3 + $0x1d] sm:$0xff]
      %v1881 = vld [vmem:[#allocation3 + $0x25] sm:$0xff]
      %v1882 = vld [vmem:[#allocation3 + $0x2d] sm:$0xff]
      %v1883 = vld [vmem:[#allocation3 + $0x35] sm:$0xff]
      %v1884 = vld [vmem:[#allocation3 + $0x3d] sm:$0xff]
      %v1885 = vld [vmem:[#allocation3 + $0x45] sm:$0xff]
      %v1886 = vld [vmem:[#allocation3 + $0x4d] sm:$0xff]
      %v1887 = vld [vmem:[#allocation3 + $0x55] sm:$0xff]
      %v1888 = vld [vmem:[#allocation3 + $0x5d] sm:$0x3f]
      %v1889 = vld [vmem:[#allocation3 + $0x16] sm:$0xff]
      %v1890 = vld [vmem:[#allocation3 + $0x1e] sm:$0xff]
      %v1891 = vld [vmem:[#allocation3 + $0x26] sm:$0xff]
      %v1892 = vld [vmem:[#allocation3 + $0x2e] sm:$0xff]
      %v1893 = vld [vmem:[#allocation3 + $0x36] sm:$0xff]
      %v1894 = vld [vmem:[#allocation3 + $0x3e] sm:$0xff]
      %v1895 = vld [vmem:[#allocation3 + $0x46] sm:$0xff]
      %v1896 = vld [vmem:[#allocation3 + $0x4e] sm:$0xff]
      %v1897 = vld [vmem:[#allocation3 + $0x56] sm:$0xff]
      %v1898 = vld [vmem:[#allocation3 + $0x5e] sm:$0x3f]
      %1909 = vrot.lane.b32.xlu0 %v1835, 8
      %v1910 = vpop.permute.xlu0 %1909
      %1911 = vrot.lane.b32.xlu0 %v1836, 8
      %v1912 = vpop.permute.xlu0 %1911
      %1913 = vrot.lane.b32.xlu0 %v1837, 8
      %v1914 = vpop.permute.xlu0 %1913
      %1915 = vrot.lane.b32.xlu0 %v1838, 8
      %v1916 = vpop.permute.xlu0 %1915
      %1917 = vrot.lane.b32.xlu0 %v1839, 8
      %v1918 = vpop.permute.xlu0 %1917
      %1919 = vrot.lane.b32.xlu0 %v1840, 8
      %v1920 = vpop.permute.xlu0 %1919
      %1921 = vrot.lane.b32.xlu0 %v1841, 8
      %v1922 = vpop.permute.xlu0 %1921
      %1923 = vrot.lane.b32.xlu0 %v1842, 8
      %v1924 = vpop.permute.xlu0 %1923
      %1925 = vrot.lane.b32.xlu0 %v1843, 8
      %v1926 = vpop.permute.xlu0 %1925
      %1927 = vrot.lane.b32.xlu0 %v1844, 8
      %v1928 = vpop.permute.xlu0 %1927
      %1949 = vrot.lane.b32.xlu0 %v1845, 16
      %v1950 = vpop.permute.xlu0 %1949
      %1951 = vrot.lane.b32.xlu0 %v1846, 16
      %v1952 = vpop.permute.xlu0 %1951
      %1953 = vrot.lane.b32.xlu0 %v1847, 16
      %v1954 = vpop.permute.xlu0 %1953
      %1955 = vrot.lane.b32.xlu0 %v1848, 16
      %v1956 = vpop.permute.xlu0 %1955
      %1957 = vrot.lane.b32.xlu0 %v1849, 16
      %v1958 = vpop.permute.xlu0 %1957
      %1959 = vrot.lane.b32.xlu0 %v1850, 16
      %v1960 = vpop.permute.xlu0 %1959
      %1961 = vrot.lane.b32.xlu0 %v1851, 16
      %v1962 = vpop.permute.xlu0 %1961
      %1963 = vrot.lane.b32.xlu0 %v1852, 16
      %v1964 = vpop.permute.xlu0 %1963
      %1965 = vrot.lane.b32.xlu0 %v1853, 16
      %v1966 = vpop.permute.xlu0 %1965
      %1967 = vrot.lane.b32.xlu0 %v1854, 16
      %v1968 = vpop.permute.xlu0 %1967
      %1981 = vrot.lane.b32.xlu0 %v1846, 24
      %v1982 = vpop.permute.xlu0 %1981
      %1983 = vrot.lane.b32.xlu0 %v1847, 24
      %v1984 = vpop.permute.xlu0 %1983
      %1985 = vrot.lane.b32.xlu0 %v1848, 24
      %v1986 = vpop.permute.xlu0 %1985
      %1987 = vrot.lane.b32.xlu0 %v1849, 24
      %v1988 = vpop.permute.xlu0 %1987
      %1989 = vrot.lane.b32.xlu0 %v1850, 24
      %v1990 = vpop.permute.xlu0 %1989
      %1991 = vrot.lane.b32.xlu0 %v1851, 24
      %v1992 = vpop.permute.xlu0 %1991
      %1993 = vrot.lane.b32.xlu0 %v1852, 24
      %v1994 = vpop.permute.xlu0 %1993
      %1995 = vrot.lane.b32.xlu0 %v1853, 24
      %v1996 = vpop.permute.xlu0 %1995
      %1997 = vrot.lane.b32.xlu0 %v1855, 24
      %v1998 = vpop.permute.xlu0 %1997
      %1999 = vrot.lane.b32.xlu0 %v1856, 24
      %v2000 = vpop.permute.xlu0 %1999
      %2021 = vrot.lane.b32.xlu0 %v1857, 32
      %v2022 = vpop.permute.xlu0 %2021
      %2023 = vrot.lane.b32.xlu0 %v1858, 32
      %v2024 = vpop.permute.xlu0 %2023
      %2025 = vrot.lane.b32.xlu0 %v1859, 32
      %v2026 = vpop.permute.xlu0 %2025
      %2027 = vrot.lane.b32.xlu0 %v1860, 32
      %v2028 = vpop.permute.xlu0 %2027
      %2029 = vrot.lane.b32.xlu0 %v1861, 32
      %v2030 = vpop.permute.xlu0 %2029
      %2031 = vrot.lane.b32.xlu0 %v1862, 32
      %v2032 = vpop.permute.xlu0 %2031
      %2033 = vrot.lane.b32.xlu0 %v1863, 32
      %v2034 = vpop.permute.xlu0 %2033
      %2035 = vrot.lane.b32.xlu0 %v1864, 32
      %v2036 = vpop.permute.xlu0 %2035
      %2037 = vrot.lane.b32.xlu0 %v1865, 32
      %v2038 = vpop.permute.xlu0 %2037
      %2039 = vrot.lane.b32.xlu0 %v1866, 32
      %v2040 = vpop.permute.xlu0 %2039
      %2061 = vrot.lane.b32.xlu0 %v1867, 40
      %v2062 = vpop.permute.xlu0 %2061
      %2063 = vrot.lane.b32.xlu0 %v1868, 40
      %v2064 = vpop.permute.xlu0 %2063
      %2065 = vrot.lane.b32.xlu0 %v1869, 40
      %v2066 = vpop.permute.xlu0 %2065
      %2067 = vrot.lane.b32.xlu0 %v1870, 40
      %v2068 = vpop.permute.xlu0 %2067
      %2069 = vrot.lane.b32.xlu0 %v1871, 40
      %v2070 = vpop.permute.xlu0 %2069
      %2071 = vrot.lane.b32.xlu0 %v1872, 40
      %v2072 = vpop.permute.xlu0 %2071
      %2073 = vrot.lane.b32.xlu0 %v1873, 40
      %v2074 = vpop.permute.xlu0 %2073
      %2075 = vrot.lane.b32.xlu0 %v1874, 40
      %v2076 = vpop.permute.xlu0 %2075
      %2077 = vrot.lane.b32.xlu0 %v1875, 40
      %v2078 = vpop.permute.xlu0 %2077
      %2079 = vrot.lane.b32.xlu0 %v1876, 40
      %v2080 = vpop.permute.xlu0 %2079
      %2093 = vrot.lane.b32.xlu0 %v1868, 48
      %v2094 = vpop.permute.xlu0 %2093
      %2095 = vrot.lane.b32.xlu0 %v1869, 48
      %v2096 = vpop.permute.xlu0 %2095
      %2097 = vrot.lane.b32.xlu0 %v1870, 48
      %v2098 = vpop.permute.xlu0 %2097
      %2099 = vrot.lane.b32.xlu0 %v1871, 48
      %v2100 = vpop.permute.xlu0 %2099
      %2101 = vrot.lane.b32.xlu0 %v1872, 48
      %v2102 = vpop.permute.xlu0 %2101
      %2103 = vrot.lane.b32.xlu0 %v1873, 48
      %v2104 = vpop.permute.xlu0 %2103
      %2105 = vrot.lane.b32.xlu0 %v1874, 48
      %v2106 = vpop.permute.xlu0 %2105
      %2107 = vrot.lane.b32.xlu0 %v1875, 48
      %v2108 = vpop.permute.xlu0 %2107
      %2109 = vrot.lane.b32.xlu0 %v1877, 48
      %v2110 = vpop.permute.xlu0 %2109
      %2111 = vrot.lane.b32.xlu0 %v1878, 48
      %v2112 = vpop.permute.xlu0 %2111
      %2133 = vrot.lane.b32.xlu0 %v1879, 56
      %v2134 = vpop.permute.xlu0 %2133
      %2135 = vrot.lane.b32.xlu0 %v1880, 56
      %v2136 = vpop.permute.xlu0 %2135
      %2137 = vrot.lane.b32.xlu0 %v1881, 56
      %v2138 = vpop.permute.xlu0 %2137
      %2139 = vrot.lane.b32.xlu0 %v1882, 56
      %v2140 = vpop.permute.xlu0 %2139
      %2141 = vrot.lane.b32.xlu0 %v1883, 56
      %v2142 = vpop.permute.xlu0 %2141
      %2143 = vrot.lane.b32.xlu0 %v1884, 56
      %v2144 = vpop.permute.xlu0 %2143
      %2145 = vrot.lane.b32.xlu0 %v1885, 56
      %v2146 = vpop.permute.xlu0 %2145
      %2147 = vrot.lane.b32.xlu0 %v1886, 56
      %v2148 = vpop.permute.xlu0 %2147
      %2149 = vrot.lane.b32.xlu0 %v1887, 56
      %v2150 = vpop.permute.xlu0 %2149
      %2151 = vrot.lane.b32.xlu0 %v1888, 56
      %v2152 = vpop.permute.xlu0 %2151
      %2173 = vrot.lane.b32.xlu0 %v1889, 64
      %v2174 = vpop.permute.xlu0 %2173
      %2175 = vrot.lane.b32.xlu0 %v1890, 64
      %v2176 = vpop.permute.xlu0 %2175
      %2177 = vrot.lane.b32.xlu0 %v1891, 64
      %v2178 = vpop.permute.xlu0 %2177
      %2179 = vrot.lane.b32.xlu0 %v1892, 64
      %v2180 = vpop.permute.xlu0 %2179
      %2181 = vrot.lane.b32.xlu0 %v1893, 64
      %v2182 = vpop.permute.xlu0 %2181
      %2183 = vrot.lane.b32.xlu0 %v1894, 64
      %v2184 = vpop.permute.xlu0 %2183
      %2185 = vrot.lane.b32.xlu0 %v1895, 64
      %v2186 = vpop.permute.xlu0 %2185
      %2187 = vrot.lane.b32.xlu0 %v1896, 64
      %v2188 = vpop.permute.xlu0 %2187
      %2189 = vrot.lane.b32.xlu0 %v1897, 64
      %v2190 = vpop.permute.xlu0 %2189
      %2191 = vrot.lane.b32.xlu0 %v1898, 64
      %v2192 = vpop.permute.xlu0 %2191
      %v2203 = vsel %vm1345, %v1825, %v1910
      %v2204 = vsel %vm1345, %v1826, %v1912
      %v2205 = vsel %vm1345, %v1827, %v1914
      %v2206 = vsel %vm1345, %v1828, %v1916
      %v2207 = vsel %vm1345, %v1829, %v1918
      %v2208 = vsel %vm1345, %v1830, %v1920
      %v2209 = vsel %vm1345, %v1831, %v1922
      %v2210 = vsel %vm1345, %v1832, %v1924
      %v2211 = vsel %vm1345, %v1833, %v1926
      %v2212 = vsel %vm1345, %v1834, %v1928
      %vm2213 = vcmask 130048
      %v2214 = vsel %vm2213, %v2203, %v1950
      %v2215 = vsel %vm2213, %v2204, %v1952
      %v2216 = vsel %vm2213, %v2205, %v1954
      %v2217 = vsel %vm2213, %v2206, %v1956
      %v2218 = vsel %vm2213, %v2207, %v1958
      %v2219 = vsel %vm2213, %v2208, %v1960
      %v2220 = vsel %vm2213, %v2209, %v1962
      %v2221 = vsel %vm2213, %v2210, %v1964
      %v2222 = vsel %vm2213, %v2211, %v1966
      %v2223 = vsel %vm2213, %v2212, %v1968
      %vm2224 = vcmask 195584
      %v2225 = vsel %vm2224, %v2214, %v1982
      %v2226 = vsel %vm2224, %v2215, %v1984
      %v2227 = vsel %vm2224, %v2216, %v1986
      %v2228 = vsel %vm2224, %v2217, %v1988
      %v2229 = vsel %vm2224, %v2218, %v1990
      %v2230 = vsel %vm2224, %v2219, %v1992
      %v2231 = vsel %vm2224, %v2220, %v1994
      %v2232 = vsel %vm2224, %v2221, %v1996
      %v2233 = vsel %vm2224, %v2222, %v1998
      %v2234 = vsel %vm2224, %v2223, %v2000
      %vm2235 = vcmask 261120
      %v2236 = vsel %vm2235, %v2225, %v2022
      %v2237 = vsel %vm2235, %v2226, %v2024
      %v2238 = vsel %vm2235, %v2227, %v2026
      %v2239 = vsel %vm2235, %v2228, %v2028
      %v2240 = vsel %vm2235, %v2229, %v2030
      %v2241 = vsel %vm2235, %v2230, %v2032
      %v2242 = vsel %vm2235, %v2231, %v2034
      %v2243 = vsel %vm2235, %v2232, %v2036
      %v2244 = vsel %vm2235, %v2233, %v2038
      %v2245 = vsel %vm2235, %v2234, %v2040
      %vm2246 = vcmask 326656
      %v2247 = vsel %vm2246, %v2236, %v2062
      %v2248 = vsel %vm2246, %v2237, %v2064
      %v2249 = vsel %vm2246, %v2238, %v2066
      %v2250 = vsel %vm2246, %v2239, %v2068
      %v2251 = vsel %vm2246, %v2240, %v2070
      %v2252 = vsel %vm2246, %v2241, %v2072
      %v2253 = vsel %vm2246, %v2242, %v2074
      %v2254 = vsel %vm2246, %v2243, %v2076
      %v2255 = vsel %vm2246, %v2244, %v2078
      %v2256 = vsel %vm2246, %v2245, %v2080
      %vm2257 = vcmask 392192
      %v2258 = vsel %vm2257, %v2247, %v2094
      %v2259 = vsel %vm2257, %v2248, %v2096
      %v2260 = vsel %vm2257, %v2249, %v2098
      %v2261 = vsel %vm2257, %v2250, %v2100
      %v2262 = vsel %vm2257, %v2251, %v2102
      %v2263 = vsel %vm2257, %v2252, %v2104
      %v2264 = vsel %vm2257, %v2253, %v2106
      %v2265 = vsel %vm2257, %v2254, %v2108
      %v2266 = vsel %vm2257, %v2255, %v2110
      %v2267 = vsel %vm2257, %v2256, %v2112
      %vm2268 = vcmask 457728
      %v2269 = vsel %vm2268, %v2258, %v2134
      %v2270 = vsel %vm2268, %v2259, %v2136
      %v2271 = vsel %vm2268, %v2260, %v2138
      %v2272 = vsel %vm2268, %v2261, %v2140
      %v2273 = vsel %vm2268, %v2262, %v2142
      %v2274 = vsel %vm2268, %v2263, %v2144
      %v2275 = vsel %vm2268, %v2264, %v2146
      %v2276 = vsel %vm2268, %v2265, %v2148
      %v2277 = vsel %vm2268, %v2266, %v2150
      %v2278 = vsel %vm2268, %v2267, %v2152
      %vm2279 = vcmask 523264
      %v2280 = vsel %vm2279, %v2269, %v2174
      %v2281 = vsel %vm2279, %v2270, %v2176
      %v2282 = vsel %vm2279, %v2271, %v2178
      %v2283 = vsel %vm2279, %v2272, %v2180
      %v2284 = vsel %vm2279, %v2273, %v2182
      %v2285 = vsel %vm2279, %v2274, %v2184
      %v2286 = vsel %vm2279, %v2275, %v2186
      %v2287 = vsel %vm2279, %v2276, %v2188
      %v2288 = vsel %vm2279, %v2277, %v2190
      %v2289 = vsel %vm2279, %v2278, %v2192
      %v2290 = vpack.c.bf16 %v2281, %v2280
      %v2291 = vpack.c.bf16 %v2283, %v2282
      %v2292 = vpack.c.bf16 %v2285, %v2284
      %v2293 = vpack.c.bf16 %v2287, %v2286
      %v2294 = vpack.c.bf16 %v2289, %v2288
      %v2295 = vld [vmem:[%s3] sm:$0xf]
      %v2296 = vld [vmem:[%s3 + $0x4] sm:$0xf]
      %v2297 = vld [vmem:[%s3 + $0x8] sm:$0xf]
      %v2298 = vld [vmem:[%s3 + $0xc] sm:$0xf]
      %v2299 = vld [vmem:[%s3 + $0x10] sm:$0xf]
      %v2300 = vld [vmem:[%s3 + $0x14] sm:$0xf]
      %v2301 = vld [vmem:[%s3 + $0x18] sm:$0xf]
      %v2302 = vld [vmem:[%s3 + $0x1c] sm:$0xf]
      %v2303 = vld [vmem:[%s3 + $0x20] sm:$0xf]
      %v2304 = vld [vmem:[%s4] sm:$0x1]
      %v2306 = vperm.slane %v2304, 0
      %v2317 = vunpack.c.l.b16 %v2295
      %v2318 = vunpack.c.l.b16 %v2296
      %v2319 = vunpack.c.l.b16 %v2297
      %v2320 = vunpack.c.l.b16 %v2298
      %v2321 = vunpack.c.l.b16 %v2299
      %v2322 = vunpack.c.l.b16 %v2300
      %v2323 = vunpack.c.l.b16 %v2301
      %v2324 = vunpack.c.l.b16 %v2302
      %v2325 = vunpack.c.l.b16 %v2303
      %v2326 = vpack.c.b16 %v2318, %v2317
      %v2327 = vpack.c.b16 %v2320, %v2319
      %v2328 = vpack.c.b16 %v2322, %v2321
      %v2329 = vpack.c.b16 %v2324, %v2323
      %v2330 = vpack.c.b16 %v2325, %v2325
      %vm2335 = vcmask 588800
      %v2337 = vsel %vm2335, %v2290, 0
      %v2340 = vsel %vm2335, %v2291, 0
      %v2343 = vsel %vm2335, %v2292, 0
      %v2346 = vsel %vm2335, %v2293, 0
      %v2349 = vsel %vm2335, %v2294, 0
      %vm2351 = vcmask 1043456
      %v2353 = vsel %vm2351, %v2330, 0
      %2355 = vmatpush.bf16.msra.mxu0 0
      %2356 = vmatpush.bf16.msra.mxu0 0
      %2357 = vmatpush.bf16.msra.mxu0 0
      %2358 = vmatpush.bf16.msra.mxu0 %v2353
      %2359 = vmatpush.bf16.msra.mxu0 %v2329
      %2360 = vmatpush.bf16.msra.mxu0 %v2328
      %2361 = vmatpush.bf16.msra.mxu0 %v2327
      %2362 = vmatpush.bf16.msra.mxu0 %v2326
      %2363 = vmatmul.bf16.gmra.mxu0 %v2337
      %v2364 = vpop.f32.mrf.mxu0
      %v2365 = vadd.f32 %v2306, %v2364
      %v2366 = vpop.f32.mrf.mxu0
      %v2367 = vadd.f32 %v2306, %v2366
      %2368 = vmatmul.bf16.gmra.mxu0 %v2340
      %v2369 = vpop.f32.mrf.mxu0
      %v2370 = vadd.f32 %v2306, %v2369
      %v2371 = vpop.f32.mrf.mxu0
      %v2372 = vadd.f32 %v2306, %v2371
      %2373 = vmatmul.bf16.gmra.mxu0 %v2343
      %v2374 = vpop.f32.mrf.mxu0
      %v2375 = vadd.f32 %v2306, %v2374
      %v2376 = vpop.f32.mrf.mxu0
      %v2377 = vadd.f32 %v2306, %v2376
      %2378 = vmatmul.bf16.gmra.mxu0 %v2346
      %v2379 = vpop.f32.mrf.mxu0
      %v2380 = vadd.f32 %v2306, %v2379
      %v2381 = vpop.f32.mrf.mxu0
      %v2382 = vadd.f32 %v2306, %v2381
      %2383 = vmatmul.bf16.gmra.mxu0 %v2349
      %v2384 = vpop.f32.mrf.mxu0
      %v2385 = vadd.f32 %v2306, %v2384
      %v2386 = vpop.f32.mrf.mxu0
      %v2387 = vadd.f32 %v2306, %v2386
      %2388 = vdwg.mxu0
      %2389 = vst.msk [vmem:[#allocation4] sm:$0xff] %vm1345, 0.0
      %2390 = vst.msk [vmem:[#allocation4 + $0x8] sm:$0xff] %vm1345, 0.0
      %2391 = vst.msk [vmem:[#allocation4 + $0x10] sm:$0xff] %vm1345, 0.0
      %2392 = vst.msk [vmem:[#allocation4 + $0x18] sm:$0xff] %vm1345, 0.0
      %2393 = vst.msk [vmem:[#allocation4 + $0x20] sm:$0xff] %vm1345, 0.0
      %2394 = vst.msk [vmem:[#allocation4 + $0x28] sm:$0xff] %vm1345, 0.0
      %2395 = vst.msk [vmem:[#allocation4 + $0x30] sm:$0xff] %vm1345, 0.0
      %2396 = vst.msk [vmem:[#allocation4 + $0x38] sm:$0xff] %vm1345, 0.0
      %2397 = vst.msk [vmem:[#allocation4 + $0x40] sm:$0xff] %vm1345, 0.0
      %2398 = vst.msk [vmem:[#allocation4 + $0x48] sm:$0xff] %vm1345, 0.0
      %2399 = vst.msk [vmem:[#allocation4 + $0x50] sm:$0xff] %vm1345, 0.0
      %2400 = vst.msk [vmem:[#allocation4 + $0x58] sm:$0xff] %vm1345, 0.0
      %2401 = vst.msk [vmem:[#allocation4 + $0x60] sm:$0xf] %vm1428, 0.0
      %v2402 = vmax.f32 %v2365, 0.0
      %2403 = vst.msk [vmem:[#allocation4 + $0xb] sm:$0xff] %vm1345, %v2402
      %v2404 = vmax.f32 %v2367, 0.0
      %v2405 = vmax.f32 %v2370, 0.0
      %vm2406 = vcmask 64514
      %2407 = vst.msk [vmem:[#allocation4 + $0x13] sm:$0xfc] %vm2406, %v2404
      %vm2408 = vcmask 58368
      %2409 = vst.msk [vmem:[#allocation4 + $0x1b] sm:$0x3] %vm2408, %v2405
      %v2410 = vmax.f32 %v2372, 0.0
      %vm2411 = vcmask 64516
      %2412 = vst.msk [vmem:[#allocation4 + $0x1b] sm:$0xf0] %vm2411, %v2405
      %2413 = vst.msk [vmem:[#allocation4 + $0x23] sm:$0xf] %vm1428, %v2410
      %v2414 = vmax.f32 %v2375, 0.0
      %vm2415 = vcmask 64518
      %2416 = vst.msk [vmem:[#allocation4 + $0x23] sm:$0xc0] %vm2415, %v2410
      %vm2417 = vcmask 62464
      %2418 = vst.msk [vmem:[#allocation4 + $0x2b] sm:$0x3f] %vm2417, %v2414
      %v2419 = vmax.f32 %v2377, 0.0
      %2420 = vst.msk [vmem:[#allocation4 + $0x33] sm:$0xff] %vm1345, %v2419
      %v2421 = vmax.f32 %v2380, 0.0
      %v2422 = vmax.f32 %v2382, 0.0
      %2423 = vst.msk [vmem:[#allocation4 + $0x3b] sm:$0xfc] %vm2406, %v2421
      %2424 = vst.msk [vmem:[#allocation4 + $0x43] sm:$0x3] %vm2408, %v2422
      %v2425 = vmax.f32 %v2385, 0.0
      %2426 = vst.msk [vmem:[#allocation4 + $0x43] sm:$0xf0] %vm2411, %v2422
      %2427 = vst.msk [vmem:[#allocation4 + $0x4b] sm:$0xf] %vm1428, %v2425
      %v2428 = vmax.f32 %v2387, 0.0
      %2429 = vst.msk [vmem:[#allocation4 + $0x4b] sm:$0xc0] %vm2415, %v2425
      %2430 = vst.msk [vmem:[#allocation4 + $0x53] sm:$0x3f] %vm2417, %v2428
      %v2431 = vld [vmem:[#allocation4] sm:$0xff]
      %v2432 = vld [vmem:[#allocation4 + $0x8] sm:$0xff]
      %v2433 = vld [vmem:[#allocation4 + $0x10] sm:$0xff]
      %v2434 = vld [vmem:[#allocation4 + $0x18] sm:$0xff]
      %v2435 = vld [vmem:[#allocation4 + $0x20] sm:$0xff]
      %v2436 = vld [vmem:[#allocation4 + $0x28] sm:$0xff]
      %v2437 = vld [vmem:[#allocation4 + $0x30] sm:$0xff]
      %v2438 = vld [vmem:[#allocation4 + $0x38] sm:$0xff]
      %v2439 = vld [vmem:[#allocation4 + $0x40] sm:$0xff]
      %v2440 = vld [vmem:[#allocation4 + $0x48] sm:$0x3f]
      %v2441 = vld [vmem:[#allocation4 + $0x1] sm:$0xff]
      %v2442 = vld [vmem:[#allocation4 + $0x9] sm:$0xff]
      %v2443 = vld [vmem:[#allocation4 + $0x11] sm:$0xff]
      %v2444 = vld [vmem:[#allocation4 + $0x19] sm:$0xff]
      %v2445 = vld [vmem:[#allocation4 + $0x21] sm:$0xff]
      %v2446 = vld [vmem:[#allocation4 + $0x29] sm:$0xff]
      %v2447 = vld [vmem:[#allocation4 + $0x31] sm:$0xff]
      %v2448 = vld [vmem:[#allocation4 + $0x39] sm:$0xff]
      %v2449 = vld [vmem:[#allocation4 + $0x41] sm:$0xff]
      %v2450 = vld [vmem:[#allocation4 + $0x49] sm:$0x3f]
      %v2451 = vld [vmem:[#allocation4 + $0x2] sm:$0xff]
      %v2452 = vld [vmem:[#allocation4 + $0xa] sm:$0xff]
      %v2453 = vld [vmem:[#allocation4 + $0x12] sm:$0xff]
      %v2454 = vld [vmem:[#allocation4 + $0x1a] sm:$0xff]
      %v2455 = vld [vmem:[#allocation4 + $0x22] sm:$0xff]
      %v2456 = vld [vmem:[#allocation4 + $0x2a] sm:$0xff]
      %v2457 = vld [vmem:[#allocation4 + $0x32] sm:$0xff]
      %v2458 = vld [vmem:[#allocation4 + $0x3a] sm:$0xff]
      %v2459 = vld [vmem:[#allocation4 + $0x42] sm:$0xff]
      %v2460 = vld [vmem:[#allocation4 + $0x4a] sm:$0x3f]
      %v2461 = vld [vmem:[#allocation4 + $0x4a] sm:$0xff]
      %v2462 = vld [vmem:[#allocation4 + $0x52] sm:$0x3f]
      %v2463 = vld [vmem:[#allocation4 + $0xb] sm:$0xff]
      %v2464 = vld [vmem:[#allocation4 + $0x13] sm:$0xff]
      %v2465 = vld [vmem:[#allocation4 + $0x1b] sm:$0xff]
      %v2466 = vld [vmem:[#allocation4 + $0x23] sm:$0xff]
      %v2467 = vld [vmem:[#allocation4 + $0x2b] sm:$0xff]
      %v2468 = vld [vmem:[#allocation4 + $0x33] sm:$0xff]
      %v2469 = vld [vmem:[#allocation4 + $0x3b] sm:$0xff]
      %v2470 = vld [vmem:[#allocation4 + $0x43] sm:$0xff]
      %v2471 = vld [vmem:[#allocation4 + $0x4b] sm:$0xff]
      %v2472 = vld [vmem:[#allocation4 + $0x53] sm:$0x3f]
      %v2473 = vld [vmem:[#allocation4 + $0xc] sm:$0xff]
      %v2474 = vld [vmem:[#allocation4 + $0x14] sm:$0xff]
      %v2475 = vld [vmem:[#allocation4 + $0x1c] sm:$0xff]
      %v2476 = vld [vmem:[#allocation4 + $0x24] sm:$0xff]
      %v2477 = vld [vmem:[#allocation4 + $0x2c] sm:$0xff]
      %v2478 = vld [vmem:[#allocation4 + $0x34] sm:$0xff]
      %v2479 = vld [vmem:[#allocation4 + $0x3c] sm:$0xff]
      %v2480 = vld [vmem:[#allocation4 + $0x44] sm:$0xff]
      %v2481 = vld [vmem:[#allocation4 + $0x4c] sm:$0xff]
      %v2482 = vld [vmem:[#allocation4 + $0x54] sm:$0x3f]
      %v2483 = vld [vmem:[#allocation4 + $0x54] sm:$0xff]
      %v2484 = vld [vmem:[#allocation4 + $0x5c] sm:$0x3f]
      %v2485 = vld [vmem:[#allocation4 + $0x15] sm:$0xff]
      %v2486 = vld [vmem:[#allocation4 + $0x1d] sm:$0xff]
      %v2487 = vld [vmem:[#allocation4 + $0x25] sm:$0xff]
      %v2488 = vld [vmem:[#allocation4 + $0x2d] sm:$0xff]
      %v2489 = vld [vmem:[#allocation4 + $0x35] sm:$0xff]
      %v2490 = vld [vmem:[#allocation4 + $0x3d] sm:$0xff]
      %v2491 = vld [vmem:[#allocation4 + $0x45] sm:$0xff]
      %v2492 = vld [vmem:[#allocation4 + $0x4d] sm:$0xff]
      %v2493 = vld [vmem:[#allocation4 + $0x55] sm:$0xff]
      %v2494 = vld [vmem:[#allocation4 + $0x5d] sm:$0x3f]
      %v2495 = vld [vmem:[#allocation4 + $0x16] sm:$0xff]
      %v2496 = vld [vmem:[#allocation4 + $0x1e] sm:$0xff]
      %v2497 = vld [vmem:[#allocation4 + $0x26] sm:$0xff]
      %v2498 = vld [vmem:[#allocation4 + $0x2e] sm:$0xff]
      %v2499 = vld [vmem:[#allocation4 + $0x36] sm:$0xff]
      %v2500 = vld [vmem:[#allocation4 + $0x3e] sm:$0xff]
      %v2501 = vld [vmem:[#allocation4 + $0x46] sm:$0xff]
      %v2502 = vld [vmem:[#allocation4 + $0x4e] sm:$0xff]
      %v2503 = vld [vmem:[#allocation4 + $0x56] sm:$0xff]
      %v2504 = vld [vmem:[#allocation4 + $0x5e] sm:$0x3f]
      %2515 = vrot.lane.b32.xlu0 %v2441, 8
      %v2516 = vpop.permute.xlu0 %2515
      %2517 = vrot.lane.b32.xlu0 %v2442, 8
      %v2518 = vpop.permute.xlu0 %2517
      %2519 = vrot.lane.b32.xlu0 %v2443, 8
      %v2520 = vpop.permute.xlu0 %2519
      %2521 = vrot.lane.b32.xlu0 %v2444, 8
      %v2522 = vpop.permute.xlu0 %2521
      %2523 = vrot.lane.b32.xlu0 %v2445, 8
      %v2524 = vpop.permute.xlu0 %2523
      %2525 = vrot.lane.b32.xlu0 %v2446, 8
      %v2526 = vpop.permute.xlu0 %2525
      %2527 = vrot.lane.b32.xlu0 %v2447, 8
      %v2528 = vpop.permute.xlu0 %2527
      %2529 = vrot.lane.b32.xlu0 %v2448, 8
      %v2530 = vpop.permute.xlu0 %2529
      %2531 = vrot.lane.b32.xlu0 %v2449, 8
      %v2532 = vpop.permute.xlu0 %2531
      %2533 = vrot.lane.b32.xlu0 %v2450, 8
      %v2534 = vpop.permute.xlu0 %2533
      %2555 = vrot.lane.b32.xlu0 %v2451, 16
      %v2556 = vpop.permute.xlu0 %2555
      %2557 = vrot.lane.b32.xlu0 %v2452, 16
      %v2558 = vpop.permute.xlu0 %2557
      %2559 = vrot.lane.b32.xlu0 %v2453, 16
      %v2560 = vpop.permute.xlu0 %2559
      %2561 = vrot.lane.b32.xlu0 %v2454, 16
      %v2562 = vpop.permute.xlu0 %2561
      %2563 = vrot.lane.b32.xlu0 %v2455, 16
      %v2564 = vpop.permute.xlu0 %2563
      %2565 = vrot.lane.b32.xlu0 %v2456, 16
      %v2566 = vpop.permute.xlu0 %2565
      %2567 = vrot.lane.b32.xlu0 %v2457, 16
      %v2568 = vpop.permute.xlu0 %2567
      %2569 = vrot.lane.b32.xlu0 %v2458, 16
      %v2570 = vpop.permute.xlu0 %2569
      %2571 = vrot.lane.b32.xlu0 %v2459, 16
      %v2572 = vpop.permute.xlu0 %2571
      %2573 = vrot.lane.b32.xlu0 %v2460, 16
      %v2574 = vpop.permute.xlu0 %2573
      %2587 = vrot.lane.b32.xlu0 %v2452, 24
      %v2588 = vpop.permute.xlu0 %2587
      %2589 = vrot.lane.b32.xlu0 %v2453, 24
      %v2590 = vpop.permute.xlu0 %2589
      %2591 = vrot.lane.b32.xlu0 %v2454, 24
      %v2592 = vpop.permute.xlu0 %2591
      %2593 = vrot.lane.b32.xlu0 %v2455, 24
      %v2594 = vpop.permute.xlu0 %2593
      %2595 = vrot.lane.b32.xlu0 %v2456, 24
      %v2596 = vpop.permute.xlu0 %2595
      %2597 = vrot.lane.b32.xlu0 %v2457, 24
      %v2598 = vpop.permute.xlu0 %2597
      %2599 = vrot.lane.b32.xlu0 %v2458, 24
      %v2600 = vpop.permute.xlu0 %2599
      %2601 = vrot.lane.b32.xlu0 %v2459, 24
      %v2602 = vpop.permute.xlu0 %2601
      %2603 = vrot.lane.b32.xlu0 %v2461, 24
      %v2604 = vpop.permute.xlu0 %2603
      %2605 = vrot.lane.b32.xlu0 %v2462, 24
      %v2606 = vpop.permute.xlu0 %2605
      %2627 = vrot.lane.b32.xlu0 %v2463, 32
      %v2628 = vpop.permute.xlu0 %2627
      %2629 = vrot.lane.b32.xlu0 %v2464, 32
      %v2630 = vpop.permute.xlu0 %2629
      %2631 = vrot.lane.b32.xlu0 %v2465, 32
      %v2632 = vpop.permute.xlu0 %2631
      %2633 = vrot.lane.b32.xlu0 %v2466, 32
      %v2634 = vpop.permute.xlu0 %2633
      %2635 = vrot.lane.b32.xlu0 %v2467, 32
      %v2636 = vpop.permute.xlu0 %2635
      %2637 = vrot.lane.b32.xlu0 %v2468, 32
      %v2638 = vpop.permute.xlu0 %2637
      %2639 = vrot.lane.b32.xlu0 %v2469, 32
      %v2640 = vpop.permute.xlu0 %2639
      %2641 = vrot.lane.b32.xlu0 %v2470, 32
      %v2642 = vpop.permute.xlu0 %2641
      %2643 = vrot.lane.b32.xlu0 %v2471, 32
      %v2644 = vpop.permute.xlu0 %2643
      %2645 = vrot.lane.b32.xlu0 %v2472, 32
      %v2646 = vpop.permute.xlu0 %2645
      %2667 = vrot.lane.b32.xlu0 %v2473, 40
      %v2668 = vpop.permute.xlu0 %2667
      %2669 = vrot.lane.b32.xlu0 %v2474, 40
      %v2670 = vpop.permute.xlu0 %2669
      %2671 = vrot.lane.b32.xlu0 %v2475, 40
      %v2672 = vpop.permute.xlu0 %2671
      %2673 = vrot.lane.b32.xlu0 %v2476, 40
      %v2674 = vpop.permute.xlu0 %2673
      %2675 = vrot.lane.b32.xlu0 %v2477, 40
      %v2676 = vpop.permute.xlu0 %2675
      %2677 = vrot.lane.b32.xlu0 %v2478, 40
      %v2678 = vpop.permute.xlu0 %2677
      %2679 = vrot.lane.b32.xlu0 %v2479, 40
      %v2680 = vpop.permute.xlu0 %2679
      %2681 = vrot.lane.b32.xlu0 %v2480, 40
      %v2682 = vpop.permute.xlu0 %2681
      %2683 = vrot.lane.b32.xlu0 %v2481, 40
      %v2684 = vpop.permute.xlu0 %2683
      %2685 = vrot.lane.b32.xlu0 %v2482, 40
      %v2686 = vpop.permute.xlu0 %2685
      %2699 = vrot.lane.b32.xlu0 %v2474, 48
      %v2700 = vpop.permute.xlu0 %2699
      %2701 = vrot.lane.b32.xlu0 %v2475, 48
      %v2702 = vpop.permute.xlu0 %2701
      %2703 = vrot.lane.b32.xlu0 %v2476, 48
      %v2704 = vpop.permute.xlu0 %2703
      %2705 = vrot.lane.b32.xlu0 %v2477, 48
      %v2706 = vpop.permute.xlu0 %2705
      %2707 = vrot.lane.b32.xlu0 %v2478, 48
      %v2708 = vpop.permute.xlu0 %2707
      %2709 = vrot.lane.b32.xlu0 %v2479, 48
      %v2710 = vpop.permute.xlu0 %2709
      %2711 = vrot.lane.b32.xlu0 %v2480, 48
      %v2712 = vpop.permute.xlu0 %2711
      %2713 = vrot.lane.b32.xlu0 %v2481, 48
      %v2714 = vpop.permute.xlu0 %2713
      %2715 = vrot.lane.b32.xlu0 %v2483, 48
      %v2716 = vpop.permute.xlu0 %2715
      %2717 = vrot.lane.b32.xlu0 %v2484, 48
      %v2718 = vpop.permute.xlu0 %2717
      %2739 = vrot.lane.b32.xlu0 %v2485, 56
      %v2740 = vpop.permute.xlu0 %2739
      %2741 = vrot.lane.b32.xlu0 %v2486, 56
      %v2742 = vpop.permute.xlu0 %2741
      %2743 = vrot.lane.b32.xlu0 %v2487, 56
      %v2744 = vpop.permute.xlu0 %2743
      %2745 = vrot.lane.b32.xlu0 %v2488, 56
      %v2746 = vpop.permute.xlu0 %2745
      %2747 = vrot.lane.b32.xlu0 %v2489, 56
      %v2748 = vpop.permute.xlu0 %2747
      %2749 = vrot.lane.b32.xlu0 %v2490, 56
      %v2750 = vpop.permute.xlu0 %2749
      %2751 = vrot.lane.b32.xlu0 %v2491, 56
      %v2752 = vpop.permute.xlu0 %2751
      %2753 = vrot.lane.b32.xlu0 %v2492, 56
      %v2754 = vpop.permute.xlu0 %2753
      %2755 = vrot.lane.b32.xlu0 %v2493, 56
      %v2756 = vpop.permute.xlu0 %2755
      %2757 = vrot.lane.b32.xlu0 %v2494, 56
      %v2758 = vpop.permute.xlu0 %2757
      %2779 = vrot.lane.b32.xlu0 %v2495, 64
      %v2780 = vpop.permute.xlu0 %2779
      %2781 = vrot.lane.b32.xlu0 %v2496, 64
      %v2782 = vpop.permute.xlu0 %2781
      %2783 = vrot.lane.b32.xlu0 %v2497, 64
      %v2784 = vpop.permute.xlu0 %2783
      %2785 = vrot.lane.b32.xlu0 %v2498, 64
      %v2786 = vpop.permute.xlu0 %2785
      %2787 = vrot.lane.b32.xlu0 %v2499, 64
      %v2788 = vpop.permute.xlu0 %2787
      %2789 = vrot.lane.b32.xlu0 %v2500, 64
      %v2790 = vpop.permute.xlu0 %2789
      %2791 = vrot.lane.b32.xlu0 %v2501, 64
      %v2792 = vpop.permute.xlu0 %2791
      %2793 = vrot.lane.b32.xlu0 %v2502, 64
      %v2794 = vpop.permute.xlu0 %2793
      %2795 = vrot.lane.b32.xlu0 %v2503, 64
      %v2796 = vpop.permute.xlu0 %2795
      %2797 = vrot.lane.b32.xlu0 %v2504, 64
      %v2798 = vpop.permute.xlu0 %2797
      %v2809 = vsel %vm1345, %v2431, %v2516
      %v2810 = vsel %vm1345, %v2432, %v2518
      %v2811 = vsel %vm1345, %v2433, %v2520
      %v2812 = vsel %vm1345, %v2434, %v2522
      %v2813 = vsel %vm1345, %v2435, %v2524
      %v2814 = vsel %vm1345, %v2436, %v2526
      %v2815 = vsel %vm1345, %v2437, %v2528
      %v2816 = vsel %vm1345, %v2438, %v2530
      %v2817 = vsel %vm1345, %v2439, %v2532
      %v2818 = vsel %vm1345, %v2440, %v2534
      %v2819 = vsel %vm2213, %v2809, %v2556
      %v2820 = vsel %vm2213, %v2810, %v2558
      %v2821 = vsel %vm2213, %v2811, %v2560
      %v2822 = vsel %vm2213, %v2812, %v2562
      %v2823 = vsel %vm2213, %v2813, %v2564
      %v2824 = vsel %vm2213, %v2814, %v2566
      %v2825 = vsel %vm2213, %v2815, %v2568
      %v2826 = vsel %vm2213, %v2816, %v2570
      %v2827 = vsel %vm2213, %v2817, %v2572
      %v2828 = vsel %vm2213, %v2818, %v2574
      %v2829 = vsel %vm2224, %v2819, %v2588
      %v2830 = vsel %vm2224, %v2820, %v2590
      %v2831 = vsel %vm2224, %v2821, %v2592
      %v2832 = vsel %vm2224, %v2822, %v2594
      %v2833 = vsel %vm2224, %v2823, %v2596
      %v2834 = vsel %vm2224, %v2824, %v2598
      %v2835 = vsel %vm2224, %v2825, %v2600
      %v2836 = vsel %vm2224, %v2826, %v2602
      %v2837 = vsel %vm2224, %v2827, %v2604
      %v2838 = vsel %vm2224, %v2828, %v2606
      %v2839 = vsel %vm2235, %v2829, %v2628
      %v2840 = vsel %vm2235, %v2830, %v2630
      %v2841 = vsel %vm2235, %v2831, %v2632
      %v2842 = vsel %vm2235, %v2832, %v2634
      %v2843 = vsel %vm2235, %v2833, %v2636
      %v2844 = vsel %vm2235, %v2834, %v2638
      %v2845 = vsel %vm2235, %v2835, %v2640
      %v2846 = vsel %vm2235, %v2836, %v2642
      %v2847 = vsel %vm2235, %v2837, %v2644
      %v2848 = vsel %vm2235, %v2838, %v2646
      %v2849 = vsel %vm2246, %v2839, %v2668
      %v2850 = vsel %vm2246, %v2840, %v2670
      %v2851 = vsel %vm2246, %v2841, %v2672
      %v2852 = vsel %vm2246, %v2842, %v2674
      %v2853 = vsel %vm2246, %v2843, %v2676
      %v2854 = vsel %vm2246, %v2844, %v2678
      %v2855 = vsel %vm2246, %v2845, %v2680
      %v2856 = vsel %vm2246, %v2846, %v2682
      %v2857 = vsel %vm2246, %v2847, %v2684
      %v2858 = vsel %vm2246, %v2848, %v2686
      %v2859 = vsel %vm2257, %v2849, %v2700
      %v2860 = vsel %vm2257, %v2850, %v2702
      %v2861 = vsel %vm2257, %v2851, %v2704
      %v2862 = vsel %vm2257, %v2852, %v2706
      %v2863 = vsel %vm2257, %v2853, %v2708
      %v2864 = vsel %vm2257, %v2854, %v2710
      %v2865 = vsel %vm2257, %v2855, %v2712
      %v2866 = vsel %vm2257, %v2856, %v2714
      %v2867 = vsel %vm2257, %v2857, %v2716
      %v2868 = vsel %vm2257, %v2858, %v2718
      %v2869 = vsel %vm2268, %v2859, %v2740
      %v2870 = vsel %vm2268, %v2860, %v2742
      %v2871 = vsel %vm2268, %v2861, %v2744
      %v2872 = vsel %vm2268, %v2862, %v2746
      %v2873 = vsel %vm2268, %v2863, %v2748
      %v2874 = vsel %vm2268, %v2864, %v2750
      %v2875 = vsel %vm2268, %v2865, %v2752
      %v2876 = vsel %vm2268, %v2866, %v2754
      %v2877 = vsel %vm2268, %v2867, %v2756
      %v2878 = vsel %vm2268, %v2868, %v2758
      %v2879 = vsel %vm2279, %v2869, %v2780
      %v2880 = vsel %vm2279, %v2870, %v2782
      %v2881 = vsel %vm2279, %v2871, %v2784
      %v2882 = vsel %vm2279, %v2872, %v2786
      %v2883 = vsel %vm2279, %v2873, %v2788
      %v2884 = vsel %vm2279, %v2874, %v2790
      %v2885 = vsel %vm2279, %v2875, %v2792
      %v2886 = vsel %vm2279, %v2876, %v2794
      %v2887 = vsel %vm2279, %v2877, %v2796
      %v2888 = vsel %vm2279, %v2878, %v2798
      %v2889 = vpack.c.bf16 %v2880, %v2879
      %v2890 = vpack.c.bf16 %v2882, %v2881
      %v2891 = vpack.c.bf16 %v2884, %v2883
      %v2892 = vpack.c.bf16 %v2886, %v2885
      %v2893 = vpack.c.bf16 %v2888, %v2887
      %v2894 = vld [vmem:[%s5] sm:$0xf]
      %v2895 = vld [vmem:[%s5 + $0x4] sm:$0xf]
      %v2896 = vld [vmem:[%s5 + $0x8] sm:$0xf]
      %v2897 = vld [vmem:[%s5 + $0xc] sm:$0xf]
      %v2898 = vld [vmem:[%s5 + $0x10] sm:$0xf]
      %v2899 = vld [vmem:[%s5 + $0x14] sm:$0xf]
      %v2900 = vld [vmem:[%s5 + $0x18] sm:$0xf]
      %v2901 = vld [vmem:[%s5 + $0x1c] sm:$0xf]
      %v2902 = vld [vmem:[%s5 + $0x20] sm:$0xf]
      %v2903 = vld [vmem:[%s6] sm:$0x1]
      %v2905 = vperm.slane %v2903, 0
      %v2916 = vunpack.c.l.b16 %v2894
      %v2917 = vunpack.c.l.b16 %v2895
      %v2918 = vunpack.c.l.b16 %v2896
      %v2919 = vunpack.c.l.b16 %v2897
      %v2920 = vunpack.c.l.b16 %v2898
      %v2921 = vunpack.c.l.b16 %v2899
      %v2922 = vunpack.c.l.b16 %v2900
      %v2923 = vunpack.c.l.b16 %v2901
      %v2924 = vunpack.c.l.b16 %v2902
      %v2925 = vpack.c.b16 %v2917, %v2916
      %v2926 = vpack.c.b16 %v2919, %v2918
      %v2927 = vpack.c.b16 %v2921, %v2920
      %v2928 = vpack.c.b16 %v2923, %v2922
      %v2929 = vpack.c.b16 %v2924, %v2924
      %v2935 = vsel %vm2335, %v2889, 0
      %v2938 = vsel %vm2335, %v2890, 0
      %v2941 = vsel %vm2335, %v2891, 0
      %v2944 = vsel %vm2335, %v2892, 0
      %v2947 = vsel %vm2335, %v2893, 0
      %v2950 = vsel %vm2351, %v2929, 0
      %2952 = vmatpush.bf16.msra.mxu0 0
      %2953 = vmatpush.bf16.msra.mxu0 0
      %2954 = vmatpush.bf16.msra.mxu0 0
      %2955 = vmatpush.bf16.msra.mxu0 %v2950
      %2956 = vmatpush.bf16.msra.mxu0 %v2928
      %2957 = vmatpush.bf16.msra.mxu0 %v2927
      %2958 = vmatpush.bf16.msra.mxu0 %v2926
      %2959 = vmatpush.bf16.msra.mxu0 %v2925
      %2960 = vmatmul.bf16.gmra.mxu0 %v2935
      %v2961 = vpop.f32.mrf.mxu0
      %v2962 = vadd.f32 %v2905, %v2961
      %v2963 = vpop.f32.mrf.mxu0
      %v2964 = vadd.f32 %v2905, %v2963
      %2965 = vmatmul.bf16.gmra.mxu0 %v2938
      %v2966 = vpop.f32.mrf.mxu0
      %v2967 = vadd.f32 %v2905, %v2966
      %v2968 = vpop.f32.mrf.mxu0
      %v2969 = vadd.f32 %v2905, %v2968
      %2970 = vmatmul.bf16.gmra.mxu0 %v2941
      %v2971 = vpop.f32.mrf.mxu0
      %v2972 = vadd.f32 %v2905, %v2971
      %v2973 = vpop.f32.mrf.mxu0
      %v2974 = vadd.f32 %v2905, %v2973
      %2975 = vmatmul.bf16.gmra.mxu0 %v2944
      %v2976 = vpop.f32.mrf.mxu0
      %v2977 = vadd.f32 %v2905, %v2976
      %v2978 = vpop.f32.mrf.mxu0
      %v2979 = vadd.f32 %v2905, %v2978
      %2980 = vmatmul.bf16.gmra.mxu0 %v2947
      %v2981 = vpop.f32.mrf.mxu0
      %v2982 = vadd.f32 %v2905, %v2981
      %v2983 = vpop.f32.mrf.mxu0
      %v2984 = vadd.f32 %v2905, %v2983
      %2985 = vdwg.mxu0
      %v2986 = vld [vmem:[#allocation3 + $0xb] sm:$0xff]
      %v2987 = vadd.f32 %v2962, %v2986
      %v2988 = vmax.f32 %v2987, 0.0
      %2989 = vst.msk [vmem:[#allocation5] sm:$0xff] %vm1345, %v2988
      %v2990 = vld [vmem:[#allocation3 + $0x15] sm:$0xff]
      %v2992 = vrot.slane %v2990, 6
      %v2994 = vadd.f32 %v2964, %v2992
      %v2995 = vadd.f32 %v2967, %v2992
      %v2996 = vmax.f32 %v2994, 0.0
      %v2997 = vmax.f32 %v2995, 0.0
      %2998 = vst.msk [vmem:[#allocation5 + $0x6] sm:$0xfc] %vm2406, %v2996
      %2999 = vst.msk [vmem:[#allocation5 + $0xe] sm:$0x3] %vm2408, %v2997
      %v3000 = vld [vmem:[#allocation3 + $0x1f] sm:$0xff]
      %v3002 = vrot.slane %v3000, 4
      %v3004 = vadd.f32 %v2967, %v3002
      %v3005 = vadd.f32 %v2969, %v3002
      %v3006 = vmax.f32 %v3004, 0.0
      %v3007 = vmax.f32 %v3005, 0.0
      %3008 = vst.msk [vmem:[#allocation5 + $0xc] sm:$0xf0] %vm2411, %v3006
      %3009 = vst.msk [vmem:[#allocation5 + $0x14] sm:$0xf] %vm1428, %v3007
      %v3010 = vld [vmem:[#allocation3 + $0x29] sm:$0xff]
      %v3012 = vrot.slane %v3010, 2
      %v3014 = vadd.f32 %v2969, %v3012
      %v3015 = vadd.f32 %v2972, %v3012
      %v3016 = vmax.f32 %v3014, 0.0
      %v3017 = vmax.f32 %v3015, 0.0
      %3018 = vst.msk [vmem:[#allocation5 + $0x12] sm:$0xc0] %vm2415, %v3016
      %3019 = vst.msk [vmem:[#allocation5 + $0x1a] sm:$0x3f] %vm2417, %v3017
      %v3020 = vld [vmem:[#allocation3 + $0x33] sm:$0xff]
      %v3021 = vadd.f32 %v2974, %v3020
      %v3022 = vmax.f32 %v3021, 0.0
      %3023 = vst.msk [vmem:[#allocation5 + $0x20] sm:$0xff] %vm1345, %v3022
      %v3024 = vld [vmem:[#allocation3 + $0x3d] sm:$0xff]
      %v3026 = vrot.slane %v3024, 6
      %v3028 = vadd.f32 %v2977, %v3026
      %v3029 = vadd.f32 %v2979, %v3026
      %v3030 = vmax.f32 %v3028, 0.0
      %v3031 = vmax.f32 %v3029, 0.0
      %3032 = vst.msk [vmem:[#allocation5 + $0x26] sm:$0xfc] %vm2406, %v3030
      %3033 = vst.msk [vmem:[#allocation5 + $0x2e] sm:$0x3] %vm2408, %v3031
      %v3034 = vld [vmem:[#allocation3 + $0x47] sm:$0xff]
      %v3036 = vrot.slane %v3034, 4
      %v3038 = vadd.f32 %v2979, %v3036
      %v3039 = vadd.f32 %v2982, %v3036
      %v3040 = vmax.f32 %v3038, 0.0
      %v3041 = vmax.f32 %v3039, 0.0
      %3042 = vst.msk [vmem:[#allocation5 + $0x2c] sm:$0xf0] %vm2411, %v3040
      %3043 = vst.msk [vmem:[#allocation5 + $0x34] sm:$0xf] %vm1428, %v3041
      %v3044 = vld [vmem:[#allocation3 + $0x51] sm:$0xff]
      %v3046 = vrot.slane %v3044, 2
      %v3048 = vadd.f32 %v2982, %v3046
      %v3049 = vadd.f32 %v2984, %v3046
      %v3050 = vmax.f32 %v3048, 0.0
      %v3051 = vmax.f32 %v3049, 0.0
      %3052 = vst.msk [vmem:[#allocation5 + $0x32] sm:$0xc0] %vm2415, %v3050
      %3053 = vst.msk [vmem:[#allocation5 + $0x3a] sm:$0x3f] %vm2417, %v3051
      %v3054 = vld [vmem:[#allocation5] sm:$0xff]
      %v3055 = vld [vmem:[#allocation5 + $0x10] sm:$0xff]
      %v3056 = vld [vmem:[#allocation5 + $0x20] sm:$0xff]
      %v3057 = vld [vmem:[#allocation5 + $0x30] sm:$0x7f]
      %v3058 = vld [vmem:[#allocation5 + $0x1] sm:$0xff]
      %v3059 = vld [vmem:[#allocation5 + $0x11] sm:$0xff]
      %v3060 = vld [vmem:[#allocation5 + $0x21] sm:$0xff]
      %v3061 = vld [vmem:[#allocation5 + $0x31] sm:$0x7f]
      %v3062 = vmin.f32 %v3054, %v3058
      %v3063 = vmin.f32 %v3055, %v3059
      %v3064 = vmin.f32 %v3056, %v3060
      %v3065 = vmin.f32 %v3057, %v3061
      %v3066 = vld [vmem:[#allocation5 + $0x8] sm:$0xff]
      %v3067 = vld [vmem:[#allocation5 + $0x18] sm:$0xff]
      %v3068 = vld [vmem:[#allocation5 + $0x28] sm:$0xff]
      %v3069 = vld [vmem:[#allocation5 + $0x38] sm:$0x7f]
      %v3070 = vmin.f32 %v3062, %v3066
      %v3071 = vmin.f32 %v3063, %v3067
      %v3072 = vmin.f32 %v3064, %v3068
      %v3073 = vmin.f32 %v3065, %v3069
      %v3074 = vld [vmem:[#allocation5 + $0x9] sm:$0xff]
      %v3075 = vld [vmem:[#allocation5 + $0x19] sm:$0xff]
      %v3076 = vld [vmem:[#allocation5 + $0x29] sm:$0xff]
      %v3077 = vld [vmem:[#allocation5 + $0x39] sm:$0x7f]
      %v3078 = vmin.f32 %v3070, %v3074
      %v3079 = vmin.f32 %v3071, %v3075
      %v3080 = vmin.f32 %v3072, %v3076
      %v3081 = vmin.f32 %v3073, %v3077
      %3082 = vst.msk [vmem:[#allocation6] sm:$0x1] %vm1382, %v3078
      %3083 = vst.msk [vmem:[#allocation6 - $0x1] sm:$0x4] %vm1759, %v3078
      %3084 = vst.msk [vmem:[#allocation6 - $0x2] sm:$0x10] %vm1761, %v3078
      %3085 = vst.msk [vmem:[#allocation6 - $0x3] sm:$0x40] %vm1763, %v3078
      %3086 = vst.msk [vmem:[#allocation6 + $0x4] sm:$0x1] %vm1382, %v3079
      %3087 = vst.msk [vmem:[#allocation6 + $0x3] sm:$0x4] %vm1759, %v3079
      %3088 = vst.msk [vmem:[#allocation6 + $0x2] sm:$0x10] %vm1761, %v3079
      %3089 = vst.msk [vmem:[#allocation6 + $0x1] sm:$0x40] %vm1763, %v3079
      %3090 = vst.msk [vmem:[#allocation6 + $0x8] sm:$0x1] %vm1382, %v3080
      %3091 = vst.msk [vmem:[#allocation6 + $0x7] sm:$0x4] %vm1759, %v3080
      %3092 = vst.msk [vmem:[#allocation6 + $0x6] sm:$0x10] %vm1761, %v3080
      %3093 = vst.msk [vmem:[#allocation6 + $0x5] sm:$0x40] %vm1763, %v3080
      %3094 = vst.msk [vmem:[#allocation6 + $0xc] sm:$0x1] %vm1382, %v3081
      %3095 = vst.msk [vmem:[#allocation6 + $0xb] sm:$0x4] %vm1759, %v3081
      %3096 = vst.msk [vmem:[#allocation6 + $0xa] sm:$0x10] %vm1761, %v3081
      %3097 = vst.msk [vmem:[#allocation6 + $0x9] sm:$0x40] %vm1763, %v3081
      %v3098 = vld [vmem:[#allocation6] sm:$0xff]
      %v3099 = vld [vmem:[#allocation6 + $0x8] sm:$0xff]
      %v3100 = vpack.c.bf16 %v3099, %v3098
      %v3101 = vld [vmem:[%s7] sm:$0xf]
      %v3102 = vld [vmem:[%s8] sm:$0x1]
      %v3104 = vperm.slane %v3102, 0
      %v3107 = vsel %vm1345, %v3100, 0
      %v3110 = vsel %vm2351, %v3101, 0
      %3112 = vmatpush.bf16.msra.mxu0 0
      %3113 = vmatpush.bf16.msra.mxu0 0
      %3114 = vmatpush.bf16.msra.mxu0 0
      %3115 = vmatpush.bf16.msra.mxu0 0
      %3116 = vmatpush.bf16.msra.mxu0 0
      %3117 = vmatpush.bf16.msra.mxu0 0
      %3118 = vmatpush.bf16.msra.mxu0 0
      %3119 = vmatpush.bf16.msra.mxu0 %v3110
      %3120 = vmatmul.bf16.gmra.mxu0 %v3107
      %v3121 = vpop.f32.mrf.mxu0
      %v3122 = vadd.f32 %v3104, %v3121
      %v3123 = vpop.f32.mrf.mxu0
      %v3124 = vadd.f32 %v3104, %v3123
      %3125 = vdwg.mxu0
      %v3126 = vld [vmem:[%s9] sm:$0xf]
      %v3127 = vld [vmem:[%s10] sm:$0x1]
      %v3129 = vperm.slane %v3127, 0
      %v3132 = vsel %vm2351, %v3126, 0
      %3134 = vmatpush.bf16.msra.mxu0 0
      %3135 = vmatpush.bf16.msra.mxu0 0
      %3136 = vmatpush.bf16.msra.mxu0 0
      %3137 = vmatpush.bf16.msra.mxu0 0
      %3138 = vmatpush.bf16.msra.mxu0 0
      %3139 = vmatpush.bf16.msra.mxu0 0
      %3140 = vmatpush.bf16.msra.mxu0 0
      %3141 = vmatpush.bf16.msra.mxu0 %v3132
      %3142 = vmatmul.bf16.gmra.mxu0 %v3107
      %v3143 = vpop.f32.mrf.mxu0
      %v3144 = vadd.f32 %v3129, %v3143
      %v3145 = vpop.f32.mrf.mxu0
      %v3146 = vadd.f32 %v3129, %v3145
      %3147 = vdwg.mxu0
      %v3148 = vmax.f32 %v3144, 0.0
      %v3149 = vmax.f32 %v3146, 0.0
      %3150 = vst.msk [vmem:[#allocation7] sm:$0xff] %vm2213, 0.0
      %3151 = vst.msk [vmem:[#allocation7 + $0x8] sm:$0xff] %vm2213, 0.0
      %3152 = vst.msk [vmem:[#allocation7 + $0x10] sm:$0xff] %vm2213, 0.0
      %3153 = vst.msk [vmem:[#allocation7 + $0x18] sm:$0xff] %vm2213, 0.0
      %vm3154 = vcmask 125952
      %3155 = vst.msk [vmem:[#allocation7 + $0x20] sm:$0xf] %vm3154, 0.0
      %3156 = vst.msk [vmem:[#allocation7 + $0x7] sm:$0xf] %vm3154, %v3148
      %vm3157 = vcmask 130052
      %3158 = vst.msk [vmem:[#allocation7 + $0x9] sm:$0xf0] %vm3157, %v3148
      %3159 = vst.msk [vmem:[#allocation7 + $0x13] sm:$0xf] %vm3154, %v3149
      %3160 = vst.msk [vmem:[#allocation7 + $0x15] sm:$0xf0] %vm3157, %v3149
      %v3161 = vld [vmem:[#allocation7] sm:$0xff]
      %v3162 = vld [vmem:[#allocation7 + $0x8] sm:$0xff]
      %v3163 = vld [vmem:[#allocation7 + $0x10] sm:$0x3f]
      %v3164 = vld [vmem:[#allocation7 + $0x1] sm:$0xff]
      %v3165 = vld [vmem:[#allocation7 + $0x9] sm:$0xff]
      %v3166 = vld [vmem:[#allocation7 + $0x11] sm:$0x3f]
      %v3167 = vld [vmem:[#allocation7 + $0x2] sm:$0xff]
      %v3168 = vld [vmem:[#allocation7 + $0xa] sm:$0xff]
      %v3169 = vld [vmem:[#allocation7 + $0x12] sm:$0x3f]
      %v3170 = vld [vmem:[#allocation7 + $0x6] sm:$0xff]
      %v3171 = vld [vmem:[#allocation7 + $0xe] sm:$0xff]
      %v3172 = vld [vmem:[#allocation7 + $0x16] sm:$0x3f]
      %v3173 = vld [vmem:[#allocation7 + $0x7] sm:$0xff]
      %v3174 = vld [vmem:[#allocation7 + $0xf] sm:$0xff]
      %v3175 = vld [vmem:[#allocation7 + $0x17] sm:$0x3f]
      %v3176 = vld [vmem:[#allocation7 + $0x10] sm:$0xff]
      %v3177 = vld [vmem:[#allocation7 + $0x18] sm:$0x3f]
      %v3178 = vld [vmem:[#allocation7 + $0xc] sm:$0xff]
      %v3179 = vld [vmem:[#allocation7 + $0x14] sm:$0xff]
      %v3180 = vld [vmem:[#allocation7 + $0x1c] sm:$0x3f]
      %v3181 = vld [vmem:[#allocation7 + $0xd] sm:$0xff]
      %v3182 = vld [vmem:[#allocation7 + $0x15] sm:$0xff]
      %v3183 = vld [vmem:[#allocation7 + $0x1d] sm:$0x3f]
      %v3184 = vld [vmem:[#allocation7 + $0x16] sm:$0xff]
      %v3185 = vld [vmem:[#allocation7 + $0x1e] sm:$0x3f]
      %3189 = vrot.lane.b32.xlu0 %v3164, 16
      %v3190 = vpop.permute.xlu0 %3189
      %3191 = vrot.lane.b32.xlu0 %v3165, 16
      %v3192 = vpop.permute.xlu0 %3191
      %3193 = vrot.lane.b32.xlu0 %v3166, 16
      %v3194 = vpop.permute.xlu0 %3193
      %3201 = vrot.lane.b32.xlu0 %v3167, 32
      %v3202 = vpop.permute.xlu0 %3201
      %3203 = vrot.lane.b32.xlu0 %v3168, 32
      %v3204 = vpop.permute.xlu0 %3203
      %3205 = vrot.lane.b32.xlu0 %v3169, 32
      %v3206 = vpop.permute.xlu0 %3205
      %3213 = vrot.lane.b32.xlu0 %v3170, 48
      %v3214 = vpop.permute.xlu0 %3213
      %3215 = vrot.lane.b32.xlu0 %v3171, 48
      %v3216 = vpop.permute.xlu0 %3215
      %3217 = vrot.lane.b32.xlu0 %v3172, 48
      %v3218 = vpop.permute.xlu0 %3217
      %3225 = vrot.lane.b32.xlu0 %v3173, 64
      %v3226 = vpop.permute.xlu0 %3225
      %3227 = vrot.lane.b32.xlu0 %v3174, 64
      %v3228 = vpop.permute.xlu0 %3227
      %3229 = vrot.lane.b32.xlu0 %v3175, 64
      %v3230 = vpop.permute.xlu0 %3229
      %3237 = vrot.lane.b32.xlu0 %v3162, 80
      %v3238 = vpop.permute.xlu0 %3237
      %3239 = vrot.lane.b32.xlu0 %v3176, 80
      %v3240 = vpop.permute.xlu0 %3239
      %3241 = vrot.lane.b32.xlu0 %v3177, 80
      %v3242 = vpop.permute.xlu0 %3241
      %3249 = vrot.lane.b32.xlu0 %v3178, 96
      %v3250 = vpop.permute.xlu0 %3249
      %3251 = vrot.lane.b32.xlu0 %v3179, 96
      %v3252 = vpop.permute.xlu0 %3251
      %3253 = vrot.lane.b32.xlu0 %v3180, 96
      %v3254 = vpop.permute.xlu0 %3253
      %3261 = vrot.lane.b32.xlu0 %v3181, 112
      %v3262 = vpop.permute.xlu0 %3261
      %3263 = vrot.lane.b32.xlu0 %v3182, 112
      %v3264 = vpop.permute.xlu0 %3263
      %3265 = vrot.lane.b32.xlu0 %v3183, 112
      %v3266 = vpop.permute.xlu0 %3265
      %v3270 = vsel %vm2213, %v3161, %v3190
      %v3271 = vsel %vm2213, %v3162, %v3192
      %v3272 = vsel %vm2213, %v3163, %v3194
      %v3273 = vsel %vm2235, %v3270, %v3202
      %v3274 = vsel %vm2235, %v3271, %v3204
      %v3275 = vsel %vm2235, %v3272, %v3206
      %v3276 = vsel %vm2257, %v3273, %v3214
      %v3277 = vsel %vm2257, %v3274, %v3216
      %v3278 = vsel %vm2257, %v3275, %v3218
      %v3279 = vsel %vm2279, %v3276, %v3226
      %v3280 = vsel %vm2279, %v3277, %v3228
      %v3281 = vsel %vm2279, %v3278, %v3230
      %vm3282 = vcmask 654336
      %v3283 = vsel %vm3282, %v3279, %v3238
      %v3284 = vsel %vm3282, %v3280, %v3240
      %v3285 = vsel %vm3282, %v3281, %v3242
      %vm3286 = vcmask 785408
      %v3287 = vsel %vm3286, %v3283, %v3250
      %v3288 = vsel %vm3286, %v3284, %v3252
      %v3289 = vsel %vm3286, %v3285, %v3254
      %vm3290 = vcmask 916480
      %v3291 = vsel %vm3290, %v3287, %v3262
      %v3292 = vsel %vm3290, %v3288, %v3264
      %v3293 = vsel %vm3290, %v3289, %v3266
      %v3294 = vpack.c.bf16 %v3292, %v3291
      %v3295 = vpack.c.bf16 %v3184, %v3171
      %v3296 = vpack.c.bf16 %v3293, %v3293
      %v3297 = vpack.c.bf16 %v3185, %v3185
      %v3298 = vld [vmem:[%s11] sm:$0xf]
      %v3299 = vld [vmem:[%s11 + $0x4] sm:$0xf]
      %v3300 = vld [vmem:[%s11 + $0x8] sm:$0xf]
      %v3301 = vld [vmem:[%s11 + $0xc] sm:$0xf]
      %v3302 = vld [vmem:[%s11 + $0x10] sm:$0xf]
      %v3303 = vld [vmem:[%s11 + $0x14] sm:$0xf]
      %v3304 = vld [vmem:[%s11 + $0x18] sm:$0xf]
      %v3305 = vld [vmem:[%s11 + $0x1c] sm:$0xf]
      %v3306 = vld [vmem:[%s11 + $0x20] sm:$0xf]
      %v3307 = vld [vmem:[%s11 + $0x24] sm:$0xf]
      %v3308 = vld [vmem:[%s11 + $0x28] sm:$0xf]
      %v3309 = vld [vmem:[%s11 + $0x2c] sm:$0xf]
      %v3310 = vld [vmem:[%s11 + $0x30] sm:$0xf]
      %v3311 = vld [vmem:[%s11 + $0x34] sm:$0xf]
      %v3312 = vld [vmem:[%s11 + $0x38] sm:$0xf]
      %v3313 = vld [vmem:[%s11 + $0x3c] sm:$0xf]
      %v3314 = vld [vmem:[%s11 + $0x40] sm:$0xf]
      %v3315 = vld [vmem:[%s11 + $0x44] sm:$0xf]
      %v3316 = vld [vmem:[%s12] sm:$0x1]
      %v3318 = vperm.slane %v3316, 0
      %v3338 = vunpack.c.l.b16 %v3298
      %v3339 = vunpack.c.l.b16 %v3299
      %v3340 = vunpack.c.l.b16 %v3300
      %v3341 = vunpack.c.l.b16 %v3301
      %v3342 = vunpack.c.l.b16 %v3302
      %v3343 = vunpack.c.l.b16 %v3303
      %v3344 = vunpack.c.l.b16 %v3304
      %v3345 = vunpack.c.l.b16 %v3305
      %v3346 = vunpack.c.l.b16 %v3306
      %v3347 = vunpack.c.l.b16 %v3307
      %v3348 = vunpack.c.l.b16 %v3308
      %v3349 = vunpack.c.l.b16 %v3309
      %v3350 = vunpack.c.l.b16 %v3310
      %v3351 = vunpack.c.l.b16 %v3311
      %v3352 = vunpack.c.l.b16 %v3312
      %v3353 = vunpack.c.l.b16 %v3313
      %v3354 = vunpack.c.l.b16 %v3314
      %v3355 = vunpack.c.l.b16 %v3315
      %v3356 = vpack.c.b16 %v3339, %v3338
      %v3357 = vpack.c.b16 %v3341, %v3340
      %v3358 = vpack.c.b16 %v3343, %v3342
      %v3359 = vpack.c.b16 %v3345, %v3344
      %v3360 = vpack.c.b16 %v3347, %v3346
      %v3361 = vpack.c.b16 %v3349, %v3348
      %v3362 = vpack.c.b16 %v3351, %v3350
      %v3363 = vpack.c.b16 %v3353, %v3352
      %v3364 = vpack.c.b16 %v3355, %v3354
      %v3375 = vsel %vm2213, %v3295, 0
      %v3378 = vsel %vm2213, %v3297, 0
      %3380 = vmatpush.bf16.msra.mxu0 %v3363
      %3381 = vmatpush.bf16.msra.mxu0 %v3362
      %3382 = vmatpush.bf16.msra.mxu0 %v3361
      %3383 = vmatpush.bf16.msra.mxu0 %v3360
      %3384 = vmatpush.bf16.msra.mxu0 %v3359
      %3385 = vmatpush.bf16.msra.mxu0 %v3358
      %3386 = vmatpush.bf16.msra.mxu0 %v3357
      %3387 = vmatpush.bf16.msra.mxu0 %v3356
      %3388 = vmatmul.bf16.gmra.mxu0 %v3294
      %v3389 = vpop.f32.mrf.mxu0
      %v3390 = vadd.f32 %v3318, %v3389
      %v3391 = vpop.f32.mrf.mxu0
      %v3392 = vadd.f32 %v3318, %v3391
      %3393 = vmatmul.bf16.gmra.mxu0 %v3296
      %v3394 = vpop.f32.mrf.mxu0
      %v3395 = vadd.f32 %v3318, %v3394
      %v3396 = vpop.f32.mrf.mxu0
      %3397 = vdwg.mxu0
      %3398 = vmatpush.bf16.msra.mxu0 0
      %3399 = vmatpush.bf16.msra.mxu0 0
      %3400 = vmatpush.bf16.msra.mxu0 0
      %3401 = vmatpush.bf16.msra.mxu0 0
      %3402 = vmatpush.bf16.msra.mxu0 0
      %3403 = vmatpush.bf16.msra.mxu0 0
      %3404 = vmatpush.bf16.msra.mxu0 0
      %3405 = vmatpush.bf16.msra.mxu0 %v3364
      %3406 = vmatmul.bf16.gmra.mxu0 %v3375
      %v3407 = vpop.f32.mrf.mxu0
      %v3408 = vadd.f32 %v3390, %v3407
      %v3409 = vpop.f32.mrf.mxu0
      %v3410 = vadd.f32 %v3392, %v3409
      %3411 = vmatmul.bf16.gmra.mxu0 %v3378
      %v3412 = vpop.f32.mrf.mxu0
      %v3413 = vadd.f32 %v3395, %v3412
      %v3414 = vpop.f32.mrf.mxu0
      %3415 = vdwg.mxu0
      %v3416 = vadd.f32 %v3408, %v3122
      %v3417 = vmax.f32 %v3416, 0.0
      %3418 = vst.msk [vmem:[#allocation8] sm:$0xf] %vm3154, %v3417
      %v3420 = vrot.slane %v3122, 6
      %v3422 = vadd.f32 %v3408, %v3420
      %v3423 = vadd.f32 %v3410, %v3420
      %v3424 = vmax.f32 %v3422, 0.0
      %v3425 = vmax.f32 %v3423, 0.0
      %vm3426 = vcmask 130054
      %3427 = vst.msk [vmem:[#allocation8 - $0x2] sm:$0xc0] %vm3426, %v3424
      %vm3428 = vcmask 123904
      %3429 = vst.msk [vmem:[#allocation8 + $0x6] sm:$0x3] %vm3428, %v3425
      %v3431 = vrot.slane %v3124, 4
      %v3433 = vadd.f32 %v3410, %v3431
      %v3434 = vmax.f32 %v3433, 0.0
      %3435 = vst.msk [vmem:[#allocation8 + $0x4] sm:$0xf0] %vm3157, %v3434
      %v3436 = vrot.slane %v3124, 2
      %v3438 = vadd.f32 %v3413, %v3436
      %v3439 = vmax.f32 %v3438, 0.0
      %vm3440 = vcmask 128002
      %3441 = vst.msk [vmem:[#allocation8 + $0xa] sm:$0x3c] %vm3440, %v3439
      %v3442 = vld [vmem:[#allocation8] sm:$0xff]
      %v3443 = vld [vmem:[#allocation8 + $0x8] sm:$0x7]
      %v3444 = vld [vmem:[#allocation8 + $0x1] sm:$0xff]
      %v3445 = vld [vmem:[#allocation8 + $0x9] sm:$0x7]
      %v3446 = vmin.f32 %v3442, %v3444
      %v3447 = vmin.f32 %v3443, %v3445
      %v3448 = vld [vmem:[#allocation8 + $0x4] sm:$0xff]
      %v3449 = vld [vmem:[#allocation8 + $0xc] sm:$0x7]
      %v3450 = vmin.f32 %v3446, %v3448
      %v3451 = vmin.f32 %v3447, %v3449
      %v3452 = vld [vmem:[#allocation8 + $0x5] sm:$0xff]
      %v3453 = vld [vmem:[#allocation8 + $0xd] sm:$0x7]
      %v3454 = vmin.f32 %v3450, %v3452
      %v3455 = vmin.f32 %v3451, %v3453
      %vm3456 = vcmask 122880
      %3457 = vst.msk [vmem:[#allocation9] sm:$0x1] %vm3456, %v3454
      %vm3458 = vcmask 124930
      %3459 = vst.msk [vmem:[#allocation9 - $0x1] sm:$0x4] %vm3458, %v3454
      %3460 = vst.msk [vmem:[#allocation9 + $0x2] sm:$0x1] %vm3456, %v3455
      %3461 = vst.msk [vmem:[#allocation9 + $0x1] sm:$0x4] %vm3458, %v3455
      %v3462 = vld [vmem:[#allocation9] sm:$0xf]
      %v3463 = vpack.c.bf16 %v3462, %v3462
      %v3464 = vld [vmem:[%s13] sm:$0xf]
      %v3465 = vld [vmem:[%s13 + $0x4] sm:$0xf]
      %v3466 = vld [vmem:[%s14] sm:$0x1]
      %v3468 = vperm.slane %v3466, 0
      %v3472 = vunpack.c.l.b16 %v3464
      %v3473 = vunpack.c.l.b16 %v3465
      %v3474 = vpack.c.b16 %v3473, %v3472
      %v3477 = vsel %vm2213, %v3463, 0
      %3479 = vmatpush.bf16.msra.mxu0 0
      %3480 = vmatpush.bf16.msra.mxu0 0
      %3481 = vmatpush.bf16.msra.mxu0 0
      %3482 = vmatpush.bf16.msra.mxu0 0
      %3483 = vmatpush.bf16.msra.mxu0 0
      %3484 = vmatpush.bf16.msra.mxu0 0
      %3485 = vmatpush.bf16.msra.mxu0 0
      %3486 = vmatpush.bf16.msra.mxu0 %v3474
      %3487 = vmatmul.bf16.gmra.mxu0 %v3477
      %v3488 = vpop.f32.mrf.mxu0
      %v3489 = vadd.f32 %v3468, %v3488
      %v3490 = vpop.f32.mrf.mxu0
      %3491 = vdwg.mxu0
      %v3492 = vld [vmem:[%s15] sm:$0xf]
      %v3493 = vld [vmem:[%s15 + $0x4] sm:$0xf]
      %v3494 = vld [vmem:[%s16] sm:$0x1]
      %v3496 = vperm.slane %v3494, 0
      %v3500 = vunpack.c.l.b16 %v3492
      %v3501 = vunpack.c.l.b16 %v3493
      %v3502 = vpack.c.b16 %v3501, %v3500
      %3504 = vmatpush.bf16.msra.mxu0 0
      %3505 = vmatpush.bf16.msra.mxu0 0
      %3506 = vmatpush.bf16.msra.mxu0 0
      %3507 = vmatpush.bf16.msra.mxu0 0
      %3508 = vmatpush.bf16.msra.mxu0 0
      %3509 = vmatpush.bf16.msra.mxu0 0
      %3510 = vmatpush.bf16.msra.mxu0 0
      %3511 = vmatpush.bf16.msra.mxu0 %v3502
      %3512 = vmatmul.bf16.gmra.mxu0 %v3477
      %v3513 = vpop.f32.mrf.mxu0
      %v3514 = vadd.f32 %v3496, %v3513
      %v3515 = vpop.f32.mrf.mxu0
      %3516 = vdwg.mxu0
      %v3517 = vmax.f32 %v3514, 0.0
      %3518 = vst.msk [vmem:[#allocation10] sm:$0xff] %vm2235, 0.0
      %3519 = vst.msk [vmem:[#allocation10 + $0x8] sm:$0xff] %vm2235, 0.0
      %vm3520 = vcmask 254976
      %3521 = vst.msk [vmem:[#allocation10 + $0x5] sm:$0x3] %vm3520, %v3517
      %vm3522 = vcmask 257026
      %3523 = vst.msk [vmem:[#allocation10 + $0x7] sm:$0xc] %vm3522, %v3517
      %v3524 = vld [vmem:[#allocation10] sm:$0x3f]
      %v3525 = vld [vmem:[#allocation10 + $0x1] sm:$0x3f]
      %v3526 = vld [vmem:[#allocation10 + $0x2] sm:$0x3f]
      %v3527 = vld [vmem:[#allocation10 + $0x4] sm:$0x3f]
      %v3528 = vld [vmem:[#allocation10 + $0x5] sm:$0x3f]
      %v3529 = vld [vmem:[#allocation10 + $0x6] sm:$0x3f]
      %v3530 = vld [vmem:[#allocation10 + $0x8] sm:$0x3f]
      %v3531 = vld [vmem:[#allocation10 + $0x9] sm:$0x3f]
      %v3532 = vld [vmem:[#allocation10 + $0xa] sm:$0x3f]
      %3534 = vrot.lane.b32.xlu0 %v3525, 32
      %v3535 = vpop.permute.xlu0 %3534
      %3538 = vrot.lane.b32.xlu0 %v3526, 64
      %v3539 = vpop.permute.xlu0 %3538
      %3542 = vrot.lane.b32.xlu0 %v3527, 96
      %v3543 = vpop.permute.xlu0 %3542
      %3546 = vrot.lane.b32.xlu0 %v3529, 32
      %v3547 = vpop.permute.xlu0 %3546
      %3550 = vrot.lane.b32.xlu0 %v3530, 64
      %v3551 = vpop.permute.xlu0 %3550
      %3554 = vrot.lane.b32.xlu0 %v3531, 96
      %v3555 = vpop.permute.xlu0 %3554
      %v3557 = vsel %vm2235, %v3524, %v3535
      %v3558 = vsel %vm2279, %v3557, %v3539
      %v3559 = vsel %vm3286, %v3558, %v3543
      %v3560 = vsel %vm2235, %v3528, %v3547
      %v3561 = vsel %vm2279, %v3560, %v3551
      %v3562 = vsel %vm3286, %v3561, %v3555
      %v3563 = vpack.c.bf16 %v3559, %v3559
      %v3564 = vpack.c.bf16 %v3562, %v3562
      %v3565 = vpack.c.bf16 %v3532, %v3532
      %v3566 = vld [vmem:[%s17] sm:$0xf]
      %v3567 = vld [vmem:[%s17 + $0x4] sm:$0xf]
      %v3568 = vld [vmem:[%s17 + $0x8] sm:$0xf]
      %v3569 = vld [vmem:[%s17 + $0xc] sm:$0xf]
      %v3570 = vld [vmem:[%s17 + $0x10] sm:$0xf]
      %v3571 = vld [vmem:[%s17 + $0x14] sm:$0xf]
      %v3572 = vld [vmem:[%s17 + $0x18] sm:$0xf]
      %v3573 = vld [vmem:[%s17 + $0x1c] sm:$0xf]
      %v3574 = vld [vmem:[%s17 + $0x20] sm:$0xf]
      %v3575 = vld [vmem:[%s17 + $0x24] sm:$0xf]
      %v3576 = vld [vmem:[%s17 + $0x28] sm:$0xf]
      %v3577 = vld [vmem:[%s17 + $0x2c] sm:$0xf]
      %v3578 = vld [vmem:[%s17 + $0x30] sm:$0xf]
      %v3579 = vld [vmem:[%s17 + $0x34] sm:$0xf]
      %v3580 = vld [vmem:[%s17 + $0x38] sm:$0xf]
      %v3581 = vld [vmem:[%s17 + $0x3c] sm:$0xf]
      %v3582 = vld [vmem:[%s17 + $0x40] sm:$0xf]
      %v3583 = vld [vmem:[%s17 + $0x44] sm:$0xf]
      %v3584 = vld [vmem:[%s17 + $0x48] sm:$0xf]
      %v3585 = vld [vmem:[%s17 + $0x4c] sm:$0xf]
      %v3586 = vld [vmem:[%s17 + $0x50] sm:$0xf]
      %v3587 = vld [vmem:[%s17 + $0x54] sm:$0xf]
      %v3588 = vld [vmem:[%s17 + $0x58] sm:$0xf]
      %v3589 = vld [vmem:[%s17 + $0x5c] sm:$0xf]
      %v3590 = vld [vmem:[%s17 + $0x60] sm:$0xf]
      %v3591 = vld [vmem:[%s17 + $0x64] sm:$0xf]
      %v3592 = vld [vmem:[%s17 + $0x68] sm:$0xf]
      %v3593 = vld [vmem:[%s17 + $0x6c] sm:$0xf]
      %v3594 = vld [vmem:[%s17 + $0x70] sm:$0xf]
      %v3595 = vld [vmem:[%s17 + $0x74] sm:$0xf]
      %v3596 = vld [vmem:[%s17 + $0x78] sm:$0xf]
      %v3597 = vld [vmem:[%s17 + $0x7c] sm:$0xf]
      %v3598 = vld [vmem:[%s17 + $0x80] sm:$0xf]
      %v3599 = vld [vmem:[%s17 + $0x84] sm:$0xf]
      %v3600 = vld [vmem:[%s17 + $0x88] sm:$0xf]
      %v3601 = vld [vmem:[%s17 + $0x8c] sm:$0xf]
      %v3602 = vld [vmem:[%s18] sm:$0x1]
      %v3604 = vperm.slane %v3602, 0
      %v3642 = vunpack.c.l.b16 %v3566
      %v3643 = vunpack.c.l.b16 %v3567
      %v3644 = vunpack.c.l.b16 %v3568
      %v3645 = vunpack.c.l.b16 %v3569
      %v3646 = vunpack.c.l.b16 %v3570
      %v3647 = vunpack.c.l.b16 %v3571
      %v3648 = vunpack.c.l.b16 %v3572
      %v3649 = vunpack.c.l.b16 %v3573
      %v3650 = vunpack.c.l.b16 %v3574
      %v3651 = vunpack.c.l.b16 %v3575
      %v3652 = vunpack.c.l.b16 %v3576
      %v3653 = vunpack.c.l.b16 %v3577
      %v3654 = vunpack.c.l.b16 %v3578
      %v3655 = vunpack.c.l.b16 %v3579
      %v3656 = vunpack.c.l.b16 %v3580
      %v3657 = vunpack.c.l.b16 %v3581
      %v3658 = vunpack.c.l.b16 %v3582
      %v3659 = vunpack.c.l.b16 %v3583
      %v3660 = vunpack.c.l.b16 %v3584
      %v3661 = vunpack.c.l.b16 %v3585
      %v3662 = vunpack.c.l.b16 %v3586
      %v3663 = vunpack.c.l.b16 %v3587
      %v3664 = vunpack.c.l.b16 %v3588
      %v3665 = vunpack.c.l.b16 %v3589
      %v3666 = vunpack.c.l.b16 %v3590
      %v3667 = vunpack.c.l.b16 %v3591
      %v3668 = vunpack.c.l.b16 %v3592
      %v3669 = vunpack.c.l.b16 %v3593
      %v3670 = vunpack.c.l.b16 %v3594
      %v3671 = vunpack.c.l.b16 %v3595
      %v3672 = vunpack.c.l.b16 %v3596
      %v3673 = vunpack.c.l.b16 %v3597
      %v3674 = vunpack.c.l.b16 %v3598
      %v3675 = vunpack.c.l.b16 %v3599
      %v3676 = vunpack.c.l.b16 %v3600
      %v3677 = vunpack.c.l.b16 %v3601
      %v3678 = vpack.c.b16 %v3643, %v3642
      %v3679 = vpack.c.b16 %v3645, %v3644
      %v3680 = vpack.c.b16 %v3647, %v3646
      %v3681 = vpack.c.b16 %v3649, %v3648
      %v3682 = vpack.c.b16 %v3651, %v3650
      %v3683 = vpack.c.b16 %v3653, %v3652
      %v3684 = vpack.c.b16 %v3655, %v3654
      %v3685 = vpack.c.b16 %v3657, %v3656
      %v3686 = vpack.c.b16 %v3659, %v3658
      %v3687 = vpack.c.b16 %v3661, %v3660
      %v3688 = vpack.c.b16 %v3663, %v3662
      %v3689 = vpack.c.b16 %v3665, %v3664
      %v3690 = vpack.c.b16 %v3667, %v3666
      %v3691 = vpack.c.b16 %v3669, %v3668
      %v3692 = vpack.c.b16 %v3671, %v3670
      %v3693 = vpack.c.b16 %v3673, %v3672
      %v3694 = vpack.c.b16 %v3675, %v3674
      %v3695 = vpack.c.b16 %v3677, %v3676
      %v3715 = vsel %vm2235, %v3565, 0
      %3717 = vmatpush.bf16.msra.mxu0 %v3685
      %3718 = vmatpush.bf16.msra.mxu0 %v3684
      %3719 = vmatpush.bf16.msra.mxu0 %v3683
      %3720 = vmatpush.bf16.msra.mxu0 %v3682
      %3721 = vmatpush.bf16.msra.mxu0 %v3681
      %3722 = vmatpush.bf16.msra.mxu0 %v3680
      %3723 = vmatpush.bf16.msra.mxu0 %v3679
      %3724 = vmatpush.bf16.msra.mxu0 %v3678
      %3725 = vmatmul.bf16.gmra.mxu0 %v3563
      %v3726 = vpop.f32.mrf.mxu0
      %v3727 = vadd.f32 %v3604, %v3726
      %v3728 = vpop.f32.mrf.mxu0
      %3729 = vdwg.mxu0
      %3730 = vmatpush.bf16.msra.mxu0 %v3693
      %3731 = vmatpush.bf16.msra.mxu0 %v3692
      %3732 = vmatpush.bf16.msra.mxu0 %v3691
      %3733 = vmatpush.bf16.msra.mxu0 %v3690
      %3734 = vmatpush.bf16.msra.mxu0 %v3689
      %3735 = vmatpush.bf16.msra.mxu0 %v3688
      %3736 = vmatpush.bf16.msra.mxu0 %v3687
      %3737 = vmatpush.bf16.msra.mxu0 %v3686
      %3738 = vmatmul.bf16.gmra.mxu0 %v3564
      %v3739 = vpop.f32.mrf.mxu0
      %v3740 = vadd.f32 %v3727, %v3739
      %v3741 = vpop.f32.mrf.mxu0
      %3742 = vdwg.mxu0
      %3743 = vmatpush.bf16.msra.mxu0 0
      %3744 = vmatpush.bf16.msra.mxu0 0
      %3745 = vmatpush.bf16.msra.mxu0 0
      %3746 = vmatpush.bf16.msra.mxu0 0
      %3747 = vmatpush.bf16.msra.mxu0 0
      %3748 = vmatpush.bf16.msra.mxu0 0
      %3749 = vmatpush.bf16.msra.mxu0 %v3695
      %3750 = vmatpush.bf16.msra.mxu0 %v3694
      %3751 = vmatmul.bf16.gmra.mxu0 %v3715
      %v3752 = vpop.f32.mrf.mxu0
      %v3753 = vadd.f32 %v3740, %v3752
      %v3754 = vpop.f32.mrf.mxu0
      %3755 = vdwg.mxu0
      %v3756 = vadd.f32 %v3753, %v3489
      %v3757 = vmax.f32 %v3756, 0.0
      %3758 = vst.msk [vmem:[#allocation11] sm:$0x3] %vm3520, %v3757
      %v3760 = vrot.slane %v3489, 6
      %v3762 = vadd.f32 %v3753, %v3760
      %v3763 = vmax.f32 %v3762, 0.0
      %vm3764 = vcmask 259076
      %3765 = vst.msk [vmem:[#allocation11 - $0x2] sm:$0x30] %vm3764, %v3763
      %v3766 = vld [vmem:[#allocation11] sm:$0x1]
      %v3767 = vld [vmem:[#allocation11 + $0x1] sm:$0x1]
      %v3768 = vmin.f32 %v3766, %v3767
      %v3769 = vld [vmem:[#allocation11 + $0x2] sm:$0x1]
      %v3770 = vmin.f32 %v3768, %v3769
      %v3771 = vld [vmem:[#allocation11 + $0x3] sm:$0x1]
      %v3772 = vmin.f32 %v3770, %v3771
      %vm3773 = vcmask 253952
      %3774 = vst.msk [vmem:[#allocation12] sm:$0x1] %vm3773, %v3772
      %v3775 = vld [vmem:[#allocation12] sm:$0x1]
      %v3776 = vpack.c.bf16 %v3775, %v3775
      %v3777 = vld [vmem:[%s19] sm:$0xf]
      %v3778 = vld [vmem:[%s19 + $0x4] sm:$0xf]
      %v3779 = vld [vmem:[%s19 + $0x8] sm:$0xf]
      %v3780 = vld [vmem:[%s19 + $0xc] sm:$0xf]
      %v3781 = vld [vmem:[%s20] sm:$0x1]
      %v3786 = vunpack.c.l.b16 %v3777
      %v3787 = vunpack.c.l.b16 %v3778
      %v3788 = vunpack.c.l.b16 %v3779
      %v3789 = vunpack.c.l.b16 %v3780
      %v3790 = vpack.c.b16 %v3787, %v3786
      %v3791 = vpack.c.b16 %v3789, %v3788
      %v3795 = vsel %vm2235, %v3776, 0
      %3797 = vmatpush.bf16.msra.mxu0 0
      %3798 = vmatpush.bf16.msra.mxu0 0
      %3799 = vmatpush.bf16.msra.mxu0 0
      %3800 = vmatpush.bf16.msra.mxu0 0
      %3801 = vmatpush.bf16.msra.mxu0 0
      %3802 = vmatpush.bf16.msra.mxu0 0
      %3803 = vmatpush.bf16.msra.mxu0 %v3791
      %3804 = vmatpush.bf16.msra.mxu0 %v3790
      %3805 = vmatmul.bf16.gmra.mxu0 %v3795
      %v3806 = vpop.f32.mrf.mxu0
      %v3807 = vadd.f32 %v3781, %v3806
      %v3808 = vpop.f32.mrf.mxu0
      %3809 = vdwg.mxu0
      %v3810 = vld [vmem:[%s21] sm:$0xf]
      %v3811 = vld [vmem:[%s21 + $0x4] sm:$0xf]
      %v3812 = vld [vmem:[%s21 + $0x8] sm:$0xf]
      %v3813 = vld [vmem:[%s21 + $0xc] sm:$0xf]
      %v3814 = vld [vmem:[%s22] sm:$0x1]
      %v3819 = vunpack.c.l.b16 %v3810
      %v3820 = vunpack.c.l.b16 %v3811
      %v3821 = vunpack.c.l.b16 %v3812
      %v3822 = vunpack.c.l.b16 %v3813
      %v3823 = vpack.c.b16 %v3820, %v3819
      %v3824 = vpack.c.b16 %v3822, %v3821
      %3827 = vmatpush.bf16.msra.mxu0 0
      %3828 = vmatpush.bf16.msra.mxu0 0
      %3829 = vmatpush.bf16.msra.mxu0 0
      %3830 = vmatpush.bf16.msra.mxu0 0
      %3831 = vmatpush.bf16.msra.mxu0 0
      %3832 = vmatpush.bf16.msra.mxu0 0
      %3833 = vmatpush.bf16.msra.mxu0 %v3824
      %3834 = vmatpush.bf16.msra.mxu0 %v3823
      %3835 = vmatmul.bf16.gmra.mxu0 %v3795
      %v3836 = vpop.f32.mrf.mxu0
      %v3837 = vadd.f32 %v3814, %v3836
      %v3838 = vpop.f32.mrf.mxu0
      %3839 = vdwg.mxu0
      %v3840 = vmax.f32 %v3837, 0.0
      %3841 = vst.msk [vmem:[#allocation13] sm:$0xff] %vm2279, 0.0
      %vm3842 = vcmask 516096
      %3843 = vst.msk [vmem:[#allocation13 + $0x8] sm:$0x1] %vm3842, 0.0
      %3844 = vst.msk [vmem:[#allocation13 + $0x4] sm:$0x1] %vm3842, %v3840
      %v3845 = vld [vmem:[#allocation13] sm:$0x1]
      %v3846 = vld [vmem:[#allocation13 + $0x1] sm:$0x1]
      %v3847 = vld [vmem:[#allocation13 + $0x2] sm:$0x1]
      %v3848 = vld [vmem:[#allocation13 + $0x3] sm:$0x1]
      %v3849 = vld [vmem:[#allocation13 + $0x4] sm:$0x1]
      %v3850 = vld [vmem:[#allocation13 + $0x5] sm:$0x1]
      %v3851 = vld [vmem:[#allocation13 + $0x6] sm:$0x1]
      %v3852 = vld [vmem:[#allocation13 + $0x7] sm:$0x1]
      %v3853 = vld [vmem:[#allocation13 + $0x8] sm:$0x1]
      %3855 = vrot.lane.b32.xlu0 %v3846, 64
      %v3856 = vpop.permute.xlu0 %3855
      %3859 = vrot.lane.b32.xlu0 %v3848, 64
      %v3860 = vpop.permute.xlu0 %3859
      %3863 = vrot.lane.b32.xlu0 %v3850, 64
      %v3864 = vpop.permute.xlu0 %3863
      %3867 = vrot.lane.b32.xlu0 %v3852, 64
      %v3868 = vpop.permute.xlu0 %3867
      %v3870 = vsel %vm2279, %v3845, %v3856
      %v3871 = vsel %vm2279, %v3847, %v3860
      %v3872 = vsel %vm2279, %v3849, %v3864
      %v3873 = vsel %vm2279, %v3851, %v3868
      %v3874 = vpack.c.bf16 %v3870, %v3870
      %v3875 = vpack.c.bf16 %v3871, %v3871
      %v3876 = vpack.c.bf16 %v3872, %v3872
      %v3877 = vpack.c.bf16 %v3873, %v3873
      %v3878 = vpack.c.bf16 %v3853, %v3853
      %v3879 = vld [vmem:[%s23] sm:$0xf]
      %v3880 = vld [vmem:[%s23 + $0x4] sm:$0xf]
      %v3881 = vld [vmem:[%s23 + $0x8] sm:$0xf]
      %v3882 = vld [vmem:[%s23 + $0xc] sm:$0xf]
      %v3883 = vld [vmem:[%s23 + $0x10] sm:$0xf]
      %v3884 = vld [vmem:[%s23 + $0x14] sm:$0xf]
      %v3885 = vld [vmem:[%s23 + $0x18] sm:$0xf]
      %v3886 = vld [vmem:[%s23 + $0x1c] sm:$0xf]
      %v3887 = vld [vmem:[%s23 + $0x20] sm:$0xf]
      %v3888 = vld [vmem:[%s23 + $0x24] sm:$0xf]
      %v3889 = vld [vmem:[%s23 + $0x28] sm:$0xf]
      %v3890 = vld [vmem:[%s23 + $0x2c] sm:$0xf]
      %v3891 = vld [vmem:[%s23 + $0x30] sm:$0xf]
      %v3892 = vld [vmem:[%s23 + $0x34] sm:$0xf]
      %v3893 = vld [vmem:[%s23 + $0x38] sm:$0xf]
      %v3894 = vld [vmem:[%s23 + $0x3c] sm:$0xf]
      %v3895 = vld [vmem:[%s23 + $0x40] sm:$0xf]
      %v3896 = vld [vmem:[%s23 + $0x44] sm:$0xf]
      %v3897 = vld [vmem:[%s23 + $0x48] sm:$0xf]
      %v3898 = vld [vmem:[%s23 + $0x4c] sm:$0xf]
      %v3899 = vld [vmem:[%s23 + $0x50] sm:$0xf]
      %v3900 = vld [vmem:[%s23 + $0x54] sm:$0xf]
      %v3901 = vld [vmem:[%s23 + $0x58] sm:$0xf]
      %v3902 = vld [vmem:[%s23 + $0x5c] sm:$0xf]
      %v3903 = vld [vmem:[%s23 + $0x60] sm:$0xf]
      %v3904 = vld [vmem:[%s23 + $0x64] sm:$0xf]
      %v3905 = vld [vmem:[%s23 + $0x68] sm:$0xf]
      %v3906 = vld [vmem:[%s23 + $0x6c] sm:$0xf]
      %v3907 = vld [vmem:[%s23 + $0x70] sm:$0xf]
      %v3908 = vld [vmem:[%s23 + $0x74] sm:$0xf]
      %v3909 = vld [vmem:[%s23 + $0x78] sm:$0xf]
      %v3910 = vld [vmem:[%s23 + $0x7c] sm:$0xf]
      %v3911 = vld [vmem:[%s23 + $0x80] sm:$0xf]
      %v3912 = vld [vmem:[%s23 + $0x84] sm:$0xf]
      %v3913 = vld [vmem:[%s23 + $0x88] sm:$0xf]
      %v3914 = vld [vmem:[%s23 + $0x8c] sm:$0xf]
      %v3915 = vld [vmem:[%s23 + $0x90] sm:$0xf]
      %v3916 = vld [vmem:[%s23 + $0x94] sm:$0xf]
      %v3917 = vld [vmem:[%s23 + $0x98] sm:$0xf]
      %v3918 = vld [vmem:[%s23 + $0x9c] sm:$0xf]
      %v3919 = vld [vmem:[%s23 + $0xa0] sm:$0xf]
      %v3920 = vld [vmem:[%s23 + $0xa4] sm:$0xf]
      %v3921 = vld [vmem:[%s23 + $0xa8] sm:$0xf]
      %v3922 = vld [vmem:[%s23 + $0xac] sm:$0xf]
      %v3923 = vld [vmem:[%s23 + $0xb0] sm:$0xf]
      %v3924 = vld [vmem:[%s23 + $0xb4] sm:$0xf]
      %v3925 = vld [vmem:[%s23 + $0xb8] sm:$0xf]
      %v3926 = vld [vmem:[%s23 + $0xbc] sm:$0xf]
      %v3927 = vld [vmem:[%s23 + $0xc0] sm:$0xf]
      %v3928 = vld [vmem:[%s23 + $0xc4] sm:$0xf]
      %v3929 = vld [vmem:[%s23 + $0xc8] sm:$0xf]
      %v3930 = vld [vmem:[%s23 + $0xcc] sm:$0xf]
      %v3931 = vld [vmem:[%s23 + $0xd0] sm:$0xf]
      %v3932 = vld [vmem:[%s23 + $0xd4] sm:$0xf]
      %v3933 = vld [vmem:[%s23 + $0xd8] sm:$0xf]
      %v3934 = vld [vmem:[%s23 + $0xdc] sm:$0xf]
      %v3935 = vld [vmem:[%s23 + $0xe0] sm:$0xf]
      %v3936 = vld [vmem:[%s23 + $0xe4] sm:$0xf]
      %v3937 = vld [vmem:[%s23 + $0xe8] sm:$0xf]
      %v3938 = vld [vmem:[%s23 + $0xec] sm:$0xf]
      %v3939 = vld [vmem:[%s23 + $0xf0] sm:$0xf]
      %v3940 = vld [vmem:[%s23 + $0xf4] sm:$0xf]
      %v3941 = vld [vmem:[%s23 + $0xf8] sm:$0xf]
      %v3942 = vld [vmem:[%s23 + $0xfc] sm:$0xf]
      %v3943 = vld [vmem:[%s23 + $0x100] sm:$0xf]
      %v3944 = vld [vmem:[%s23 + $0x104] sm:$0xf]
      %v3945 = vld [vmem:[%s23 + $0x108] sm:$0xf]
      %v3946 = vld [vmem:[%s23 + $0x10c] sm:$0xf]
      %v3947 = vld [vmem:[%s23 + $0x110] sm:$0xf]
      %v3948 = vld [vmem:[%s23 + $0x114] sm:$0xf]
      %v3949 = vld [vmem:[%s23 + $0x118] sm:$0xf]
      %v3950 = vld [vmem:[%s23 + $0x11c] sm:$0xf]
      %v3951 = vld [vmem:[%s24] sm:$0x1]
      %v4024 = vunpack.c.l.b16 %v3879
      %v4025 = vunpack.c.l.b16 %v3880
      %v4026 = vunpack.c.l.b16 %v3881
      %v4027 = vunpack.c.l.b16 %v3882
      %v4028 = vunpack.c.l.b16 %v3883
      %v4029 = vunpack.c.l.b16 %v3884
      %v4030 = vunpack.c.l.b16 %v3885
      %v4031 = vunpack.c.l.b16 %v3886
      %v4032 = vunpack.c.l.b16 %v3887
      %v4033 = vunpack.c.l.b16 %v3888
      %v4034 = vunpack.c.l.b16 %v3889
      %v4035 = vunpack.c.l.b16 %v3890
      %v4036 = vunpack.c.l.b16 %v3891
      %v4037 = vunpack.c.l.b16 %v3892
      %v4038 = vunpack.c.l.b16 %v3893
      %v4039 = vunpack.c.l.b16 %v3894
      %v4040 = vunpack.c.l.b16 %v3895
      %v4041 = vunpack.c.l.b16 %v3896
      %v4042 = vunpack.c.l.b16 %v3897
      %v4043 = vunpack.c.l.b16 %v3898
      %v4044 = vunpack.c.l.b16 %v3899
      %v4045 = vunpack.c.l.b16 %v3900
      %v4046 = vunpack.c.l.b16 %v3901
      %v4047 = vunpack.c.l.b16 %v3902
      %v4048 = vunpack.c.l.b16 %v3903
      %v4049 = vunpack.c.l.b16 %v3904
      %v4050 = vunpack.c.l.b16 %v3905
      %v4051 = vunpack.c.l.b16 %v3906
      %v4052 = vunpack.c.l.b16 %v3907
      %v4053 = vunpack.c.l.b16 %v3908
      %v4054 = vunpack.c.l.b16 %v3909
      %v4055 = vunpack.c.l.b16 %v3910
      %v4056 = vunpack.c.l.b16 %v3911
      %v4057 = vunpack.c.l.b16 %v3912
      %v4058 = vunpack.c.l.b16 %v3913
      %v4059 = vunpack.c.l.b16 %v3914
      %v4060 = vunpack.c.l.b16 %v3915
      %v4061 = vunpack.c.l.b16 %v3916
      %v4062 = vunpack.c.l.b16 %v3917
      %v4063 = vunpack.c.l.b16 %v3918
      %v4064 = vunpack.c.l.b16 %v3919
      %v4065 = vunpack.c.l.b16 %v3920
      %v4066 = vunpack.c.l.b16 %v3921
      %v4067 = vunpack.c.l.b16 %v3922
      %v4068 = vunpack.c.l.b16 %v3923
      %v4069 = vunpack.c.l.b16 %v3924
      %v4070 = vunpack.c.l.b16 %v3925
      %v4071 = vunpack.c.l.b16 %v3926
      %v4072 = vunpack.c.l.b16 %v3927
      %v4073 = vunpack.c.l.b16 %v3928
      %v4074 = vunpack.c.l.b16 %v3929
      %v4075 = vunpack.c.l.b16 %v3930
      %v4076 = vunpack.c.l.b16 %v3931
      %v4077 = vunpack.c.l.b16 %v3932
      %v4078 = vunpack.c.l.b16 %v3933
      %v4079 = vunpack.c.l.b16 %v3934
      %v4080 = vunpack.c.l.b16 %v3935
      %v4081 = vunpack.c.l.b16 %v3936
      %v4082 = vunpack.c.l.b16 %v3937
      %v4083 = vunpack.c.l.b16 %v3938
      %v4084 = vunpack.c.l.b16 %v3939
      %v4085 = vunpack.c.l.b16 %v3940
      %v4086 = vunpack.c.l.b16 %v3941
      %v4087 = vunpack.c.l.b16 %v3942
      %v4088 = vunpack.c.l.b16 %v3943
      %v4089 = vunpack.c.l.b16 %v3944
      %v4090 = vunpack.c.l.b16 %v3945
      %v4091 = vunpack.c.l.b16 %v3946
      %v4092 = vunpack.c.l.b16 %v3947
      %v4093 = vunpack.c.l.b16 %v3948
      %v4094 = vunpack.c.l.b16 %v3949
      %v4095 = vunpack.c.l.b16 %v3950
      %v4096 = vpack.c.b16 %v4025, %v4024
      %v4097 = vpack.c.b16 %v4027, %v4026
      %v4098 = vpack.c.b16 %v4029, %v4028
      %v4099 = vpack.c.b16 %v4031, %v4030
      %v4100 = vpack.c.b16 %v4033, %v4032
      %v4101 = vpack.c.b16 %v4035, %v4034
      %v4102 = vpack.c.b16 %v4037, %v4036
      %v4103 = vpack.c.b16 %v4039, %v4038
      %v4104 = vpack.c.b16 %v4041, %v4040
      %v4105 = vpack.c.b16 %v4043, %v4042
      %v4106 = vpack.c.b16 %v4045, %v4044
      %v4107 = vpack.c.b16 %v4047, %v4046
      %v4108 = vpack.c.b16 %v4049, %v4048
      %v4109 = vpack.c.b16 %v4051, %v4050
      %v4110 = vpack.c.b16 %v4053, %v4052
      %v4111 = vpack.c.b16 %v4055, %v4054
      %v4112 = vpack.c.b16 %v4057, %v4056
      %v4113 = vpack.c.b16 %v4059, %v4058
      %v4114 = vpack.c.b16 %v4061, %v4060
      %v4115 = vpack.c.b16 %v4063, %v4062
      %v4116 = vpack.c.b16 %v4065, %v4064
      %v4117 = vpack.c.b16 %v4067, %v4066
      %v4118 = vpack.c.b16 %v4069, %v4068
      %v4119 = vpack.c.b16 %v4071, %v4070
      %v4120 = vpack.c.b16 %v4073, %v4072
      %v4121 = vpack.c.b16 %v4075, %v4074
      %v4122 = vpack.c.b16 %v4077, %v4076
      %v4123 = vpack.c.b16 %v4079, %v4078
      %v4124 = vpack.c.b16 %v4081, %v4080
      %v4125 = vpack.c.b16 %v4083, %v4082
      %v4126 = vpack.c.b16 %v4085, %v4084
      %v4127 = vpack.c.b16 %v4087, %v4086
      %v4128 = vpack.c.b16 %v4089, %v4088
      %v4129 = vpack.c.b16 %v4091, %v4090
      %v4130 = vpack.c.b16 %v4093, %v4092
      %v4131 = vpack.c.b16 %v4095, %v4094
      %v4169 = vsel %vm2279, %v3878, 0
      %4171 = vmatpush.bf16.msra.mxu0 %v4103
      %4172 = vmatpush.bf16.msra.mxu0 %v4102
      %4173 = vmatpush.bf16.msra.mxu0 %v4101
      %4174 = vmatpush.bf16.msra.mxu0 %v4100
      %4175 = vmatpush.bf16.msra.mxu0 %v4099
      %4176 = vmatpush.bf16.msra.mxu0 %v4098
      %4177 = vmatpush.bf16.msra.mxu0 %v4097
      %4178 = vmatpush.bf16.msra.mxu0 %v4096
      %4179 = vmatmul.bf16.gmra.mxu0 %v3874
      %v4180 = vpop.f32.mrf.mxu0
      %v4181 = vadd.f32 %v3951, %v4180
      %v4182 = vpop.f32.mrf.mxu0
      %4183 = vdwg.mxu0
      %4184 = vmatpush.bf16.msra.mxu0 %v4111
      %4185 = vmatpush.bf16.msra.mxu0 %v4110
      %4186 = vmatpush.bf16.msra.mxu0 %v4109
      %4187 = vmatpush.bf16.msra.mxu0 %v4108
      %4188 = vmatpush.bf16.msra.mxu0 %v4107
      %4189 = vmatpush.bf16.msra.mxu0 %v4106
      %4190 = vmatpush.bf16.msra.mxu0 %v4105
      %4191 = vmatpush.bf16.msra.mxu0 %v4104
      %4192 = vmatmul.bf16.gmra.mxu0 %v3875
      %v4193 = vpop.f32.mrf.mxu0
      %v4194 = vadd.f32 %v4181, %v4193
      %v4195 = vpop.f32.mrf.mxu0
      %4196 = vdwg.mxu0
      %4197 = vmatpush.bf16.msra.mxu0 %v4119
      %4198 = vmatpush.bf16.msra.mxu0 %v4118
      %4199 = vmatpush.bf16.msra.mxu0 %v4117
      %4200 = vmatpush.bf16.msra.mxu0 %v4116
      %4201 = vmatpush.bf16.msra.mxu0 %v4115
      %4202 = vmatpush.bf16.msra.mxu0 %v4114
      %4203 = vmatpush.bf16.msra.mxu0 %v4113
      %4204 = vmatpush.bf16.msra.mxu0 %v4112
      %4205 = vmatmul.bf16.gmra.mxu0 %v3876
      %v4206 = vpop.f32.mrf.mxu0
      %v4207 = vadd.f32 %v4194, %v4206
      %v4208 = vpop.f32.mrf.mxu0
      %4209 = vdwg.mxu0
      %4210 = vmatpush.bf16.msra.mxu0 %v4127
      %4211 = vmatpush.bf16.msra.mxu0 %v4126
      %4212 = vmatpush.bf16.msra.mxu0 %v4125
      %4213 = vmatpush.bf16.msra.mxu0 %v4124
      %4214 = vmatpush.bf16.msra.mxu0 %v4123
      %4215 = vmatpush.bf16.msra.mxu0 %v4122
      %4216 = vmatpush.bf16.msra.mxu0 %v4121
      %4217 = vmatpush.bf16.msra.mxu0 %v4120
      %4218 = vmatmul.bf16.gmra.mxu0 %v3877
      %v4219 = vpop.f32.mrf.mxu0
      %v4220 = vadd.f32 %v4207, %v4219
      %v4221 = vpop.f32.mrf.mxu0
      %4222 = vdwg.mxu0
      %4223 = vmatpush.bf16.msra.mxu0 0
      %4224 = vmatpush.bf16.msra.mxu0 0
      %4225 = vmatpush.bf16.msra.mxu0 0
      %4226 = vmatpush.bf16.msra.mxu0 0
      %4227 = vmatpush.bf16.msra.mxu0 %v4131
      %4228 = vmatpush.bf16.msra.mxu0 %v4130
      %4229 = vmatpush.bf16.msra.mxu0 %v4129
      %4230 = vmatpush.bf16.msra.mxu0 %v4128
      %4231 = vmatmul.bf16.gmra.mxu0 %v4169
      %v4232 = vpop.f32.mrf.mxu0
      %v4233 = vadd.f32 %v4220, %v4232
      %v4234 = vpop.f32.mrf.mxu0
      %4235 = vdwg.mxu0
      %v4236 = vadd.f32 %v4233, %v3807
      %v4237 = vmax.f32 %v4236, 0.0
      %4238 = vst.msk [vmem:[#allocation14] sm:$0x1] %vm3842, %v4237
      %v4239 = vld [vmem:[#allocation14] sm:$0x1]
      %v4240 = vpack.c.bf16 %v4239, %v4239
      %v4241 = vld [vmem:[%s25] sm:$0xf]
      %v4242 = vld [vmem:[%s25 + $0x4] sm:$0xf]
      %v4243 = vld [vmem:[%s25 + $0x8] sm:$0xf]
      %v4244 = vld [vmem:[%s25 + $0xc] sm:$0xf]
      %v4245 = vld [vmem:[%s25 + $0x10] sm:$0xf]
      %v4246 = vld [vmem:[%s25 + $0x14] sm:$0xf]
      %v4247 = vld [vmem:[%s25 + $0x18] sm:$0xf]
      %v4248 = vld [vmem:[%s25 + $0x1c] sm:$0xf]
      %v4249 = vld [vmem:[%s26] sm:$0x1]
      %v4258 = vunpack.c.l.b16 %v4241
      %v4259 = vunpack.c.l.b16 %v4242
      %v4260 = vunpack.c.l.b16 %v4243
      %v4261 = vunpack.c.l.b16 %v4244
      %v4262 = vunpack.c.l.b16 %v4245
      %v4263 = vunpack.c.l.b16 %v4246
      %v4264 = vunpack.c.l.b16 %v4247
      %v4265 = vunpack.c.l.b16 %v4248
      %v4266 = vpack.c.b16 %v4259, %v4258
      %v4267 = vpack.c.b16 %v4261, %v4260
      %v4268 = vpack.c.b16 %v4263, %v4262
      %v4269 = vpack.c.b16 %v4265, %v4264
      %v4275 = vsel %vm2279, %v4240, 0
      %4277 = vmatpush.bf16.msra.mxu0 0
      %4278 = vmatpush.bf16.msra.mxu0 0
      %4279 = vmatpush.bf16.msra.mxu0 0
      %4280 = vmatpush.bf16.msra.mxu0 0
      %4281 = vmatpush.bf16.msra.mxu0 %v4269
      %4282 = vmatpush.bf16.msra.mxu0 %v4268
      %4283 = vmatpush.bf16.msra.mxu0 %v4267
      %4284 = vmatpush.bf16.msra.mxu0 %v4266
      %4285 = vmatmul.bf16.gmra.mxu0 %v4275
      %v4286 = vpop.f32.mrf.mxu0
      %v4287 = vadd.f32 %v4249, %v4286
      %v4288 = vpop.f32.mrf.mxu0
      %4289 = vdwg.mxu0
      %vm4290 = vcmask 80896
      %4291 = vst.msk [vmem:[%s821] sm:$0xff] %vm4290, 0.0
      %vm4292 = vcmask 73728
      %4293 = vst.msk [vmem:[%s821] sm:$0x1] %vm4292, %v4287
      %p4294 = scmp.lt.s32.totalorder %s38, 1
      %s4295 = scalar_select %p4294, %s38, 1
      %s4296 = smul.addr %s4295, 8
      %s4297 = scalar_lea.vmem %s27, %s4296
      // Predicated region
      $region129: #{forward.1} parent=127 // pred_check
        %p4298 = pneg %p628
      $region130: #{forward.1} parent=127 // pred_check_branch
        %4300 = sbr.rel (%p4298) target = $region132
      $region131: #{forward.1} parent=127 // pred_region
        _
      $region132: #{forward.1} parent=127 // pred_fallthru
        _
    $region128: #{forward.1} parent=5 // pred_fallthru
      _
    %p4301 = scmp.le.s32.totalorder 2, %s33
    // Predicated region
    $region133: #{forward.1} parent=5 // pred_check
      %p4302 = pneg %p4301
    $region134: #{forward.1} parent=5 // pred_check_branch
      %4304 = sbr.rel (%p4302) target = $region136
    $region135: #{forward.1} parent=5 // pred_region
      %s4305 = ssub.s32 %s33, 2
      // Predicated region
      $region137: #{forward.1} parent=135 // pred_check
        %p4306 = pneg %p634
      $region138: #{forward.1} parent=135 // pred_check_branch
        %4308 = sbr.rel (%p4306) target = $region140
      $region139: #{forward.1} parent=135 // pred_region
        %p4309 = scmp.lt.s32.totalorder %s39, 1
        %s4310 = scalar_select %p4309, %s39, 1
        %s4311 = smul.addr %s4310, 8
        %s4312 = scalar_lea.vmem %s27, %s4311
      $region140: #{forward.1} parent=135 // pred_fallthru
        _
    $region136: #{forward.1} parent=5 // pred_fallthru
      _
  $region6: #{forward.1} parent=0 // loop_footer
    %s37 = sadd.s32 1, %s33
  $region7: #{forward.1} parent=0 // loop_footer_branch
    %32 = sbr.rel target = $region3
  $region8: #{forward.1} parent=0 // loop_exit
    _

</llo_original>
